<compile_context>
chip_gen: v5e
topology: v5e:2x2
jax: 0.10.0
libtpu: 0.0.40
codegen_flags: <defaults>
</compile_context>

<pallas_src>
import numpy as np
import jax
import jax.numpy as jnp
from jax import lax
from jax.experimental import pallas as pl
from jax.experimental.pallas import tpu as pltpu

CHANNELS = 3          # RGB
LRELU_SLOPE = 0.2

# --------------- Haar filters (match WaveletTransform.get_haar_filters) ------
_s = 2.0 ** -0.5
_l = np.array([_s, _s], np.float32)
_h = np.array([-_s, _s], np.float32)
_HAAR = np.stack([np.outer(_l, _l), np.outer(_h, _l),
                  np.outer(_l, _h), np.outer(_h, _h)]).astype(np.float32)   # LL,LH,HL,HH
_HAAR_FLIP = _HAAR[:, ::-1, ::-1].copy()    # upfirdn2d convolves with the flipped filter

# ------------------------------ VMEM planning ---------------------------------
_COL_TILE_BUDGET = 8 << 20     # bytes of per-column arrays per pipeline buffer
_MAX_COL_TILE = 8192           # lane-dense cap (v6e can go large; budget clamps v7x)
_VMEM_LIMIT = 64 << 20         # explicit scoped-VMEM limit (v5e default is only 16 MiB)


def _compiler_params(n_parallel_axes):
    return pltpu.CompilerParams(
        dimension_semantics=("parallel",) * n_parallel_axes,
        vmem_limit_bytes=_VMEM_LIMIT)


# ------------------------------ Pallas kernels --------------------------------
def _frgb_fused_kernel(xp_ref, ws_ref, wy_ref, b_ref, res_ref, skip_ref, y_ref):
    """Fused fRGB (x_last branch), one column tile:
         skip = Wskip @ patches                         (resample chain collapsed)
         y    = LeakyReLU(Wy @ patches + b) + x_last    (Wy = Wrgb @ Wskip folded)
    patches/res are bf16 in VMEM; dots run f32 x f32 -> f32."""
    xp = xp_ref[...].astype(jnp.float32)
    skip_ref[...] = jnp.dot(ws_ref[...], xp, preferred_element_type=jnp.float32)
    y = jnp.dot(wy_ref[...], xp, preferred_element_type=jnp.float32) + b_ref[...]
    y = jnp.maximum(y, LRELU_SLOPE * y)
    y_ref[...] = (y + res_ref[...].astype(jnp.float32)).astype(y_ref.dtype)


def _conv1x1_kernel(x_ref, w_ref, b_ref, y_ref):
    """fRGB (x_last=None branch): 1x1 conv + bias + LeakyReLU on one column tile."""
    y = jnp.dot(w_ref[...], x_ref[...].astype(jnp.float32),
                preferred_element_type=jnp.float32) + b_ref[...]
    y_ref[...] = jnp.maximum(y, LRELU_SLOPE * y).astype(y_ref.dtype)


def _conv12_fused_kernel(xp_ref, w1_ref, b1_ref, w2_ref, b2_ref, out_ref, y1_scr):
    """Fused conv1 (3x3, pad 1) + conv2 (3x3, pad 1, stride 2) for ONE image.

    xp_ref : [4*fi, Ho+1, Wo+1] bf16 -- spatial phase planes (p = r*2+s) of the
             zero-padded conv1 input; taps become unit-stride static slices.
    w1_ref : [9, fi, fi] f32 (tap k = dy*3+dx, layout [co, ci]);  b1_ref: [fi, 1]
    w2_ref : [9, fo, fi] f32;                                     b2_ref: [fo, 1]
    out_ref: [fo, Ho, Wo] f32  (conv2 output, Ho = H/2, Wo = W/2)
    y1_scr : [4*fi, Ho+1, Wo+1] f32 VMEM scratch -- conv1 output phase planes with a
             zero top row / left column (the conv2 zero padding); never hits HBM."""
    cfi4, hp2, wp2 = xp_ref.shape
    fi = cfi4 // 4
    fo, ho, wo = out_ref.shape
    cols = ho * wo

    y1_scr[...] = jnp.zeros(y1_scr.shape, y1_scr.dtype)
    xp = xp_ref[...].astype(jnp.float32)

    # ---- conv1: one output phase (r1, s1) at a time, 9 tap-matmuls each ----
    for r1 in range(2):
        for s1 in range(2):
            acc = jnp.zeros((fi, cols), jnp.float32)
            for dy in range(3):
                for dx in range(3):
                    p = ((r1 + dy) % 2) * 2 + ((s1 + dx) % 2)
                    oy = (r1 + dy) // 2
                    ox = (s1 + dx) // 2
                    tap = xp[p * fi:(p + 1) * fi, oy:oy + ho, ox:ox + wo]
                    acc = acc + jnp.dot(w1_ref[dy * 3 + dx], tap.reshape(fi, cols),
                                        preferred_element_type=jnp.float32)
            y1 = acc + b1_ref[...]
            y1 = jnp.maximum(y1, LRELU_SLOPE * y1)
            ps = r1 * 2 + s1
            y1_scr[ps * fi:(ps + 1) * fi, 1:hp2, 1:wp2] = y1.reshape(fi, ho, wo)

    # ---- conv2 (stride 2) straight from the VMEM phase scratch ----
    acc2 = jnp.zeros((fo, cols), jnp.float32)
    for dy in range(3):
        r, oy = (1, 0) if dy == 0 else (0, 1) if dy == 1 else (1, 1)
        for dx in range(3):
            s, ox = (1, 0) if dx == 0 else (0, 1) if dx == 1 else (1, 1)
            ps = r * 2 + s
            tap = y1_scr[ps * fi:(ps + 1) * fi, oy:oy + ho, ox:ox + wo]
            acc2 = acc2 + jnp.dot(w2_ref[dy * 3 + dx], tap.reshape(fi, cols),
                                  preferred_element_type=jnp.float32)
    y2 = acc2 + b2_ref[...]
    y2 = jnp.maximum(y2, LRELU_SLOPE * y2)
    out_ref[...] = y2.reshape(fo, ho, wo).astype(out_ref.dtype)


# ------------------------------ tiling helpers ---------------------------------
def _plan_cols(cols, bytes_per_col):
    """Pick a lane-dense column tile: multiple of 128, VMEM-budget bounded, and
    >= 2 grid steps when there is enough work (v7x megacore)."""
    max_tile = max(128, min(_MAX_COL_TILE,
                            (_COL_TILE_BUDGET // max(bytes_per_col, 1)) // 128 * 128))
    tile = min(max_tile, pl.cdiv(cols, 128) * 128)
    if tile >= cols and cols > 128:
        tile = pl.cdiv(pl.cdiv(cols, 2), 128) * 128
    cols_p = pl.cdiv(cols, tile) * tile
    return tile, cols_p, cols_p // tile


def _pad_cols(a, cols_p):
    pad = cols_p - a.shape[1]
    return a if pad == 0 else jnp.pad(a, ((0, 0), (0, pad)))


def _wmat(w_hwio):
    """[kh,kw,ci,co] -> [co, kh*kw*ci] matching tap-major patch rows."""
    kh, kw, ci, co = w_hwio.shape
    return jnp.transpose(w_hwio.reshape(kh * kw * ci, co))


def _composite_resample_weight(c4):
    """idwt -> 2x2-mean down -> dwt collapses to 0.5*LL followed by the flipped-Haar
    DWT: one [c4, 4*c4] weight over 2x2/stride-2 taps touching only LL channels."""
    c = c4 // 4
    w = np.zeros((c4, 4 * c4), np.float32)
    for band in range(4):
        for dy in range(2):
            for dx in range(2):
                k = dy * 2 + dx
                for ch in range(c):
                    w[band * c + ch, k * c4 + ch] = 0.5 * _HAAR_FLIP[band, dy, dx]
    return jnp.asarray(w)


# -------------------------- module-equivalent ops ------------------------------
def frgb_resample_conv(x, rgb_w, rgb_b, x_last):
    """fRGB, x_last branch: resample chain + 1x1 conv + bias + LReLU + residual,
    fused into one pallas_call over lane-dense column tiles.  x: CNHW f32."""
    c4, n, h, w = x.shape
    assert h % 2 == 0 and w % 2 == 0  # TODO(synk): odd spatial sizes unsupported
    fi = rgb_w.shape[-1]
    ho, wo = h // 2, w // 2
    cols = n * ho * wo

    xb = x.astype(jnp.bfloat16)                      # cast BEFORE building taps
    # 2x2 stride-2 taps are disjoint -> this is a 1x reorganisation, not im2col dup.
    taps = [xb[:, :, dy::2, dx::2].reshape(c4, cols) for dy in (0, 1) for dx in (0, 1)]
    patches = jnp.concatenate(taps, axis=0)          # [4*c4, cols] bf16
    w_skip = _composite_resample_weight(c4)          # [c4, 4*c4] f32 (exact values)
    w_y = jnp.dot(_wmat(rgb_w), w_skip,
                  precision=lax.Precision.HIGHEST)   # fold Wrgb @ Wskip on the host
    res = x_last.reshape(fi, cols).astype(jnp.bfloat16)

    bytes_per_col = 4 * c4 * 2 + fi * 2 + c4 * 4 + fi * 2
    tile, cols_p, steps = _plan_cols(cols, bytes_per_col)
    patches = _pad_cols(patches, cols_p)
    res = _pad_cols(res, cols_p)

    skip2d, y2d = pl.pallas_call(
        _frgb_fused_kernel,
        out_shape=(jax.ShapeDtypeStruct((c4, cols_p), jnp.float32),
                   jax.ShapeDtypeStruct((fi, cols_p), jnp.bfloat16)),
        grid_spec=pltpu.PrefetchScalarGridSpec(
            num_scalar_prefetch=0,
            grid=(steps,),
            in_specs=[
                pl.BlockSpec((4 * c4, tile), lambda j: (0, j)),
                pl.BlockSpec((c4, 4 * c4), lambda j: (0, 0)),
                pl.BlockSpec((fi, 4 * c4), lambda j: (0, 0)),
                pl.BlockSpec((fi, 1), lambda j: (0, 0)),
                pl.BlockSpec((fi, tile), lambda j: (0, j)),
            ],
            out_specs=(pl.BlockSpec((c4, tile), lambda j: (0, j)),
                       pl.BlockSpec((fi, tile), lambda j: (0, j))),
        ),
        compiler_params=_compiler_params(1),
    )(patches, w_skip, w_y, rgb_b.reshape(fi, 1).astype(jnp.float32), res)

    skip = skip2d[:, :cols].reshape(c4, n, ho, wo)          # f32 (public)
    y = y2d[:, :cols].reshape(fi, n, ho, wo)                # bf16 (feeds conv1+conv2)
    return skip, y


def frgb_conv_only(x, rgb_w, rgb_b):
    """fRGB, x_last=None branch: 1x1 conv + bias + LeakyReLU.  x: CNHW f32 -> bf16."""
    c4, n, h, w = x.shape
    fi = rgb_w.shape[-1]
    cols = n * h * w
    x2d = x.reshape(c4, cols).astype(jnp.bfloat16)

    bytes_per_col = c4 * 2 + 2 * fi * 2
    tile, cols_p, steps = _plan_cols(cols, bytes_per_col)
    x2d = _pad_cols(x2d, cols_p)

    y2d = pl.pallas_call(
        _conv1x1_kernel,
        out_shape=jax.ShapeDtypeStruct((fi, cols_p), jnp.bfloat16),
        grid_spec=pltpu.PrefetchScalarGridSpec(
            num_scalar_prefetch=0,
            grid=(steps,),
            in_specs=[
                pl.BlockSpec((c4, tile), lambda j: (0, j)),
                pl.BlockSpec((fi, c4), lambda j: (0, 0)),
                pl.BlockSpec((fi, 1), lambda j: (0, 0)),
            ],
            out_specs=pl.BlockSpec((fi, tile), lambda j: (0, j)),
        ),
        compiler_params=_compiler_params(1),
    )(x2d, _wmat(rgb_w), rgb_b.reshape(fi, 1).astype(jnp.float32))
    return y2d[:, :cols].reshape(fi, n, h, w)               # bf16


def conv1_conv2_fused(y0, w1, b1, w2, b2):
    """conv1 (3x3) + conv2 (3x3, DOWN) fused in one pallas_call.

    The input is padded once and split on the host into 4 spatial phase planes
    (one 1x copy); the kernel extracts all 3x3 taps as unit-stride static slices
    and keeps the conv1 intermediate in VMEM.  Grid = batch (parallel).
    y0: [fi, N, H, W] bf16 CNHW.  Returns NCHW [N, fo, H/2, W/2] f32."""
    fi, n, h, w = y0.shape
    assert h % 2 == 0 and w % 2 == 0  # TODO(synk): odd spatial sizes unsupported
    fo = w2.shape[-1]
    ho, wo = h // 2, w // 2
    hp2, wp2 = ho + 1, wo + 1

    y0p = jnp.pad(y0, ((0, 0), (0, 0), (1, 1), (1, 1)))     # conv1 zero padding
    planes = jnp.stack([y0p[:, :, r::2, s::2] for r in (0, 1) for s in (0, 1)], 0)
    planes = planes.reshape(4 * fi, n, hp2, wp2)
    planes = jnp.transpose(planes, (1, 0, 2, 3))            # [N, 4*fi, Ho+1, Wo+1] bf16

    w1t = jnp.transpose(w1.reshape(9, fi, fi), (0, 2, 1)).astype(jnp.float32)
    w2t = jnp.transpose(w2.reshape(9, fi, fo), (0, 2, 1)).astype(jnp.float32)

    out = pl.pallas_call(
        _conv12_fused_kernel,
        out_shape=jax.ShapeDtypeStruct((n, fo, ho, wo), jnp.float32),
        grid_spec=pltpu.PrefetchScalarGridSpec(
            num_scalar_prefetch=0,
            grid=(n,),
            in_specs=[
                pl.BlockSpec((None, 4 * fi, hp2, wp2), lambda i: (i, 0, 0, 0)),
                pl.BlockSpec((9, fi, fi), lambda i: (0, 0, 0)),
                pl.BlockSpec((fi, 1), lambda i: (0, 0)),
                pl.BlockSpec((9, fo, fi), lambda i: (0, 0, 0)),
                pl.BlockSpec((fo, 1), lambda i: (0, 0)),
            ],
            out_specs=pl.BlockSpec((None, fo, ho, wo), lambda i: (i, 0, 0, 0)),
            scratch_shapes=[pltpu.VMEM((4 * fi, hp2, wp2), jnp.float32)],
        ),
        compiler_params=_compiler_params(1),
    )(planes, w1t, b1.reshape(fi, 1).astype(jnp.float32),
      w2t, b2.reshape(fo, 1).astype(jnp.float32))
    # TODO(synk): at extreme per-image H*W, additionally tile over output rows with a
    #             1-row halo (manual make_async_copy) to bound per-step VMEM.
    return out                                              # NCHW f32


# ------------------------------- DiscBlock -------------------------------------
def disc_block(params, x_nchw, x_last_nchw=None):
    """DiscBlock forward.  NCHW in/out (PyTorch convention); CNHW inside."""
    x = jnp.transpose(x_nchw, (1, 0, 2, 3))                 # CNHW
    if x_last_nchw is not None:
        x_last = jnp.transpose(x_last_nchw, (1, 0, 2, 3))
        skip_c, y0 = frgb_resample_conv(x, params["rgb_w"], params["rgb_b"], x_last)
        skip = jnp.transpose(skip_c, (1, 0, 2, 3))
    else:
        skip = x_nchw
        y0 = frgb_conv_only(x, params["rgb_w"], params["rgb_b"])
    y = conv1_conv2_fused(y0, params["w1"], params["b1"], params["w2"], params["b2"])
    return skip, y


def init_params(key, fi, fo):
    ks = jax.random.split(key, 6)

    def conv_p(kw_, kb_, kh, ci, co):
        w = jax.random.normal(kw_, (kh, kh, ci, co), jnp.float32) / np.sqrt(kh * kh * ci)
        b = 0.1 * jax.random.normal(kb_, (co,), jnp.float32)
        return w, b

    rgb_w, rgb_b = conv_p(ks[0], ks[1], 1, CHANNELS * 4, fi)
    w1, b1 = conv_p(ks[2], ks[3], 3, fi, fi)
    w2, b2 = conv_p(ks[4], ks[5], 3, fi, fo)
    return dict(rgb_w=rgb_w, rgb_b=rgb_b, w1=w1, b1=b1, w2=w2, b2=b2)


# ------------------------- pure-JAX reference (check) --------------------------
def _r16(x):
    # emulate the kernel's bf16 HBM storage of activations (math stays f32)
    return x.astype(jnp.bfloat16).astype(jnp.float32)


def _ref_lrelu(y):
    return jnp.maximum(y, LRELU_SLOPE * y)


def _ref_conv(x, w, b, stride=1):
    pad = w.shape[0] // 2
    y = lax.conv_general_dilated(x, w, (stride, stride), ((pad, pad), (pad, pad)),
                                 dimension_numbers=("NHWC", "HWIO", "NHWC"),
                                 precision=lax.Precision.HIGHEST)
    return _ref_lrelu(y + b)


def _ref_dwt(x):
    C = x.shape[-1]
    eye = jnp.eye(C, dtype=x.dtype)
    outs = []
    for b in range(4):
        w = jnp.asarray(_HAAR_FLIP[b])[:, :, None, None] * eye[None, None]
        outs.append(lax.conv_general_dilated(x, w, (2, 2), ((0, 0), (0, 0)),
                                             dimension_numbers=("NHWC", "HWIO", "NHWC"),
                                             precision=lax.Precision.HIGHEST))
    return jnp.concatenate(outs, -1)


def _ref_idwt(x):
    N, H, W, C4 = x.shape
    C = C4 // 4
    bands = jnp.split(x, 4, axis=-1)
    y = jnp.zeros((N, 2 * H, 2 * W, C), x.dtype)
    for r in range(2):
        for s in range(2):
            phase = sum(float(_HAAR[b, r, s]) * bands[b] for b in range(4))
            y = y.at[:, r::2, s::2, :].set(phase)
    return y


def _ref_down2(x):
    return 0.25 * (x[:, ::2, ::2] + x[:, 1::2, ::2] + x[:, ::2, 1::2] + x[:, 1::2, 1::2])


def disc_block_ref(params, x_nchw, x_last_nchw=None):
    x = jnp.transpose(x_nchw, (0, 2, 3, 1))
    if x_last_nchw is not None:
        x_last = jnp.transpose(x_last_nchw, (0, 2, 3, 1))
        skip = _ref_dwt(_ref_down2(_ref_idwt(_r16(x))))      # kernel consumes bf16(x)
        y = _ref_conv(skip, params["rgb_w"], params["rgb_b"]) + _r16(x_last)
    else:
        skip = x
        y = _ref_conv(_r16(x), params["rgb_w"], params["rgb_b"])
    y = _r16(y)                                              # fRGB output stored as bf16
    y = _ref_conv(y, params["w1"], params["b1"])
    y = _ref_conv(y, params["w2"], params["b2"], stride=2)
    return jnp.transpose(skip, (0, 3, 1, 2)), jnp.transpose(y, (0, 3, 1, 2))


# ----------------------------------- main ---------------------------------------
if __name__ == "__main__":
    fi, fo = 8, 16
    key = jax.random.PRNGKey(0)
    kp, kx, kl = jax.random.split(key, 3)
    params = init_params(kp, fi, fo)

    # wavelet-domain input (4*CHANNELS sub-band channels) + previous-level feature map
    x = jax.random.normal(kx, (2, CHANNELS * 4, 16, 16), jnp.float32)
    x_last = jax.random.normal(kl, (2, fi, 8, 8), jnp.float32)

    skip, y = jax.jit(disc_block)(params, x, x_last)                  # x_last branch
    jax.block_until_ready((skip, y))
    skip0, y0 = jax.jit(lambda p, a: disc_block(p, a))(params, x)     # x_last=None branch
    jax.block_until_ready((skip0, y0))

    skip_r, y_r = disc_block_ref(params, x, x_last)
    skip0_r, y0_r = disc_block_ref(params, x)
    for got, ref in ((skip, skip_r), (y, y_r), (skip0, skip0_r), (y0, y0_r)):
        np.testing.assert_allclose(np.asarray(got), np.asarray(ref), rtol=2e-2, atol=2e-2)

    assert skip.shape == (2, CHANNELS * 4, 8, 8) and y.shape == (2, fo, 4, 4)
    assert skip0.shape == (2, CHANNELS * 4, 16, 16) and y0.shape == (2, fo, 8, 8)
    print("KERNEL_OK")
</pallas_src>

<mosaic_0001>
module attributes {stable_mosaic.version = 11 : i64} {
  func.func @_frgb_fused_kernel(%arg0: i32, %arg1: memref<48x128xbf16, #tpu.memory_space<vmem>>, %arg2: memref<12x48xf32, #tpu.memory_space<vmem>>, %arg3: memref<8x48xf32, #tpu.memory_space<vmem>>, %arg4: memref<8x1xf32, #tpu.memory_space<vmem>>, %arg5: memref<8x128xbf16, #tpu.memory_space<vmem>>, %arg6: memref<12x128xf32, #tpu.memory_space<vmem>>, %arg7: memref<8x128xbf16, #tpu.memory_space<vmem>>) attributes {dimension_semantics = [#tpu.dimension_semantics<parallel>], iteration_bounds = array<i64: 1>, scalar_prefetch = 0 : i64, scratch_operands = 0 : i64, tpu.core_type = #tpu.core_type<tc>, window_params = [{transform_indices = @transform_0, window_bounds = array<i64: 48, 128>}, {pipeline_mode = #tpu.pipeline_mode<synchronous>, transform_indices = @transform_1, window_bounds = array<i64: 12, 48>}, {pipeline_mode = #tpu.pipeline_mode<synchronous>, transform_indices = @transform_2, window_bounds = array<i64: 8, 48>}, {pipeline_mode = #tpu.pipeline_mode<synchronous>, transform_indices = @transform_3, window_bounds = array<i64: 8, 1>}, {transform_indices = @transform_4, window_bounds = array<i64: 8, 128>}, {transform_indices = @transform_5, window_bounds = array<i64: 12, 128>}, {transform_indices = @transform_6, window_bounds = array<i64: 8, 128>}]} {
    %c0 = arith.constant 0 : index
    %c0_0 = arith.constant 0 : index
    %0 = vector.load %arg1[%c0, %c0_0] : memref<48x128xbf16, #tpu.memory_space<vmem>>, vector<48x128xbf16>
    %1 = arith.extf %0 : vector<48x128xbf16> to vector<48x128xf32>
    %c0_1 = arith.constant 0 : index
    %c0_2 = arith.constant 0 : index
    %2 = vector.load %arg2[%c0_1, %c0_2] : memref<12x48xf32, #tpu.memory_space<vmem>>, vector<12x48xf32>
    %cst = arith.constant dense<0.000000e+00> : vector<12x128xf32>
    %3 = tpu.matmul %2, %1, %cst {dimension_numbers = #tpu.dot_dimension_numbers<[1], [0], [0], [1], [0, 0, 1, 1], [], []>} : vector<12x48xf32>, vector<48x128xf32>, vector<12x128xf32> -> vector<12x128xf32>
    %c0_3 = arith.constant 0 : index
    %c0_4 = arith.constant 0 : index
    %4 = vector.load %arg6[%c0_3, %c0_4] : memref<12x128xf32, #tpu.memory_space<vmem>>, vector<12x128xf32>
    tpu.vector_store %arg6[%c0_3, %c0_4], %3 {strides = array<i32>} : memref<12x128xf32, #tpu.memory_space<vmem>>, vector<12x128xf32>,
    %c0_5 = arith.constant 0 : index
    %c0_6 = arith.constant 0 : index
    %5 = vector.load %arg3[%c0_5, %c0_6] : memref<8x48xf32, #tpu.memory_space<vmem>>, vector<8x48xf32>
    %cst_7 = arith.constant dense<0.000000e+00> : vector<8x128xf32>
    %6 = tpu.matmul %5, %1, %cst_7 {dimension_numbers = #tpu.dot_dimension_numbers<[1], [0], [0], [1], [0, 0, 1, 1], [], []>} : vector<8x48xf32>, vector<48x128xf32>, vector<8x128xf32> -> vector<8x128xf32>
    %c0_8 = arith.constant 0 : index
    %c0_9 = arith.constant 0 : index
    %7 = vector.load %arg4[%c0_8, %c0_9] : memref<8x1xf32, #tpu.memory_space<vmem>>, vector<8x1xf32>
    %8 = vector.broadcast %7 : vector<8x1xf32> to vector<8x128xf32>
    %9 = arith.addf %6, %8 : vector<8x128xf32>
    %cst_10 = arith.constant 2.000000e-01 : f32
    %10 = vector.broadcast %cst_10 : f32 to vector<8x128xf32>
    %11 = arith.mulf %10, %9 : vector<8x128xf32>
    %12 = arith.maximumf %9, %11 : vector<8x128xf32>
    %c0_11 = arith.constant 0 : index
    %c0_12 = arith.constant 0 : index
    %13 = vector.load %arg5[%c0_11, %c0_12] : memref<8x128xbf16, #tpu.memory_space<vmem>>, vector<8x128xbf16>
    %14 = arith.extf %13 : vector<8x128xbf16> to vector<8x128xf32>
    %15 = arith.addf %12, %14 : vector<8x128xf32>
    %16 = arith.truncf %15 : vector<8x128xf32> to vector<8x128xbf16>
    %c0_13 = arith.constant 0 : index
    %c0_14 = arith.constant 0 : index
    %17 = vector.load %arg7[%c0_13, %c0_14] : memref<8x128xbf16, #tpu.memory_space<vmem>>, vector<8x128xbf16>
    tpu.vector_store %arg7[%c0_13, %c0_14], %16 {strides = array<i32>} : memref<8x128xbf16, #tpu.memory_space<vmem>>, vector<8x128xbf16>,
    return
  }
  func.func @transform_0(%arg0: i32) -> (i32, i32) {
    %c0_i32 = arith.constant 0 : i32
    %c0_i32_0 = arith.constant 0 : i32
    return %c0_i32, %arg0 : i32, i32
  }
  func.func @transform_1(%arg0: i32) -> (i32, i32) {
    %c0_i32 = arith.constant 0 : i32
    %c0_i32_0 = arith.constant 0 : i32
    %c0_i32_1 = arith.constant 0 : i32
    return %c0_i32, %c0_i32_0 : i32, i32
  }
  func.func @transform_2(%arg0: i32) -> (i32, i32) {
    %c0_i32 = arith.constant 0 : i32
    %c0_i32_0 = arith.constant 0 : i32
    %c0_i32_1 = arith.constant 0 : i32
    return %c0_i32, %c0_i32_0 : i32, i32
  }
  func.func @transform_3(%arg0: i32) -> (i32, i32) {
    %c0_i32 = arith.constant 0 : i32
    %c0_i32_0 = arith.constant 0 : i32
    %c0_i32_1 = arith.constant 0 : i32
    return %c0_i32, %c0_i32_0 : i32, i32
  }
  func.func @transform_4(%arg0: i32) -> (i32, i32) {
    %c0_i32 = arith.constant 0 : i32
    %c0_i32_0 = arith.constant 0 : i32
    return %c0_i32, %arg0 : i32, i32
  }
  func.func @transform_5(%arg0: i32) -> (i32, i32) {
    %c0_i32 = arith.constant 0 : i32
    %c0_i32_0 = arith.constant 0 : i32
    return %c0_i32, %arg0 : i32, i32
  }
  func.func @transform_6(%arg0: i32) -> (i32, i32) {
    %c0_i32 = arith.constant 0 : i32
    %c0_i32_0 = arith.constant 0 : i32
    return %c0_i32, %arg0 : i32, i32
  }
}

module attributes {stable_mosaic.version = 11 : i64} {
  func.func @_conv12_fused_kernel(%arg0: i32, %arg1: memref<1x32x5x5xbf16, #tpu.memory_space<vmem>>, %arg2: memref<9x8x8xf32, #tpu.memory_space<vmem>>, %arg3: memref<8x1xf32, #tpu.memory_space<vmem>>, %arg4: memref<9x16x8xf32, #tpu.memory_space<vmem>>, %arg5: memref<16x1xf32, #tpu.memory_space<vmem>>, %arg6: memref<1x16x4x4xf32, #tpu.memory_space<vmem>>, %arg7: memref<32x5x5xf32, #tpu.memory_space<vmem>>) attributes {dimension_semantics = [#tpu.dimension_semantics<parallel>], iteration_bounds = array<i64: 2>, scalar_prefetch = 0 : i64, scratch_operands = 1 : i64, tpu.core_type = #tpu.core_type<tc>, window_params = [{transform_indices = @transform_0, window_bounds = array<i64: 1, 32, 5, 5>}, {pipeline_mode = #tpu.pipeline_mode<synchronous>, transform_indices = @transform_1, window_bounds = array<i64: 9, 8, 8>}, {pipeline_mode = #tpu.pipeline_mode<synchronous>, transform_indices = @transform_2, window_bounds = array<i64: 8, 1>}, {pipeline_mode = #tpu.pipeline_mode<synchronous>, transform_indices = @transform_3, window_bounds = array<i64: 9, 16, 8>}, {pipeline_mode = #tpu.pipeline_mode<synchronous>, transform_indices = @transform_4, window_bounds = array<i64: 16, 1>}, {transform_indices = @transform_5, window_bounds = array<i64: 1, 16, 4, 4>}]} {
    %cst = arith.constant 0.000000e+00 : f32
    %0 = vector.broadcast %cst : f32 to vector<32x5x5xf32>
    %c0 = arith.constant 0 : index
    %c0_0 = arith.constant 0 : index
    %c0_1 = arith.constant 0 : index
    %1 = vector.load %arg7[%c0, %c0_0, %c0_1] : memref<32x5x5xf32, #tpu.memory_space<vmem>>, vector<32x5x5xf32>
    tpu.vector_store %arg7[%c0, %c0_0, %c0_1], %0 {strides = array<i32>} : memref<32x5x5xf32, #tpu.memory_space<vmem>>, vector<32x5x5xf32>,
    %c0_2 = arith.constant 0 : index
    %c0_3 = arith.constant 0 : index
    %c0_4 = arith.constant 0 : index
    %c0_5 = arith.constant 0 : index
    %2 = vector.load %arg1[%c0_2, %c0_3, %c0_4, %c0_5] : memref<1x32x5x5xbf16, #tpu.memory_space<vmem>>, vector<1x32x5x5xbf16>
    %3 = vector.shape_cast %2 : vector<1x32x5x5xbf16> to vector<32x5x5xbf16>
    %4 = arith.extf %3 : vector<32x5x5xbf16> to vector<32x5x5xf32>
    %cst_6 = arith.constant 0.000000e+00 : f32
    %5 = vector.broadcast %cst_6 : f32 to vector<8x16xf32>
    %6 = vector.extract_strided_slice %4 {offsets = [0, 0, 0], sizes = [8, 4, 4], strides = [1, 1, 1]} : vector<32x5x5xf32> to vector<8x4x4xf32>
    %c0_7 = arith.constant 0 : index
    %c0_8 = arith.constant 0 : index
    %c0_9 = arith.constant 0 : index
    %7 = vector.load %arg2[%c0_7, %c0_8, %c0_9] : memref<9x8x8xf32, #tpu.memory_space<vmem>>, vector<1x8x8xf32>
    %8 = vector.shape_cast %7 : vector<1x8x8xf32> to vector<8x8xf32>
    %9 = vector.shape_cast %6 : vector<8x4x4xf32> to vector<8x16xf32>
    %cst_10 = arith.constant dense<0.000000e+00> : vector<8x16xf32>
    %10 = tpu.matmul %8, %9, %cst_10 {dimension_numbers = #tpu.dot_dimension_numbers<[1], [0], [0], [1], [0, 0, 1, 1], [], []>} : vector<8x8xf32>, vector<8x16xf32>, vector<8x16xf32> -> vector<8x16xf32>
    %11 = arith.addf %5, %10 : vector<8x16xf32>
    %12 = vector.extract_strided_slice %4 {offsets = [8, 0, 0], sizes = [8, 4, 4], strides = [1, 1, 1]} : vector<32x5x5xf32> to vector<8x4x4xf32>
    %c1 = arith.constant 1 : index
    %c0_11 = arith.constant 0 : index
    %c0_12 = arith.constant 0 : index
    %13 = vector.load %arg2[%c1, %c0_11, %c0_12] : memref<9x8x8xf32, #tpu.memory_space<vmem>>, vector<1x8x8xf32>
    %14 = vector.shape_cast %13 : vector<1x8x8xf32> to vector<8x8xf32>
    %15 = vector.shape_cast %12 : vector<8x4x4xf32> to vector<8x16xf32>
    %cst_13 = arith.constant dense<0.000000e+00> : vector<8x16xf32>
    %16 = tpu.matmul %14, %15, %cst_13 {dimension_numbers = #tpu.dot_dimension_numbers<[1], [0], [0], [1], [0, 0, 1, 1], [], []>} : vector<8x8xf32>, vector<8x16xf32>, vector<8x16xf32> -> vector<8x16xf32>
    %17 = arith.addf %11, %16 : vector<8x16xf32>
    %18 = vector.extract_strided_slice %4 {offsets = [0, 0, 1], sizes = [8, 4, 4], strides = [1, 1, 1]} : vector<32x5x5xf32> to vector<8x4x4xf32>
    %c2 = arith.constant 2 : index
    %c0_14 = arith.constant 0 : index
    %c0_15 = arith.constant 0 : index
    %19 = vector.load %arg2[%c2, %c0_14, %c0_15] : memref<9x8x8xf32, #tpu.memory_space<vmem>>, vector<1x8x8xf32>
    %20 = vector.shape_cast %19 : vector<1x8x8xf32> to vector<8x8xf32>
    %21 = vector.shape_cast %18 : vector<8x4x4xf32> to vector<8x16xf32>
    %cst_16 = arith.constant dense<0.000000e+00> : vector<8x16xf32>
    %22 = tpu.matmul %20, %21, %cst_16 {dimension_numbers = #tpu.dot_dimension_numbers<[1], [0], [0], [1], [0, 0, 1, 1], [], []>} : vector<8x8xf32>, vector<8x16xf32>, vector<8x16xf32> -> vector<8x16xf32>
    %23 = arith.addf %17, %22 : vector<8x16xf32>
    %24 = vector.extract_strided_slice %4 {offsets = [16, 0, 0], sizes = [8, 4, 4], strides = [1, 1, 1]} : vector<32x5x5xf32> to vector<8x4x4xf32>
    %c3 = arith.constant 3 : index
    %c0_17 = arith.constant 0 : index
    %c0_18 = arith.constant 0 : index
    %25 = vector.load %arg2[%c3, %c0_17, %c0_18] : memref<9x8x8xf32, #tpu.memory_space<vmem>>, vector<1x8x8xf32>
    %26 = vector.shape_cast %25 : vector<1x8x8xf32> to vector<8x8xf32>
    %27 = vector.shape_cast %24 : vector<8x4x4xf32> to vector<8x16xf32>
    %cst_19 = arith.constant dense<0.000000e+00> : vector<8x16xf32>
    %28 = tpu.matmul %26, %27, %cst_19 {dimension_numbers = #tpu.dot_dimension_numbers<[1], [0], [0], [1], [0, 0, 1, 1], [], []>} : vector<8x8xf32>, vector<8x16xf32>, vector<8x16xf32> -> vector<8x16xf32>
    %29 = arith.addf %23, %28 : vector<8x16xf32>
    %30 = vector.extract_strided_slice %4 {offsets = [24, 0, 0], sizes = [8, 4, 4], strides = [1, 1, 1]} : vector<32x5x5xf32> to vector<8x4x4xf32>
    %c4 = arith.constant 4 : index
    %c0_20 = arith.constant 0 : index
    %c0_21 = arith.constant 0 : index
    %31 = vector.load %arg2[%c4, %c0_20, %c0_21] : memref<9x8x8xf32, #tpu.memory_space<vmem>>, vector<1x8x8xf32>
    %32 = vector.shape_cast %31 : vector<1x8x8xf32> to vector<8x8xf32>
    %33 = vector.shape_cast %30 : vector<8x4x4xf32> to vector<8x16xf32>
    %cst_22 = arith.constant dense<0.000000e+00> : vector<8x16xf32>
    %34 = tpu.matmul %32, %33, %cst_22 {dimension_numbers = #tpu.dot_dimension_numbers<[1], [0], [0], [1], [0, 0, 1, 1], [], []>} : vector<8x8xf32>, vector<8x16xf32>, vector<8x16xf32> -> vector<8x16xf32>
    %35 = arith.addf %29, %34 : vector<8x16xf32>
    %36 = vector.extract_strided_slice %4 {offsets = [16, 0, 1], sizes = [8, 4, 4], strides = [1, 1, 1]} : vector<32x5x5xf32> to vector<8x4x4xf32>
    %c5 = arith.constant 5 : index
    %c0_23 = arith.constant 0 : index
    %c0_24 = arith.constant 0 : index
    %37 = vector.load %arg2[%c5, %c0_23, %c0_24] : memref<9x8x8xf32, #tpu.memory_space<vmem>>, vector<1x8x8xf32>
    %38 = vector.shape_cast %37 : vector<1x8x8xf32> to vector<8x8xf32>
    %39 = vector.shape_cast %36 : vector<8x4x4xf32> to vector<8x16xf32>
    %cst_25 = arith.constant dense<0.000000e+00> : vector<8x16xf32>
    %40 = tpu.matmul %38, %39, %cst_25 {dimension_numbers = #tpu.dot_dimension_numbers<[1], [0], [0], [1], [0, 0, 1, 1], [], []>} : vector<8x8xf32>, vector<8x16xf32>, vector<8x16xf32> -> vector<8x16xf32>
    %41 = arith.addf %35, %40 : vector<8x16xf32>
    %42 = vector.extract_strided_slice %4 {offsets = [0, 1, 0], sizes = [8, 4, 4], strides = [1, 1, 1]} : vector<32x5x5xf32> to vector<8x4x4xf32>
    %c6 = arith.constant 6 : index
    %c0_26 = arith.constant 0 : index
    %c0_27 = arith.constant 0 : index
    %43 = vector.load %arg2[%c6, %c0_26, %c0_27] : memref<9x8x8xf32, #tpu.memory_space<vmem>>, vector<1x8x8xf32>
    %44 = vector.shape_cast %43 : vector<1x8x8xf32> to vector<8x8xf32>
    %45 = vector.shape_cast %42 : vector<8x4x4xf32> to vector<8x16xf32>
    %cst_28 = arith.constant dense<0.000000e+00> : vector<8x16xf32>
    %46 = tpu.matmul %44, %45, %cst_28 {dimension_numbers = #tpu.dot_dimension_numbers<[1], [0], [0], [1], [0, 0, 1, 1], [], []>} : vector<8x8xf32>, vector<8x16xf32>, vector<8x16xf32> -> vector<8x16xf32>
    %47 = arith.addf %41, %46 : vector<8x16xf32>
    %48 = vector.extract_strided_slice %4 {offsets = [8, 1, 0], sizes = [8, 4, 4], strides = [1, 1, 1]} : vector<32x5x5xf32> to vector<8x4x4xf32>
    %c7 = arith.constant 7 : index
    %c0_29 = arith.constant 0 : index
    %c0_30 = arith.constant 0 : index
    %49 = vector.load %arg2[%c7, %c0_29, %c0_30] : memref<9x8x8xf32, #tpu.memory_space<vmem>>, vector<1x8x8xf32>
    %50 = vector.shape_cast %49 : vector<1x8x8xf32> to vector<8x8xf32>
    %51 = vector.shape_cast %48 : vector<8x4x4xf32> to vector<8x16xf32>
    %cst_31 = arith.constant dense<0.000000e+00> : vector<8x16xf32>
    %52 = tpu.matmul %50, %51, %cst_31 {dimension_numbers = #tpu.dot_dimension_numbers<[1], [0], [0], [1], [0, 0, 1, 1], [], []>} : vector<8x8xf32>, vector<8x16xf32>, vector<8x16xf32> -> vector<8x16xf32>
    %53 = arith.addf %47, %52 : vector<8x16xf32>
    %54 = vector.extract_strided_slice %4 {offsets = [0, 1, 1], sizes = [8, 4, 4], strides = [1, 1, 1]} : vector<32x5x5xf32> to vector<8x4x4xf32>
    %c8 = arith.constant 8 : index
    %c0_32 = arith.constant 0 : index
    %c0_33 = arith.constant 0 : index
    %55 = vector.load %arg2[%c8, %c0_32, %c0_33] : memref<9x8x8xf32, #tpu.memory_space<vmem>>, vector<1x8x8xf32>
    %56 = vector.shape_cast %55 : vector<1x8x8xf32> to vector<8x8xf32>
    %57 = vector.shape_cast %54 : vector<8x4x4xf32> to vector<8x16xf32>
    %cst_34 = arith.constant dense<0.000000e+00> : vector<8x16xf32>
    %58 = tpu.matmul %56, %57, %cst_34 {dimension_numbers = #tpu.dot_dimension_numbers<[1], [0], [0], [1], [0, 0, 1, 1], [], []>} : vector<8x8xf32>, vector<8x16xf32>, vector<8x16xf32> -> vector<8x16xf32>
    %59 = arith.addf %53, %58 : vector<8x16xf32>
    %c0_35 = arith.constant 0 : index
    %c0_36 = arith.constant 0 : index
    %60 = vector.load %arg3[%c0_35, %c0_36] : memref<8x1xf32, #tpu.memory_space<vmem>>, vector<8x1xf32>
    %61 = vector.broadcast %60 : vector<8x1xf32> to vector<8x16xf32>
    %62 = arith.addf %59, %61 : vector<8x16xf32>
    %cst_37 = arith.constant 2.000000e-01 : f32
    %63 = vector.broadcast %cst_37 : f32 to vector<8x16xf32>
    %64 = arith.mulf %63, %62 : vector<8x16xf32>
    %65 = arith.maximumf %62, %64 : vector<8x16xf32>
    %66 = vector.shape_cast %65 : vector<8x16xf32> to vector<8x4x4xf32>
    %c0_38 = arith.constant 0 : index
    %c1_39 = arith.constant 1 : index
    %c1_40 = arith.constant 1 : index
    %67 = vector.load %arg7[%c0_38, %c1_39, %c1_40] : memref<32x5x5xf32, #tpu.memory_space<vmem>>, vector<8x4x4xf32>
    tpu.vector_store %arg7[%c0_38, %c1_39, %c1_40], %66 {strides = array<i32>} : memref<32x5x5xf32, #tpu.memory_space<vmem>>, vector<8x4x4xf32>,
    %cst_41 = arith.constant 0.000000e+00 : f32
    %68 = vector.broadcast %cst_41 : f32 to vector<8x16xf32>
    %69 = vector.extract_strided_slice %4 {offsets = [8, 0, 0], sizes = [8, 4, 4], strides = [1, 1, 1]} : vector<32x5x5xf32> to vector<8x4x4xf32>
    %c0_42 = arith.constant 0 : index
    %c0_43 = arith.constant 0 : index
    %c0_44 = arith.constant 0 : index
    %70 = vector.load %arg2[%c0_42, %c0_43, %c0_44] : memref<9x8x8xf32, #tpu.memory_space<vmem>>, vector<1x8x8xf32>
    %71 = vector.shape_cast %70 : vector<1x8x8xf32> to vector<8x8xf32>
    %72 = vector.shape_cast %69 : vector<8x4x4xf32> to vector<8x16xf32>
    %cst_45 = arith.constant dense<0.000000e+00> : vector<8x16xf32>
    %73 = tpu.matmul %71, %72, %cst_45 {dimension_numbers = #tpu.dot_dimension_numbers<[1], [0], [0], [1], [0, 0, 1, 1], [], []>} : vector<8x8xf32>, vector<8x16xf32>, vector<8x16xf32> -> vector<8x16xf32>
    %74 = arith.addf %68, %73 : vector<8x16xf32>
    %75 = vector.extract_strided_slice %4 {offsets = [0, 0, 1], sizes = [8, 4, 4], strides = [1, 1, 1]} : vector<32x5x5xf32> to vector<8x4x4xf32>
    %c1_46 = arith.constant 1 : index
    %c0_47 = arith.constant 0 : index
    %c0_48 = arith.constant 0 : index
    %76 = vector.load %arg2[%c1_46, %c0_47, %c0_48] : memref<9x8x8xf32, #tpu.memory_space<vmem>>, vector<1x8x8xf32>
    %77 = vector.shape_cast %76 : vector<1x8x8xf32> to vector<8x8xf32>
    %78 = vector.shape_cast %75 : vector<8x4x4xf32> to vector<8x16xf32>
    %cst_49 = arith.constant dense<0.000000e+00> : vector<8x16xf32>
    %79 = tpu.matmul %77, %78, %cst_49 {dimension_numbers = #tpu.dot_dimension_numbers<[1], [0], [0], [1], [0, 0, 1, 1], [], []>} : vector<8x8xf32>, vector<8x16xf32>, vector<8x16xf32> -> vector<8x16xf32>
    %80 = arith.addf %74, %79 : vector<8x16xf32>
    %81 = vector.extract_strided_slice %4 {offsets = [8, 0, 1], sizes = [8, 4, 4], strides = [1, 1, 1]} : vector<32x5x5xf32> to vector<8x4x4xf32>
    %c2_50 = arith.constant 2 : index
    %c0_51 = arith.constant 0 : index
    %c0_52 = arith.constant 0 : index
    %82 = vector.load %arg2[%c2_50, %c0_51, %c0_52] : memref<9x8x8xf32, #tpu.memory_space<vmem>>, vector<1x8x8xf32>
    %83 = vector.shape_cast %82 : vector<1x8x8xf32> to vector<8x8xf32>
    %84 = vector.shape_cast %81 : vector<8x4x4xf32> to vector<8x16xf32>
    %cst_53 = arith.constant dense<0.000000e+00> : vector<8x16xf32>
    %85 = tpu.matmul %83, %84, %cst_53 {dimension_numbers = #tpu.dot_dimension_numbers<[1], [0], [0], [1], [0, 0, 1, 1], [], []>} : vector<8x8xf32>, vector<8x16xf32>, vector<8x16xf32> -> vector<8x16xf32>
    %86 = arith.addf %80, %85 : vector<8x16xf32>
    %87 = vector.extract_strided_slice %4 {offsets = [24, 0, 0], sizes = [8, 4, 4], strides = [1, 1, 1]} : vector<32x5x5xf32> to vector<8x4x4xf32>
    %c3_54 = arith.constant 3 : index
    %c0_55 = arith.constant 0 : index
    %c0_56 = arith.constant 0 : index
    %88 = vector.load %arg2[%c3_54, %c0_55, %c0_56] : memref<9x8x8xf32, #tpu.memory_space<vmem>>, vector<1x8x8xf32>
    %89 = vector.shape_cast %88 : vector<1x8x8xf32> to vector<8x8xf32>
    %90 = vector.shape_cast %87 : vector<8x4x4xf32> to vector<8x16xf32>
    %cst_57 = arith.constant dense<0.000000e+00> : vector<8x16xf32>
    %91 = tpu.matmul %89, %90, %cst_57 {dimension_numbers = #tpu.dot_dimension_numbers<[1], [0], [0], [1], [0, 0, 1, 1], [], []>} : vector<8x8xf32>, vector<8x16xf32>, vector<8x16xf32> -> vector<8x16xf32>
    %92 = arith.addf %86, %91 : vector<8x16xf32>
    %93 = vector.extract_strided_slice %4 {offsets = [16, 0, 1], sizes = [8, 4, 4], strides = [1, 1, 1]} : vector<32x5x5xf32> to vector<8x4x4xf32>
    %c4_58 = arith.constant 4 : index
    %c0_59 = arith.constant 0 : index
    %c0_60 = arith.constant 0 : index
    %94 = vector.load %arg2[%c4_58, %c0_59, %c0_60] : memref<9x8x8xf32, #tpu.memory_space<vmem>>, vector<1x8x8xf32>
    %95 = vector.shape_cast %94 : vector<1x8x8xf32> to vector<8x8xf32>
    %96 = vector.shape_cast %93 : vector<8x4x4xf32> to vector<8x16xf32>
    %cst_61 = arith.constant dense<0.000000e+00> : vector<8x16xf32>
    %97 = tpu.matmul %95, %96, %cst_61 {dimension_numbers = #tpu.dot_dimension_numbers<[1], [0], [0], [1], [0, 0, 1, 1], [], []>} : vector<8x8xf32>, vector<8x16xf32>, vector<8x16xf32> -> vector<8x16xf32>
    %98 = arith.addf %92, %97 : vector<8x16xf32>
    %99 = vector.extract_strided_slice %4 {offsets = [24, 0, 1], sizes = [8, 4, 4], strides = [1, 1, 1]} : vector<32x5x5xf32> to vector<8x4x4xf32>
    %c5_62 = arith.constant 5 : index
    %c0_63 = arith.constant 0 : index
    %c0_64 = arith.constant 0 : index
    %100 = vector.load %arg2[%c5_62, %c0_63, %c0_64] : memref<9x8x8xf32, #tpu.memory_space<vmem>>, vector<1x8x8xf32>
    %101 = vector.shape_cast %100 : vector<1x8x8xf32> to vector<8x8xf32>
    %102 = vector.shape_cast %99 : vector<8x4x4xf32> to vector<8x16xf32>
    %cst_65 = arith.constant dense<0.000000e+00> : vector<8x16xf32>
    %103 = tpu.matmul %101, %102, %cst_65 {dimension_numbers = #tpu.dot_dimension_numbers<[1], [0], [0], [1], [0, 0, 1, 1], [], []>} : vector<8x8xf32>, vector<8x16xf32>, vector<8x16xf32> -> vector<8x16xf32>
    %104 = arith.addf %98, %103 : vector<8x16xf32>
    %105 = vector.extract_strided_slice %4 {offsets = [8, 1, 0], sizes = [8, 4, 4], strides = [1, 1, 1]} : vector<32x5x5xf32> to vector<8x4x4xf32>
    %c6_66 = arith.constant 6 : index
    %c0_67 = arith.constant 0 : index
    %c0_68 = arith.constant 0 : index
    %106 = vector.load %arg2[%c6_66, %c0_67, %c0_68] : memref<9x8x8xf32, #tpu.memory_space<vmem>>, vector<1x8x8xf32>
    %107 = vector.shape_cast %106 : vector<1x8x8xf32> to vector<8x8xf32>
    %108 = vector.shape_cast %105 : vector<8x4x4xf32> to vector<8x16xf32>
    %cst_69 = arith.constant dense<0.000000e+00> : vector<8x16xf32>
    %109 = tpu.matmul %107, %108, %cst_69 {dimension_numbers = #tpu.dot_dimension_numbers<[1], [0], [0], [1], [0, 0, 1, 1], [], []>} : vector<8x8xf32>, vector<8x16xf32>, vector<8x16xf32> -> vector<8x16xf32>
    %110 = arith.addf %104, %109 : vector<8x16xf32>
    %111 = vector.extract_strided_slice %4 {offsets = [0, 1, 1], sizes = [8, 4, 4], strides = [1, 1, 1]} : vector<32x5x5xf32> to vector<8x4x4xf32>
    %c7_70 = arith.constant 7 : index
    %c0_71 = arith.constant 0 : index
    %c0_72 = arith.constant 0 : index
    %112 = vector.load %arg2[%c7_70, %c0_71, %c0_72] : memref<9x8x8xf32, #tpu.memory_space<vmem>>, vector<1x8x8xf32>
    %113 = vector.shape_cast %112 : vector<1x8x8xf32> to vector<8x8xf32>
    %114 = vector.shape_cast %111 : vector<8x4x4xf32> to vector<8x16xf32>
    %cst_73 = arith.constant dense<0.000000e+00> : vector<8x16xf32>
    %115 = tpu.matmul %113, %114, %cst_73 {dimension_numbers = #tpu.dot_dimension_numbers<[1], [0], [0], [1], [0, 0, 1, 1], [], []>} : vector<8x8xf32>, vector<8x16xf32>, vector<8x16xf32> -> vector<8x16xf32>
    %116 = arith.addf %110, %115 : vector<8x16xf32>
    %117 = vector.extract_strided_slice %4 {offsets = [8, 1, 1], sizes = [8, 4, 4], strides = [1, 1, 1]} : vector<32x5x5xf32> to vector<8x4x4xf32>
    %c8_74 = arith.constant 8 : index
    %c0_75 = arith.constant 0 : index
    %c0_76 = arith.constant 0 : index
    %118 = vector.load %arg2[%c8_74, %c0_75, %c0_76] : memref<9x8x8xf32, #tpu.memory_space<vmem>>, vector<1x8x8xf32>
    %119 = vector.shape_cast %118 : vector<1x8x8xf32> to vector<8x8xf32>
    %120 = vector.shape_cast %117 : vector<8x4x4xf32> to vector<8x16xf32>
    %cst_77 = arith.constant dense<0.000000e+00> : vector<8x16xf32>
    %121 = tpu.matmul %119, %120, %cst_77 {dimension_numbers = #tpu.dot_dimension_numbers<[1], [0], [0], [1], [0, 0, 1, 1], [], []>} : vector<8x8xf32>, vector<8x16xf32>, vector<8x16xf32> -> vector<8x16xf32>
    %122 = arith.addf %116, %121 : vector<8x16xf32>
    %c0_78 = arith.constant 0 : index
    %c0_79 = arith.constant 0 : index
    %123 = vector.load %arg3[%c0_78, %c0_79] : memref<8x1xf32, #tpu.memory_space<vmem>>, vector<8x1xf32>
    %124 = vector.broadcast %123 : vector<8x1xf32> to vector<8x16xf32>
    %125 = arith.addf %122, %124 : vector<8x16xf32>
    %cst_80 = arith.constant 2.000000e-01 : f32
    %126 = vector.broadcast %cst_80 : f32 to vector<8x16xf32>
    %127 = arith.mulf %126, %125 : vector<8x16xf32>
    %128 = arith.maximumf %125, %127 : vector<8x16xf32>
    %129 = vector.shape_cast %128 : vector<8x16xf32> to vector<8x4x4xf32>
    %c8_81 = arith.constant 8 : index
    %c1_82 = arith.constant 1 : index
    %c1_83 = arith.constant 1 : index
    %130 = vector.load %arg7[%c8_81, %c1_82, %c1_83] : memref<32x5x5xf32, #tpu.memory_space<vmem>>, vector<8x4x4xf32>
    tpu.vector_store %arg7[%c8_81, %c1_82, %c1_83], %129 {strides = array<i32>} : memref<32x5x5xf32, #tpu.memory_space<vmem>>, vector<8x4x4xf32>,
    %cst_84 = arith.constant 0.000000e+00 : f32
    %131 = vector.broadcast %cst_84 : f32 to vector<8x16xf32>
    %132 = vector.extract_strided_slice %4 {offsets = [16, 0, 0], sizes = [8, 4, 4], strides = [1, 1, 1]} : vector<32x5x5xf32> to vector<8x4x4xf32>
    %c0_85 = arith.constant 0 : index
    %c0_86 = arith.constant 0 : index
    %c0_87 = arith.constant 0 : index
    %133 = vector.load %arg2[%c0_85, %c0_86, %c0_87] : memref<9x8x8xf32, #tpu.memory_space<vmem>>, vector<1x8x8xf32>
    %134 = vector.shape_cast %133 : vector<1x8x8xf32> to vector<8x8xf32>
    %135 = vector.shape_cast %132 : vector<8x4x4xf32> to vector<8x16xf32>
    %cst_88 = arith.constant dense<0.000000e+00> : vector<8x16xf32>
    %136 = tpu.matmul %134, %135, %cst_88 {dimension_numbers = #tpu.dot_dimension_numbers<[1], [0], [0], [1], [0, 0, 1, 1], [], []>} : vector<8x8xf32>, vector<8x16xf32>, vector<8x16xf32> -> vector<8x16xf32>
    %137 = arith.addf %131, %136 : vector<8x16xf32>
    %138 = vector.extract_strided_slice %4 {offsets = [24, 0, 0], sizes = [8, 4, 4], strides = [1, 1, 1]} : vector<32x5x5xf32> to vector<8x4x4xf32>
    %c1_89 = arith.constant 1 : index
    %c0_90 = arith.constant 0 : index
    %c0_91 = arith.constant 0 : index
    %139 = vector.load %arg2[%c1_89, %c0_90, %c0_91] : memref<9x8x8xf32, #tpu.memory_space<vmem>>, vector<1x8x8xf32>
    %140 = vector.shape_cast %139 : vector<1x8x8xf32> to vector<8x8xf32>
    %141 = vector.shape_cast %138 : vector<8x4x4xf32> to vector<8x16xf32>
    %cst_92 = arith.constant dense<0.000000e+00> : vector<8x16xf32>
    %142 = tpu.matmul %140, %141, %cst_92 {dimension_numbers = #tpu.dot_dimension_numbers<[1], [0], [0], [1], [0, 0, 1, 1], [], []>} : vector<8x8xf32>, vector<8x16xf32>, vector<8x16xf32> -> vector<8x16xf32>
    %143 = arith.addf %137, %142 : vector<8x16xf32>
    %144 = vector.extract_strided_slice %4 {offsets = [16, 0, 1], sizes = [8, 4, 4], strides = [1, 1, 1]} : vector<32x5x5xf32> to vector<8x4x4xf32>
    %c2_93 = arith.constant 2 : index
    %c0_94 = arith.constant 0 : index
    %c0_95 = arith.constant 0 : index
    %145 = vector.load %arg2[%c2_93, %c0_94, %c0_95] : memref<9x8x8xf32, #tpu.memory_space<vmem>>, vector<1x8x8xf32>
    %146 = vector.shape_cast %145 : vector<1x8x8xf32> to vector<8x8xf32>
    %147 = vector.shape_cast %144 : vector<8x4x4xf32> to vector<8x16xf32>
    %cst_96 = arith.constant dense<0.000000e+00> : vector<8x16xf32>
    %148 = tpu.matmul %146, %147, %cst_96 {dimension_numbers = #tpu.dot_dimension_numbers<[1], [0], [0], [1], [0, 0, 1, 1], [], []>} : vector<8x8xf32>, vector<8x16xf32>, vector<8x16xf32> -> vector<8x16xf32>
    %149 = arith.addf %143, %148 : vector<8x16xf32>
    %150 = vector.extract_strided_slice %4 {offsets = [0, 1, 0], sizes = [8, 4, 4], strides = [1, 1, 1]} : vector<32x5x5xf32> to vector<8x4x4xf32>
    %c3_97 = arith.constant 3 : index
    %c0_98 = arith.constant 0 : index
    %c0_99 = arith.constant 0 : index
    %151 = vector.load %arg2[%c3_97, %c0_98, %c0_99] : memref<9x8x8xf32, #tpu.memory_space<vmem>>, vector<1x8x8xf32>
    %152 = vector.shape_cast %151 : vector<1x8x8xf32> to vector<8x8xf32>
    %153 = vector.shape_cast %150 : vector<8x4x4xf32> to vector<8x16xf32>
    %cst_100 = arith.constant dense<0.000000e+00> : vector<8x16xf32>
    %154 = tpu.matmul %152, %153, %cst_100 {dimension_numbers = #tpu.dot_dimension_numbers<[1], [0], [0], [1], [0, 0, 1, 1], [], []>} : vector<8x8xf32>, vector<8x16xf32>, vector<8x16xf32> -> vector<8x16xf32>
    %155 = arith.addf %149, %154 : vector<8x16xf32>
    %156 = vector.extract_strided_slice %4 {offsets = [8, 1, 0], sizes = [8, 4, 4], strides = [1, 1, 1]} : vector<32x5x5xf32> to vector<8x4x4xf32>
    %c4_101 = arith.constant 4 : index
    %c0_102 = arith.constant 0 : index
    %c0_103 = arith.constant 0 : index
    %157 = vector.load %arg2[%c4_101, %c0_102, %c0_103] : memref<9x8x8xf32, #tpu.memory_space<vmem>>, vector<1x8x8xf32>
    %158 = vector.shape_cast %157 : vector<1x8x8xf32> to vector<8x8xf32>
    %159 = vector.shape_cast %156 : vector<8x4x4xf32> to vector<8x16xf32>
    %cst_104 = arith.constant dense<0.000000e+00> : vector<8x16xf32>
    %160 = tpu.matmul %158, %159, %cst_104 {dimension_numbers = #tpu.dot_dimension_numbers<[1], [0], [0], [1], [0, 0, 1, 1], [], []>} : vector<8x8xf32>, vector<8x16xf32>, vector<8x16xf32> -> vector<8x16xf32>
    %161 = arith.addf %155, %160 : vector<8x16xf32>
    %162 = vector.extract_strided_slice %4 {offsets = [0, 1, 1], sizes = [8, 4, 4], strides = [1, 1, 1]} : vector<32x5x5xf32> to vector<8x4x4xf32>
    %c5_105 = arith.constant 5 : index
    %c0_106 = arith.constant 0 : index
    %c0_107 = arith.constant 0 : index
    %163 = vector.load %arg2[%c5_105, %c0_106, %c0_107] : memref<9x8x8xf32, #tpu.memory_space<vmem>>, vector<1x8x8xf32>
    %164 = vector.shape_cast %163 : vector<1x8x8xf32> to vector<8x8xf32>
    %165 = vector.shape_cast %162 : vector<8x4x4xf32> to vector<8x16xf32>
    %cst_108 = arith.constant dense<0.000000e+00> : vector<8x16xf32>
    %166 = tpu.matmul %164, %165, %cst_108 {dimension_numbers = #tpu.dot_dimension_numbers<[1], [0], [0], [1], [0, 0, 1, 1], [], []>} : vector<8x8xf32>, vector<8x16xf32>, vector<8x16xf32> -> vector<8x16xf32>
    %167 = arith.addf %161, %166 : vector<8x16xf32>
    %168 = vector.extract_strided_slice %4 {offsets = [16, 1, 0], sizes = [8, 4, 4], strides = [1, 1, 1]} : vector<32x5x5xf32> to vector<8x4x4xf32>
    %c6_109 = arith.constant 6 : index
    %c0_110 = arith.constant 0 : index
    %c0_111 = arith.constant 0 : index
    %169 = vector.load %arg2[%c6_109, %c0_110, %c0_111] : memref<9x8x8xf32, #tpu.memory_space<vmem>>, vector<1x8x8xf32>
    %170 = vector.shape_cast %169 : vector<1x8x8xf32> to vector<8x8xf32>
    %171 = vector.shape_cast %168 : vector<8x4x4xf32> to vector<8x16xf32>
    %cst_112 = arith.constant dense<0.000000e+00> : vector<8x16xf32>
    %172 = tpu.matmul %170, %171, %cst_112 {dimension_numbers = #tpu.dot_dimension_numbers<[1], [0], [0], [1], [0, 0, 1, 1], [], []>} : vector<8x8xf32>, vector<8x16xf32>, vector<8x16xf32> -> vector<8x16xf32>
    %173 = arith.addf %167, %172 : vector<8x16xf32>
    %174 = vector.extract_strided_slice %4 {offsets = [24, 1, 0], sizes = [8, 4, 4], strides = [1, 1, 1]} : vector<32x5x5xf32> to vector<8x4x4xf32>
    %c7_113 = arith.constant 7 : index
    %c0_114 = arith.constant 0 : index
    %c0_115 = arith.constant 0 : index
    %175 = vector.load %arg2[%c7_113, %c0_114, %c0_115] : memref<9x8x8xf32, #tpu.memory_space<vmem>>, vector<1x8x8xf32>
    %176 = vector.shape_cast %175 : vector<1x8x8xf32> to vector<8x8xf32>
    %177 = vector.shape_cast %174 : vector<8x4x4xf32> to vector<8x16xf32>
    %cst_116 = arith.constant dense<0.000000e+00> : vector<8x16xf32>
    %178 = tpu.matmul %176, %177, %cst_116 {dimension_numbers = #tpu.dot_dimension_numbers<[1], [0], [0], [1], [0, 0, 1, 1], [], []>} : vector<8x8xf32>, vector<8x16xf32>, vector<8x16xf32> -> vector<8x16xf32>
    %179 = arith.addf %173, %178 : vector<8x16xf32>
    %180 = vector.extract_strided_slice %4 {offsets = [16, 1, 1], sizes = [8, 4, 4], strides = [1, 1, 1]} : vector<32x5x5xf32> to vector<8x4x4xf32>
    %c8_117 = arith.constant 8 : index
    %c0_118 = arith.constant 0 : index
    %c0_119 = arith.constant 0 : index
    %181 = vector.load %arg2[%c8_117, %c0_118, %c0_119] : memref<9x8x8xf32, #tpu.memory_space<vmem>>, vector<1x8x8xf32>
    %182 = vector.shape_cast %181 : vector<1x8x8xf32> to vector<8x8xf32>
    %183 = vector.shape_cast %180 : vector<8x4x4xf32> to vector<8x16xf32>
    %cst_120 = arith.constant dense<0.000000e+00> : vector<8x16xf32>
    %184 = tpu.matmul %182, %183, %cst_120 {dimension_numbers = #tpu.dot_dimension_numbers<[1], [0], [0], [1], [0, 0, 1, 1], [], []>} : vector<8x8xf32>, vector<8x16xf32>, vector<8x16xf32> -> vector<8x16xf32>
    %185 = arith.addf %179, %184 : vector<8x16xf32>
    %c0_121 = arith.constant 0 : index
    %c0_122 = arith.constant 0 : index
    %186 = vector.load %arg3[%c0_121, %c0_122] : memref<8x1xf32, #tpu.memory_space<vmem>>, vector<8x1xf32>
    %187 = vector.broadcast %186 : vector<8x1xf32> to vector<8x16xf32>
    %188 = arith.addf %185, %187 : vector<8x16xf32>
    %cst_123 = arith.constant 2.000000e-01 : f32
    %189 = vector.broadcast %cst_123 : f32 to vector<8x16xf32>
    %190 = arith.mulf %189, %188 : vector<8x16xf32>
    %191 = arith.maximumf %188, %190 : vector<8x16xf32>
    %192 = vector.shape_cast %191 : vector<8x16xf32> to vector<8x4x4xf32>
    %c16 = arith.constant 16 : index
    %c1_124 = arith.constant 1 : index
    %c1_125 = arith.constant 1 : index
    %193 = vector.load %arg7[%c16, %c1_124, %c1_125] : memref<32x5x5xf32, #tpu.memory_space<vmem>>, vector<8x4x4xf32>
    tpu.vector_store %arg7[%c16, %c1_124, %c1_125], %192 {strides = array<i32>} : memref<32x5x5xf32, #tpu.memory_space<vmem>>, vector<8x4x4xf32>,
    %cst_126 = arith.constant 0.000000e+00 : f32
    %194 = vector.broadcast %cst_126 : f32 to vector<8x16xf32>
    %195 = vector.extract_strided_slice %4 {offsets = [24, 0, 0], sizes = [8, 4, 4], strides = [1, 1, 1]} : vector<32x5x5xf32> to vector<8x4x4xf32>
    %c0_127 = arith.constant 0 : index
    %c0_128 = arith.constant 0 : index
    %c0_129 = arith.constant 0 : index
    %196 = vector.load %arg2[%c0_127, %c0_128, %c0_129] : memref<9x8x8xf32, #tpu.memory_space<vmem>>, vector<1x8x8xf32>
    %197 = vector.shape_cast %196 : vector<1x8x8xf32> to vector<8x8xf32>
    %198 = vector.shape_cast %195 : vector<8x4x4xf32> to vector<8x16xf32>
    %cst_130 = arith.constant dense<0.000000e+00> : vector<8x16xf32>
    %199 = tpu.matmul %197, %198, %cst_130 {dimension_numbers = #tpu.dot_dimension_numbers<[1], [0], [0], [1], [0, 0, 1, 1], [], []>} : vector<8x8xf32>, vector<8x16xf32>, vector<8x16xf32> -> vector<8x16xf32>
    %200 = arith.addf %194, %199 : vector<8x16xf32>
    %201 = vector.extract_strided_slice %4 {offsets = [16, 0, 1], sizes = [8, 4, 4], strides = [1, 1, 1]} : vector<32x5x5xf32> to vector<8x4x4xf32>
    %c1_131 = arith.constant 1 : index
    %c0_132 = arith.constant 0 : index
    %c0_133 = arith.constant 0 : index
    %202 = vector.load %arg2[%c1_131, %c0_132, %c0_133] : memref<9x8x8xf32, #tpu.memory_space<vmem>>, vector<1x8x8xf32>
    %203 = vector.shape_cast %202 : vector<1x8x8xf32> to vector<8x8xf32>
    %204 = vector.shape_cast %201 : vector<8x4x4xf32> to vector<8x16xf32>
    %cst_134 = arith.constant dense<0.000000e+00> : vector<8x16xf32>
    %205 = tpu.matmul %203, %204, %cst_134 {dimension_numbers = #tpu.dot_dimension_numbers<[1], [0], [0], [1], [0, 0, 1, 1], [], []>} : vector<8x8xf32>, vector<8x16xf32>, vector<8x16xf32> -> vector<8x16xf32>
    %206 = arith.addf %200, %205 : vector<8x16xf32>
    %207 = vector.extract_strided_slice %4 {offsets = [24, 0, 1], sizes = [8, 4, 4], strides = [1, 1, 1]} : vector<32x5x5xf32> to vector<8x4x4xf32>
    %c2_135 = arith.constant 2 : index
    %c0_136 = arith.constant 0 : index
    %c0_137 = arith.constant 0 : index
    %208 = vector.load %arg2[%c2_135, %c0_136, %c0_137] : memref<9x8x8xf32, #tpu.memory_space<vmem>>, vector<1x8x8xf32>
    %209 = vector.shape_cast %208 : vector<1x8x8xf32> to vector<8x8xf32>
    %210 = vector.shape_cast %207 : vector<8x4x4xf32> to vector<8x16xf32>
    %cst_138 = arith.constant dense<0.000000e+00> : vector<8x16xf32>
    %211 = tpu.matmul %209, %210, %cst_138 {dimension_numbers = #tpu.dot_dimension_numbers<[1], [0], [0], [1], [0, 0, 1, 1], [], []>} : vector<8x8xf32>, vector<8x16xf32>, vector<8x16xf32> -> vector<8x16xf32>
    %212 = arith.addf %206, %211 : vector<8x16xf32>
    %213 = vector.extract_strided_slice %4 {offsets = [8, 1, 0], sizes = [8, 4, 4], strides = [1, 1, 1]} : vector<32x5x5xf32> to vector<8x4x4xf32>
    %c3_139 = arith.constant 3 : index
    %c0_140 = arith.constant 0 : index
    %c0_141 = arith.constant 0 : index
    %214 = vector.load %arg2[%c3_139, %c0_140, %c0_141] : memref<9x8x8xf32, #tpu.memory_space<vmem>>, vector<1x8x8xf32>
    %215 = vector.shape_cast %214 : vector<1x8x8xf32> to vector<8x8xf32>
    %216 = vector.shape_cast %213 : vector<8x4x4xf32> to vector<8x16xf32>
    %cst_142 = arith.constant dense<0.000000e+00> : vector<8x16xf32>
    %217 = tpu.matmul %215, %216, %cst_142 {dimension_numbers = #tpu.dot_dimension_numbers<[1], [0], [0], [1], [0, 0, 1, 1], [], []>} : vector<8x8xf32>, vector<8x16xf32>, vector<8x16xf32> -> vector<8x16xf32>
    %218 = arith.addf %212, %217 : vector<8x16xf32>
    %219 = vector.extract_strided_slice %4 {offsets = [0, 1, 1], sizes = [8, 4, 4], strides = [1, 1, 1]} : vector<32x5x5xf32> to vector<8x4x4xf32>
    %c4_143 = arith.constant 4 : index
    %c0_144 = arith.constant 0 : index
    %c0_145 = arith.constant 0 : index
    %220 = vector.load %arg2[%c4_143, %c0_144, %c0_145] : memref<9x8x8xf32, #tpu.memory_space<vmem>>, vector<1x8x8xf32>
    %221 = vector.shape_cast %220 : vector<1x8x8xf32> to vector<8x8xf32>
    %222 = vector.shape_cast %219 : vector<8x4x4xf32> to vector<8x16xf32>
    %cst_146 = arith.constant dense<0.000000e+00> : vector<8x16xf32>
    %223 = tpu.matmul %221, %222, %cst_146 {dimension_numbers = #tpu.dot_dimension_numbers<[1], [0], [0], [1], [0, 0, 1, 1], [], []>} : vector<8x8xf32>, vector<8x16xf32>, vector<8x16xf32> -> vector<8x16xf32>
    %224 = arith.addf %218, %223 : vector<8x16xf32>
    %225 = vector.extract_strided_slice %4 {offsets = [8, 1, 1], sizes = [8, 4, 4], strides = [1, 1, 1]} : vector<32x5x5xf32> to vector<8x4x4xf32>
    %c5_147 = arith.constant 5 : index
    %c0_148 = arith.constant 0 : index
    %c0_149 = arith.constant 0 : index
    %226 = vector.load %arg2[%c5_147, %c0_148, %c0_149] : memref<9x8x8xf32, #tpu.memory_space<vmem>>, vector<1x8x8xf32>
    %227 = vector.shape_cast %226 : vector<1x8x8xf32> to vector<8x8xf32>
    %228 = vector.shape_cast %225 : vector<8x4x4xf32> to vector<8x16xf32>
    %cst_150 = arith.constant dense<0.000000e+00> : vector<8x16xf32>
    %229 = tpu.matmul %227, %228, %cst_150 {dimension_numbers = #tpu.dot_dimension_numbers<[1], [0], [0], [1], [0, 0, 1, 1], [], []>} : vector<8x8xf32>, vector<8x16xf32>, vector<8x16xf32> -> vector<8x16xf32>
    %230 = arith.addf %224, %229 : vector<8x16xf32>
    %231 = vector.extract_strided_slice %4 {offsets = [24, 1, 0], sizes = [8, 4, 4], strides = [1, 1, 1]} : vector<32x5x5xf32> to vector<8x4x4xf32>
    %c6_151 = arith.constant 6 : index
    %c0_152 = arith.constant 0 : index
    %c0_153 = arith.constant 0 : index
    %232 = vector.load %arg2[%c6_151, %c0_152, %c0_153] : memref<9x8x8xf32, #tpu.memory_space<vmem>>, vector<1x8x8xf32>
    %233 = vector.shape_cast %232 : vector<1x8x8xf32> to vector<8x8xf32>
    %234 = vector.shape_cast %231 : vector<8x4x4xf32> to vector<8x16xf32>
    %cst_154 = arith.constant dense<0.000000e+00> : vector<8x16xf32>
    %235 = tpu.matmul %233, %234, %cst_154 {dimension_numbers = #tpu.dot_dimension_numbers<[1], [0], [0], [1], [0, 0, 1, 1], [], []>} : vector<8x8xf32>, vector<8x16xf32>, vector<8x16xf32> -> vector<8x16xf32>
    %236 = arith.addf %230, %235 : vector<8x16xf32>
    %237 = vector.extract_strided_slice %4 {offsets = [16, 1, 1], sizes = [8, 4, 4], strides = [1, 1, 1]} : vector<32x5x5xf32> to vector<8x4x4xf32>
    %c7_155 = arith.constant 7 : index
    %c0_156 = arith.constant 0 : index
    %c0_157 = arith.constant 0 : index
    %238 = vector.load %arg2[%c7_155, %c0_156, %c0_157] : memref<9x8x8xf32, #tpu.memory_space<vmem>>, vector<1x8x8xf32>
    %239 = vector.shape_cast %238 : vector<1x8x8xf32> to vector<8x8xf32>
    %240 = vector.shape_cast %237 : vector<8x4x4xf32> to vector<8x16xf32>
    %cst_158 = arith.constant dense<0.000000e+00> : vector<8x16xf32>
    %241 = tpu.matmul %239, %240, %cst_158 {dimension_numbers = #tpu.dot_dimension_numbers<[1], [0], [0], [1], [0, 0, 1, 1], [], []>} : vector<8x8xf32>, vector<8x16xf32>, vector<8x16xf32> -> vector<8x16xf32>
    %242 = arith.addf %236, %241 : vector<8x16xf32>
    %243 = vector.extract_strided_slice %4 {offsets = [24, 1, 1], sizes = [8, 4, 4], strides = [1, 1, 1]} : vector<32x5x5xf32> to vector<8x4x4xf32>
    %c8_159 = arith.constant 8 : index
    %c0_160 = arith.constant 0 : index
    %c0_161 = arith.constant 0 : index
    %244 = vector.load %arg2[%c8_159, %c0_160, %c0_161] : memref<9x8x8xf32, #tpu.memory_space<vmem>>, vector<1x8x8xf32>
    %245 = vector.shape_cast %244 : vector<1x8x8xf32> to vector<8x8xf32>
    %246 = vector.shape_cast %243 : vector<8x4x4xf32> to vector<8x16xf32>
    %cst_162 = arith.constant dense<0.000000e+00> : vector<8x16xf32>
    %247 = tpu.matmul %245, %246, %cst_162 {dimension_numbers = #tpu.dot_dimension_numbers<[1], [0], [0], [1], [0, 0, 1, 1], [], []>} : vector<8x8xf32>, vector<8x16xf32>, vector<8x16xf32> -> vector<8x16xf32>
    %248 = arith.addf %242, %247 : vector<8x16xf32>
    %c0_163 = arith.constant 0 : index
    %c0_164 = arith.constant 0 : index
    %249 = vector.load %arg3[%c0_163, %c0_164] : memref<8x1xf32, #tpu.memory_space<vmem>>, vector<8x1xf32>
    %250 = vector.broadcast %249 : vector<8x1xf32> to vector<8x16xf32>
    %251 = arith.addf %248, %250 : vector<8x16xf32>
    %cst_165 = arith.constant 2.000000e-01 : f32
    %252 = vector.broadcast %cst_165 : f32 to vector<8x16xf32>
    %253 = arith.mulf %252, %251 : vector<8x16xf32>
    %254 = arith.maximumf %251, %253 : vector<8x16xf32>
    %255 = vector.shape_cast %254 : vector<8x16xf32> to vector<8x4x4xf32>
    %c24 = arith.constant 24 : index
    %c1_166 = arith.constant 1 : index
    %c1_167 = arith.constant 1 : index
    %256 = vector.load %arg7[%c24, %c1_166, %c1_167] : memref<32x5x5xf32, #tpu.memory_space<vmem>>, vector<8x4x4xf32>
    tpu.vector_store %arg7[%c24, %c1_166, %c1_167], %255 {strides = array<i32>} : memref<32x5x5xf32, #tpu.memory_space<vmem>>, vector<8x4x4xf32>,
    %cst_168 = arith.constant 0.000000e+00 : f32
    %257 = vector.broadcast %cst_168 : f32 to vector<16x16xf32>
    %c24_169 = arith.constant 24 : index
    %c0_170 = arith.constant 0 : index
    %c0_171 = arith.constant 0 : index
    %258 = vector.load %arg7[%c24_169, %c0_170, %c0_171] : memref<32x5x5xf32, #tpu.memory_space<vmem>>, vector<8x4x4xf32>
    %c0_172 = arith.constant 0 : index
    %c0_173 = arith.constant 0 : index
    %c0_174 = arith.constant 0 : index
    %259 = vector.load %arg4[%c0_172, %c0_173, %c0_174] : memref<9x16x8xf32, #tpu.memory_space<vmem>>, vector<1x16x8xf32>
    %260 = vector.shape_cast %259 : vector<1x16x8xf32> to vector<16x8xf32>
    %261 = vector.shape_cast %258 : vector<8x4x4xf32> to vector<8x16xf32>
    %cst_175 = arith.constant dense<0.000000e+00> : vector<16x16xf32>
    %262 = tpu.matmul %260, %261, %cst_175 {dimension_numbers = #tpu.dot_dimension_numbers<[1], [0], [0], [1], [0, 0, 1, 1], [], []>} : vector<16x8xf32>, vector<8x16xf32>, vector<16x16xf32> -> vector<16x16xf32>
    %263 = arith.addf %257, %262 : vector<16x16xf32>
    %c16_176 = arith.constant 16 : index
    %c0_177 = arith.constant 0 : index
    %c1_178 = arith.constant 1 : index
    %264 = vector.load %arg7[%c16_176, %c0_177, %c1_178] : memref<32x5x5xf32, #tpu.memory_space<vmem>>, vector<8x4x4xf32>
    %c1_179 = arith.constant 1 : index
    %c0_180 = arith.constant 0 : index
    %c0_181 = arith.constant 0 : index
    %265 = vector.load %arg4[%c1_179, %c0_180, %c0_181] : memref<9x16x8xf32, #tpu.memory_space<vmem>>, vector<1x16x8xf32>
    %266 = vector.shape_cast %265 : vector<1x16x8xf32> to vector<16x8xf32>
    %267 = vector.shape_cast %264 : vector<8x4x4xf32> to vector<8x16xf32>
    %cst_182 = arith.constant dense<0.000000e+00> : vector<16x16xf32>
    %268 = tpu.matmul %266, %267, %cst_182 {dimension_numbers = #tpu.dot_dimension_numbers<[1], [0], [0], [1], [0, 0, 1, 1], [], []>} : vector<16x8xf32>, vector<8x16xf32>, vector<16x16xf32> -> vector<16x16xf32>
    %269 = arith.addf %263, %268 : vector<16x16xf32>
    %c24_183 = arith.constant 24 : index
    %c0_184 = arith.constant 0 : index
    %c1_185 = arith.constant 1 : index
    %270 = vector.load %arg7[%c24_183, %c0_184, %c1_185] : memref<32x5x5xf32, #tpu.memory_space<vmem>>, vector<8x4x4xf32>
    %c2_186 = arith.constant 2 : index
    %c0_187 = arith.constant 0 : index
    %c0_188 = arith.constant 0 : index
    %271 = vector.load %arg4[%c2_186, %c0_187, %c0_188] : memref<9x16x8xf32, #tpu.memory_space<vmem>>, vector<1x16x8xf32>
    %272 = vector.shape_cast %271 : vector<1x16x8xf32> to vector<16x8xf32>
    %273 = vector.shape_cast %270 : vector<8x4x4xf32> to vector<8x16xf32>
    %cst_189 = arith.constant dense<0.000000e+00> : vector<16x16xf32>
    %274 = tpu.matmul %272, %273, %cst_189 {dimension_numbers = #tpu.dot_dimension_numbers<[1], [0], [0], [1], [0, 0, 1, 1], [], []>} : vector<16x8xf32>, vector<8x16xf32>, vector<16x16xf32> -> vector<16x16xf32>
    %275 = arith.addf %269, %274 : vector<16x16xf32>
    %c8_190 = arith.constant 8 : index
    %c1_191 = arith.constant 1 : index
    %c0_192 = arith.constant 0 : index
    %276 = vector.load %arg7[%c8_190, %c1_191, %c0_192] : memref<32x5x5xf32, #tpu.memory_space<vmem>>, vector<8x4x4xf32>
    %c3_193 = arith.constant 3 : index
    %c0_194 = arith.constant 0 : index
    %c0_195 = arith.constant 0 : index
    %277 = vector.load %arg4[%c3_193, %c0_194, %c0_195] : memref<9x16x8xf32, #tpu.memory_space<vmem>>, vector<1x16x8xf32>
    %278 = vector.shape_cast %277 : vector<1x16x8xf32> to vector<16x8xf32>
    %279 = vector.shape_cast %276 : vector<8x4x4xf32> to vector<8x16xf32>
    %cst_196 = arith.constant dense<0.000000e+00> : vector<16x16xf32>
    %280 = tpu.matmul %278, %279, %cst_196 {dimension_numbers = #tpu.dot_dimension_numbers<[1], [0], [0], [1], [0, 0, 1, 1], [], []>} : vector<16x8xf32>, vector<8x16xf32>, vector<16x16xf32> -> vector<16x16xf32>
    %281 = arith.addf %275, %280 : vector<16x16xf32>
    %c0_197 = arith.constant 0 : index
    %c1_198 = arith.constant 1 : index
    %c1_199 = arith.constant 1 : index
    %282 = vector.load %arg7[%c0_197, %c1_198, %c1_199] : memref<32x5x5xf32, #tpu.memory_space<vmem>>, vector<8x4x4xf32>
    %c4_200 = arith.constant 4 : index
    %c0_201 = arith.constant 0 : index
    %c0_202 = arith.constant 0 : index
    %283 = vector.load %arg4[%c4_200, %c0_201, %c0_202] : memref<9x16x8xf32, #tpu.memory_space<vmem>>, vector<1x16x8xf32>
    %284 = vector.shape_cast %283 : vector<1x16x8xf32> to vector<16x8xf32>
    %285 = vector.shape_cast %282 : vector<8x4x4xf32> to vector<8x16xf32>
    %cst_203 = arith.constant dense<0.000000e+00> : vector<16x16xf32>
    %286 = tpu.matmul %284, %285, %cst_203 {dimension_numbers = #tpu.dot_dimension_numbers<[1], [0], [0], [1], [0, 0, 1, 1], [], []>} : vector<16x8xf32>, vector<8x16xf32>, vector<16x16xf32> -> vector<16x16xf32>
    %287 = arith.addf %281, %286 : vector<16x16xf32>
    %c8_204 = arith.constant 8 : index
    %c1_205 = arith.constant 1 : index
    %c1_206 = arith.constant 1 : index
    %288 = vector.load %arg7[%c8_204, %c1_205, %c1_206] : memref<32x5x5xf32, #tpu.memory_space<vmem>>, vector<8x4x4xf32>
    %c5_207 = arith.constant 5 : index
    %c0_208 = arith.constant 0 : index
    %c0_209 = arith.constant 0 : index
    %289 = vector.load %arg4[%c5_207, %c0_208, %c0_209] : memref<9x16x8xf32, #tpu.memory_space<vmem>>, vector<1x16x8xf32>
    %290 = vector.shape_cast %289 : vector<1x16x8xf32> to vector<16x8xf32>
    %291 = vector.shape_cast %288 : vector<8x4x4xf32> to vector<8x16xf32>
    %cst_210 = arith.constant dense<0.000000e+00> : vector<16x16xf32>
    %292 = tpu.matmul %290, %291, %cst_210 {dimension_numbers = #tpu.dot_dimension_numbers<[1], [0], [0], [1], [0, 0, 1, 1], [], []>} : vector<16x8xf32>, vector<8x16xf32>, vector<16x16xf32> -> vector<16x16xf32>
    %293 = arith.addf %287, %292 : vector<16x16xf32>
    %c24_211 = arith.constant 24 : index
    %c1_212 = arith.constant 1 : index
    %c0_213 = arith.constant 0 : index
    %294 = vector.load %arg7[%c24_211, %c1_212, %c0_213] : memref<32x5x5xf32, #tpu.memory_space<vmem>>, vector<8x4x4xf32>
    %c6_214 = arith.constant 6 : index
    %c0_215 = arith.constant 0 : index
    %c0_216 = arith.constant 0 : index
    %295 = vector.load %arg4[%c6_214, %c0_215, %c0_216] : memref<9x16x8xf32, #tpu.memory_space<vmem>>, vector<1x16x8xf32>
    %296 = vector.shape_cast %295 : vector<1x16x8xf32> to vector<16x8xf32>
    %297 = vector.shape_cast %294 : vector<8x4x4xf32> to vector<8x16xf32>
    %cst_217 = arith.constant dense<0.000000e+00> : vector<16x16xf32>
    %298 = tpu.matmul %296, %297, %cst_217 {dimension_numbers = #tpu.dot_dimension_numbers<[1], [0], [0], [1], [0, 0, 1, 1], [], []>} : vector<16x8xf32>, vector<8x16xf32>, vector<16x16xf32> -> vector<16x16xf32>
    %299 = arith.addf %293, %298 : vector<16x16xf32>
    %c16_218 = arith.constant 16 : index
    %c1_219 = arith.constant 1 : index
    %c1_220 = arith.constant 1 : index
    %300 = vector.load %arg7[%c16_218, %c1_219, %c1_220] : memref<32x5x5xf32, #tpu.memory_space<vmem>>, vector<8x4x4xf32>
    %c7_221 = arith.constant 7 : index
    %c0_222 = arith.constant 0 : index
    %c0_223 = arith.constant 0 : index
    %301 = vector.load %arg4[%c7_221, %c0_222, %c0_223] : memref<9x16x8xf32, #tpu.memory_space<vmem>>, vector<1x16x8xf32>
    %302 = vector.shape_cast %301 : vector<1x16x8xf32> to vector<16x8xf32>
    %303 = vector.shape_cast %300 : vector<8x4x4xf32> to vector<8x16xf32>
    %cst_224 = arith.constant dense<0.000000e+00> : vector<16x16xf32>
    %304 = tpu.matmul %302, %303, %cst_224 {dimension_numbers = #tpu.dot_dimension_numbers<[1], [0], [0], [1], [0, 0, 1, 1], [], []>} : vector<16x8xf32>, vector<8x16xf32>, vector<16x16xf32> -> vector<16x16xf32>
    %305 = arith.addf %299, %304 : vector<16x16xf32>
    %c24_225 = arith.constant 24 : index
    %c1_226 = arith.constant 1 : index
    %c1_227 = arith.constant 1 : index
    %306 = vector.load %arg7[%c24_225, %c1_226, %c1_227] : memref<32x5x5xf32, #tpu.memory_space<vmem>>, vector<8x4x4xf32>
    %c8_228 = arith.constant 8 : index
    %c0_229 = arith.constant 0 : index
    %c0_230 = arith.constant 0 : index
    %307 = vector.load %arg4[%c8_228, %c0_229, %c0_230] : memref<9x16x8xf32, #tpu.memory_space<vmem>>, vector<1x16x8xf32>
    %308 = vector.shape_cast %307 : vector<1x16x8xf32> to vector<16x8xf32>
    %309 = vector.shape_cast %306 : vector<8x4x4xf32> to vector<8x16xf32>
    %cst_231 = arith.constant dense<0.000000e+00> : vector<16x16xf32>
    %310 = tpu.matmul %308, %309, %cst_231 {dimension_numbers = #tpu.dot_dimension_numbers<[1], [0], [0], [1], [0, 0, 1, 1], [], []>} : vector<16x8xf32>, vector<8x16xf32>, vector<16x16xf32> -> vector<16x16xf32>
    %311 = arith.addf %305, %310 : vector<16x16xf32>
    %c0_232 = arith.constant 0 : index
    %c0_233 = arith.constant 0 : index
    %312 = vector.load %arg5[%c0_232, %c0_233] : memref<16x1xf32, #tpu.memory_space<vmem>>, vector<16x1xf32>
    %313 = vector.broadcast %312 : vector<16x1xf32> to vector<16x16xf32>
    %314 = arith.addf %311, %313 : vector<16x16xf32>
    %cst_234 = arith.constant 2.000000e-01 : f32
    %315 = vector.broadcast %cst_234 : f32 to vector<16x16xf32>
    %316 = arith.mulf %315, %314 : vector<16x16xf32>
    %317 = arith.maximumf %314, %316 : vector<16x16xf32>
    %318 = vector.shape_cast %317 : vector<16x16xf32> to vector<16x4x4xf32>
    %c0_235 = arith.constant 0 : index
    %c0_236 = arith.constant 0 : index
    %c0_237 = arith.constant 0 : index
    %c0_238 = arith.constant 0 : index
    %319 = vector.load %arg6[%c0_235, %c0_236, %c0_237, %c0_238] : memref<1x16x4x4xf32, #tpu.memory_space<vmem>>, vector<1x16x4x4xf32>
    %320 = vector.shape_cast %319 : vector<1x16x4x4xf32> to vector<16x4x4xf32>
    %321 = vector.shape_cast %318 : vector<16x4x4xf32> to vector<1x16x4x4xf32>
    tpu.vector_store %arg6[%c0_235, %c0_236, %c0_237, %c0_238], %321 {strides = array<i32>} : memref<1x16x4x4xf32, #tpu.memory_space<vmem>>, vector<1x16x4x4xf32>,
    return
  }
  func.func @transform_0(%arg0: i32) -> (i32, i32, i32, i32) {
    %c0_i32 = arith.constant 0 : i32
    %c0_i32_0 = arith.constant 0 : i32
    %c0_i32_1 = arith.constant 0 : i32
    %c0_i32_2 = arith.constant 0 : i32
    return %arg0, %c0_i32, %c0_i32_0, %c0_i32_1 : i32, i32, i32, i32
  }
  func.func @transform_1(%arg0: i32) -> (i32, i32, i32) {
    %c0_i32 = arith.constant 0 : i32
    %c0_i32_0 = arith.constant 0 : i32
    %c0_i32_1 = arith.constant 0 : i32
    %c0_i32_2 = arith.constant 0 : i32
    return %c0_i32, %c0_i32_0, %c0_i32_1 : i32, i32, i32
  }
  func.func @transform_2(%arg0: i32) -> (i32, i32) {
    %c0_i32 = arith.constant 0 : i32
    %c0_i32_0 = arith.constant 0 : i32
    %c0_i32_1 = arith.constant 0 : i32
    return %c0_i32, %c0_i32_0 : i32, i32
  }
  func.func @transform_3(%arg0: i32) -> (i32, i32, i32) {
    %c0_i32 = arith.constant 0 : i32
    %c0_i32_0 = arith.constant 0 : i32
    %c0_i32_1 = arith.constant 0 : i32
    %c0_i32_2 = arith.constant 0 : i32
    return %c0_i32, %c0_i32_0, %c0_i32_1 : i32, i32, i32
  }
  func.func @transform_4(%arg0: i32) -> (i32, i32) {
    %c0_i32 = arith.constant 0 : i32
    %c0_i32_0 = arith.constant 0 : i32
    %c0_i32_1 = arith.constant 0 : i32
    return %c0_i32, %c0_i32_0 : i32, i32
  }
  func.func @transform_5(%arg0: i32) -> (i32, i32, i32, i32) {
    %c0_i32 = arith.constant 0 : i32
    %c0_i32_0 = arith.constant 0 : i32
    %c0_i32_1 = arith.constant 0 : i32
    %c0_i32_2 = arith.constant 0 : i32
    return %arg0, %c0_i32, %c0_i32_0, %c0_i32_1 : i32, i32, i32, i32
  }
}

</mosaic_0001>

<llo_original>
// kernel: disc_block.2
$region0: #{disc_block.2}
  #allocation0 [shape = 'u32[]', space=smem, size = 0x4, offset = 0x4, fixed_abs, tag = 'smem constant byte address 0x4 - core index']
  #allocation1 [shape = 'u32[72,128]{1,0:T(1,128)}', space=vmem, size = 0x9000, scoped, tag = 'internal scratch']
  %s0 = inlined_call_operand.vmem [shape: bf16[48,128], index: 0, kind: input, shape index: {}]
  %s1 = inlined_call_operand.vmem [shape: f32[12,48], index: 1, kind: input, shape index: {}]
  %s2 = inlined_call_operand.vmem [shape: f32[8,48], index: 2, kind: input, shape index: {}]
  %s3 = inlined_call_operand.vmem [shape: f32[8,1], index: 3, kind: input, shape index: {}]
  %s4 = inlined_call_operand.vmem [shape: bf16[8,128], index: 4, kind: input, shape index: {}]
  %s5 = inlined_call_operand.vmem [shape: f32[12,128], index: 5, kind: output, shape index: {0}]
  %s6 = inlined_call_operand.vmem [shape: bf16[8,128], index: 6, kind: output, shape index: {1}]
  %7 = xla_tuple %s5, %s6
  %s8 = sld [smem:[#allocation0]]
  $region38: #{disc_block.2} parent=0
    _
  %s10 = ssub.s32 1, %s8
  %s11 = scalar_select 0, %s10, %s8
  // Predicated region
  $region2: #{disc_block.2} parent=0 // pred_check
    _
  $region3: #{disc_block.2} parent=0 // pred_check_branch
    %13 = sbr.rel (0) target = $region5
  $region4: #{disc_block.2} parent=0 // pred_region
    _
  $region5: #{disc_block.2} parent=0 // pred_fallthru
    _
  // Predicated region
  $region6: #{disc_block.2} parent=0 // pred_check
    _
  $region7: #{disc_block.2} parent=0 // pred_check_branch
    %15 = sbr.rel (0) target = $region9
  $region8: #{disc_block.2} parent=0 // pred_region
    _
  $region9: #{disc_block.2} parent=0 // pred_fallthru
    _
  // Predicated region
  $region10: #{disc_block.2} parent=0 // pred_check
    _
  $region11: #{disc_block.2} parent=0 // pred_check_branch
    %17 = sbr.rel (0) target = $region13
  $region12: #{disc_block.2} parent=0 // pred_region
    _
  $region13: #{disc_block.2} parent=0 // pred_fallthru
    _
  // Predicated region
  $region14: #{disc_block.2} parent=0 // pred_check
    _
  $region15: #{disc_block.2} parent=0 // pred_check_branch
    %19 = sbr.rel (0) target = $region17
  $region16: #{disc_block.2} parent=0 // pred_region
    _
  $region17: #{disc_block.2} parent=0 // pred_fallthru
    _
  // Predicated region
  $region18: #{disc_block.2} parent=0 // pred_check
    _
  $region19: #{disc_block.2} parent=0 // pred_check_branch
    %21 = sbr.rel (0) target = $region21
  $region20: #{disc_block.2} parent=0 // pred_region
    _
  $region21: #{disc_block.2} parent=0 // pred_fallthru
    _
  %v22 = vld [vmem:[%s0] sm:$0xf]
  %v23 = vld [vmem:[%s0 + $0x4] sm:$0xf]
  %v24 = vld [vmem:[%s0 + $0x8] sm:$0xf]
  %v25 = vld [vmem:[%s0 + $0xc] sm:$0xf]
  %v26 = vld [vmem:[%s0 + $0x10] sm:$0xf]
  %v27 = vld [vmem:[%s0 + $0x14] sm:$0xf]
  %v28 = vunpack.c.l.bf16 %v22
  %v29 = vunpack.c.l.bf16 %v23
  %v30 = vunpack.c.l.bf16 %v24
  %v31 = vunpack.c.l.bf16 %v25
  %v32 = vunpack.c.l.bf16 %v26
  %v33 = vunpack.c.l.bf16 %v27
  %v34 = vld [vmem:[%s1] sm:$0xff]
  %v35 = vld [vmem:[%s1 + $0x8] sm:$0xf]
  %vm36 = vcmask 392192
  %v38 = vsel %vm36, %v34, 0
  %v41 = vsel %vm36, %v35, 0
  %43 = vmatpush.msra.mxu0 0.0
  %44 = vmatpush.msra.mxu0 0.0
  %45 = vmatpush.msra.mxu0 0.0
  %46 = vmatpush.msra.mxu0 0.0
  %47 = vmatpush.msra.mxu0 0.0
  %48 = vmatpush.msra.mxu0 0.0
  %49 = vmatpush.msra.mxu0 0.0
  %50 = vmatpush.msra.mxu0 0.0
  %51 = vmatpush.msra.mxu0 0.0
  %52 = vmatpush.msra.mxu0 0.0
  %53 = vmatpush.msra.mxu0 %v33
  %54 = vmatpush.msra.mxu0 %v32
  %55 = vmatpush.msra.mxu0 %v31
  %56 = vmatpush.msra.mxu0 %v30
  %57 = vmatpush.msra.mxu0 %v29
  %58 = vmatpush.msra.mxu0 %v28
  %59 = vmatmul.f32.gmra.mxu0 %v38
  %v60 = vpop.f32.mrf.mxu0
  %v61 = vadd.f32 0.0, %v60
  %62 = vmatmul.f32.gmra.mxu0 %v41
  %v63 = vpop.f32.mrf.mxu0
  %v64 = vadd.f32 0.0, %v63
  %65 = vdwg.mxu0
  %66 = vst [vmem:[%s5] sm:$0xff] %v61
  %67 = vst [vmem:[%s5 + $0x8] sm:$0xf] %v64
  %v68 = vld [vmem:[%s2] sm:$0xff]
  %v69 = vld [vmem:[%s3] sm:$0xff]
  %71 = vset.pattern.permute.xlu0 0
  %72 = vperm.xlu0 %71, %v69
  %v73 = vpop.permute.xlu0 %72
  %v76 = vsel %vm36, %v68, 0
  %78 = vmatpush.msra.mxu0 0.0
  %79 = vmatpush.msra.mxu0 0.0
  %80 = vmatpush.msra.mxu0 0.0
  %81 = vmatpush.msra.mxu0 0.0
  %82 = vmatpush.msra.mxu0 0.0
  %83 = vmatpush.msra.mxu0 0.0
  %84 = vmatpush.msra.mxu0 0.0
  %85 = vmatpush.msra.mxu0 0.0
  %86 = vmatpush.msra.mxu0 0.0
  %87 = vmatpush.msra.mxu0 0.0
  %88 = vmatpush.msra.mxu0 %v33
  %89 = vmatpush.msra.mxu0 %v32
  %90 = vmatpush.msra.mxu0 %v31
  %91 = vmatpush.msra.mxu0 %v30
  %92 = vmatpush.msra.mxu0 %v29
  %93 = vmatpush.msra.mxu0 %v28
  %94 = vmatmul.f32.gmra.mxu0 %v76
  %v95 = vpop.f32.mrf.mxu0
  %v96 = vadd.f32 %v73, %v95
  %97 = vdwg.mxu0
  %v98 = vmul.f32 %v96, 0.2
  %v99 = vmax.f32 %v96, %v98
  %v100 = vld [vmem:[%s4] sm:$0xf]
  %v101 = vunpack.c.l.bf16 %v100
  %v102 = vadd.f32 %v99, %v101
  %v103 = vpack.c.bf16 %v102, %v102
  %104 = vst [vmem:[%s6] sm:$0xf] %v103
  // Predicated region
  $region22: #{disc_block.2} parent=0 // pred_check
    _
  $region23: #{disc_block.2} parent=0 // pred_check_branch
    %106 = sbr.rel (0) target = $region25
  $region24: #{disc_block.2} parent=0 // pred_region
    _
  $region25: #{disc_block.2} parent=0 // pred_fallthru
    _
  // Predicated region
  $region26: #{disc_block.2} parent=0 // pred_check
    _
  $region27: #{disc_block.2} parent=0 // pred_check_branch
    %108 = sbr.rel (0) target = $region29
  $region28: #{disc_block.2} parent=0 // pred_region
    _
  $region29: #{disc_block.2} parent=0 // pred_fallthru
    _
  // Predicated region
  $region30: #{disc_block.2} parent=0 // pred_check
    _
  $region31: #{disc_block.2} parent=0 // pred_check_branch
    %110 = sbr.rel (0) target = $region33
  $region32: #{disc_block.2} parent=0 // pred_region
    _
  $region33: #{disc_block.2} parent=0 // pred_fallthru
    _
  // Predicated region
  $region34: #{disc_block.2} parent=0 // pred_check
    _
  $region35: #{disc_block.2} parent=0 // pred_check_branch
    %112 = sbr.rel (0) target = $region37
  $region36: #{disc_block.2} parent=0 // pred_region
    _
  $region37: #{disc_block.2} parent=0 // pred_fallthru
    _

// kernel: disc_block.3
$region0: #{disc_block.3}
  #allocation0 [shape = 'u32[]', space=smem, size = 0x4, offset = 0x4, fixed_abs, tag = 'smem constant byte address 0x4 - core index']
  #allocation1 [shape = 'u32[72,128]{1,0:T(1,128)}', space=vmem, size = 0x9000, scoped, tag = 'internal scratch']
  #allocation2 [shape = 'f32[32,5,5]{2,1,0:T(8,128)}', space=vmem, size = 0x20000, scoped, tag = 'scratch operand']
  %s0 = inlined_call_operand.vmem [shape: bf16[2,32,5,5], index: 0, kind: input, shape index: {}]
  %s1 = inlined_call_operand.vmem [shape: f32[9,8,8], index: 1, kind: input, shape index: {}]
  %s2 = inlined_call_operand.vmem [shape: f32[8,1], index: 2, kind: input, shape index: {}]
  %s3 = inlined_call_operand.vmem [shape: f32[9,16,8], index: 3, kind: input, shape index: {}]
  %s4 = inlined_call_operand.vmem [shape: f32[16,1], index: 4, kind: input, shape index: {}]
  %s5 = inlined_call_operand.vmem [shape: f32[2,16,4,4], index: 5, kind: output, shape index: {}]
  %s6 = sld [smem:[#allocation0]]
  $region53: #{disc_block.3} parent=0
    _
  %s8 = ssub.s32 1, %s6
  %s9 = scalar_select 0, %s8, %s6
  loop: start=0, step=1, limit=4
  $region2: #{disc_block.3} parent=0 // loop_pre_header
    _
  $region3: #{disc_block.3} parent=0 // loop_header
    %s11 = sphi 0, %s15
    %p12 = scmp.ge.s32.totalorder %s11, 4
    %s21 = sphi 0, %s23
    %s24 = sphi 0, %s21
    %s25 = sphi 0, %s24
    %s41 = sphi 0, %s25
    %s45 = sphi 0, %s45
    %s47 = sphi 0, %s45
    %s48 = sphi 0, %s47
    %s62 = sphi 0, %s48
    %s66 = sphi 0, %s66
    %s68 = sphi 0, %s66
    %s69 = sphi 0, %s68
    %s83 = sphi 0, %s69
    %s87 = sphi 0, %s87
    %s89 = sphi 0, %s87
    %s90 = sphi 0, %s89
    %s104 = sphi 0, %s90
    %s108 = sphi 0, %s108
    %s110 = sphi 0, %s108
    %s111 = sphi 0, %s110
    %s125 = sphi 0, %s111
    %s131 = sphi 0, %s133
    %s134 = sphi 0, %s131
    %s135 = sphi 0, %s134
    %s151 = sphi 0, %s135
  $region4: #{disc_block.3} parent=0 // loop_header_branch
    %14 = sbr.rel (%p12) target = $region8
  $region5: #{disc_block.3} parent=0 // loop_body
    %s16 = ssub.s32 %s11, 1
    %s17 = ssub.s32 %s11, 2
    %s18 = sadd.s32 %s11, 1
    %s19 = ssub.s32 %s11, %s18
    %p20 = scmp.eq.s32.totalorder %s19, 0
    %s22 = sadd.s32 %s21, 1
    %s23 = scalar_select %p20, %s21, %s22
    %p26 = pneg %p20
    %p27 = scmp.eq.s32.totalorder %s11, 1
    %p28 = por %p26, %p27
    %p29 = scmp.ne.s32.totalorder %s21, %s24
    %p30 = scmp.eq.s32.totalorder %s11, 0
    %p31 = por %p29, %p30
    %p32 = scmp.ne.s32.totalorder %s21, %s24
    %p33 = scmp.eq.s32.totalorder %s16, 1
    %p34 = por %p32, %p33
    %p35 = scmp.ne.s32.totalorder %s24, %s25
    %p36 = scmp.eq.s32.totalorder %s16, 0
    %p37 = por %p35, %p36
    %p38 = scmp.ne.s32.totalorder %s24, %s25
    %p39 = scmp.eq.s32.totalorder %s17, 1
    %p40 = por %p38, %p39
    %p42 = scmp.ne.s32.totalorder %s25, %s41
    %p43 = scmp.eq.s32.totalorder %s17, 0
    %p44 = por %p42, %p43
    %s46 = sadd.s32 %s45, 1
    %p49 = scmp.eq.s32.totalorder %s11, 1
    %p50 = scmp.ne.s32.totalorder %s45, %s47
    %p51 = scmp.eq.s32.totalorder %s11, 0
    %p52 = por %p50, %p51
    %p53 = scmp.ne.s32.totalorder %s45, %s47
    %p54 = scmp.eq.s32.totalorder %s16, 1
    %p55 = por %p53, %p54
    %p56 = scmp.ne.s32.totalorder %s47, %s48
    %p57 = scmp.eq.s32.totalorder %s16, 0
    %p58 = por %p56, %p57
    %p59 = scmp.ne.s32.totalorder %s47, %s48
    %p60 = scmp.eq.s32.totalorder %s17, 1
    %p61 = por %p59, %p60
    %p63 = scmp.ne.s32.totalorder %s48, %s62
    %p64 = scmp.eq.s32.totalorder %s17, 0
    %p65 = por %p63, %p64
    %s67 = sadd.s32 %s66, 1
    %p70 = scmp.eq.s32.totalorder %s11, 1
    %p71 = scmp.ne.s32.totalorder %s66, %s68
    %p72 = scmp.eq.s32.totalorder %s11, 0
    %p73 = por %p71, %p72
    %p74 = scmp.ne.s32.totalorder %s66, %s68
    %p75 = scmp.eq.s32.totalorder %s16, 1
    %p76 = por %p74, %p75
    %p77 = scmp.ne.s32.totalorder %s68, %s69
    %p78 = scmp.eq.s32.totalorder %s16, 0
    %p79 = por %p77, %p78
    %p80 = scmp.ne.s32.totalorder %s68, %s69
    %p81 = scmp.eq.s32.totalorder %s17, 1
    %p82 = por %p80, %p81
    %p84 = scmp.ne.s32.totalorder %s69, %s83
    %p85 = scmp.eq.s32.totalorder %s17, 0
    %p86 = por %p84, %p85
    %s88 = sadd.s32 %s87, 1
    %p91 = scmp.eq.s32.totalorder %s11, 1
    %p92 = scmp.ne.s32.totalorder %s87, %s89
    %p93 = scmp.eq.s32.totalorder %s11, 0
    %p94 = por %p92, %p93
    %p95 = scmp.ne.s32.totalorder %s87, %s89
    %p96 = scmp.eq.s32.totalorder %s16, 1
    %p97 = por %p95, %p96
    %p98 = scmp.ne.s32.totalorder %s89, %s90
    %p99 = scmp.eq.s32.totalorder %s16, 0
    %p100 = por %p98, %p99
    %p101 = scmp.ne.s32.totalorder %s89, %s90
    %p102 = scmp.eq.s32.totalorder %s17, 1
    %p103 = por %p101, %p102
    %p105 = scmp.ne.s32.totalorder %s90, %s104
    %p106 = scmp.eq.s32.totalorder %s17, 0
    %p107 = por %p105, %p106
    %s109 = sadd.s32 %s108, 1
    %p112 = scmp.eq.s32.totalorder %s11, 1
    %p113 = scmp.ne.s32.totalorder %s108, %s110
    %p114 = scmp.eq.s32.totalorder %s11, 0
    %p115 = por %p113, %p114
    %p116 = scmp.ne.s32.totalorder %s108, %s110
    %p117 = scmp.eq.s32.totalorder %s16, 1
    %p118 = por %p116, %p117
    %p119 = scmp.ne.s32.totalorder %s110, %s111
    %p120 = scmp.eq.s32.totalorder %s16, 0
    %p121 = por %p119, %p120
    %p122 = scmp.ne.s32.totalorder %s110, %s111
    %p123 = scmp.eq.s32.totalorder %s17, 1
    %p124 = por %p122, %p123
    %p126 = scmp.ne.s32.totalorder %s111, %s125
    %p127 = scmp.eq.s32.totalorder %s17, 0
    %p128 = por %p126, %p127
    %s129 = ssub.s32 %s11, %s18
    %p130 = scmp.eq.s32.totalorder %s129, 0
    %s132 = sadd.s32 %s131, 1
    %s133 = scalar_select %p130, %s131, %s132
    %p136 = pneg %p130
    %p137 = scmp.eq.s32.totalorder %s11, 1
    %p138 = por %p136, %p137
    %p139 = scmp.ne.s32.totalorder %s131, %s134
    %p140 = scmp.eq.s32.totalorder %s11, 0
    %p141 = por %p139, %p140
    %p142 = scmp.ne.s32.totalorder %s131, %s134
    %p143 = scmp.eq.s32.totalorder %s16, 1
    %p144 = por %p142, %p143
    %p145 = scmp.ne.s32.totalorder %s134, %s135
    %p146 = scmp.eq.s32.totalorder %s16, 0
    %p147 = por %p145, %p146
    %p148 = scmp.ne.s32.totalorder %s134, %s135
    %p149 = scmp.eq.s32.totalorder %s17, 1
    %p150 = por %p148, %p149
    %p152 = scmp.ne.s32.totalorder %s135, %s151
    %p153 = scmp.eq.s32.totalorder %s17, 0
    %p154 = por %p152, %p153
    %p155 = scmp.le.s32.totalorder 1, %s11
    %p156 = scmp.lt.s32.totalorder %s11, 3
    %p157 = pnand %p155, %p156
    %p158 = pneg %p157
    // Predicated region
    $region9: #{disc_block.3} parent=5 // pred_check
      _
    $region10: #{disc_block.3} parent=5 // pred_check_branch
      %160 = sbr.rel (%p157) target = $region12
    $region11: #{disc_block.3} parent=5 // pred_region
      %s161 = ssub.s32 %s11, 1
      // Predicated region
      $region13: #{disc_block.3} parent=11 // pred_check
        %p162 = pneg %p58
      $region14: #{disc_block.3} parent=11 // pred_check_branch
        %164 = sbr.rel (%p162) target = $region16
      $region15: #{disc_block.3} parent=11 // pred_region
        _
      $region16: #{disc_block.3} parent=11 // pred_fallthru
        _
      // Predicated region
      $region17: #{disc_block.3} parent=11 // pred_check
        %p165 = pneg %p79
      $region18: #{disc_block.3} parent=11 // pred_check_branch
        %167 = sbr.rel (%p165) target = $region20
      $region19: #{disc_block.3} parent=11 // pred_region
        _
      $region20: #{disc_block.3} parent=11 // pred_fallthru
        _
      // Predicated region
      $region21: #{disc_block.3} parent=11 // pred_check
        %p168 = pneg %p100
      $region22: #{disc_block.3} parent=11 // pred_check_branch
        %170 = sbr.rel (%p168) target = $region24
      $region23: #{disc_block.3} parent=11 // pred_region
        _
      $region24: #{disc_block.3} parent=11 // pred_fallthru
        _
      // Predicated region
      $region25: #{disc_block.3} parent=11 // pred_check
        %p171 = pneg %p121
      $region26: #{disc_block.3} parent=11 // pred_check_branch
        %173 = sbr.rel (%p171) target = $region28
      $region27: #{disc_block.3} parent=11 // pred_region
        _
      $region28: #{disc_block.3} parent=11 // pred_fallthru
        _
    $region12: #{disc_block.3} parent=5 // pred_fallthru
      _
    %p174 = scmp.lt.s32.totalorder %s11, 2
    // Predicated region
    $region29: #{disc_block.3} parent=5 // pred_check
      %p175 = pneg %p174
    $region30: #{disc_block.3} parent=5 // pred_check_branch
      %177 = sbr.rel (%p175) target = $region32
    $region31: #{disc_block.3} parent=5 // pred_region
      // Predicated region
      $region33: #{disc_block.3} parent=31 // pred_check
        %p178 = pneg %p31
      $region34: #{disc_block.3} parent=31 // pred_check_branch
        %180 = sbr.rel (%p178) target = $region36
      $region35: #{disc_block.3} parent=31 // pred_region
        %p181 = scmp.lt.s32.totalorder %s11, 1
        %s182 = scalar_select %p181, %s11, 1
        %s183 = smul.addr %s182, 32
        %s184 = smul.addr %s183, 4
        %s185 = scalar_lea.vmem %s0, %s184
      $region36: #{disc_block.3} parent=31 // pred_fallthru
        _
    $region32: #{disc_block.3} parent=5 // pred_fallthru
      _
    %p186 = scmp.le.s32.totalorder 1, %s11
    %p187 = scmp.lt.s32.totalorder %s11, 3
    %p188 = pnand %p186, %p187
    %p189 = pneg %p188
    // Predicated region
    $region37: #{disc_block.3} parent=5 // pred_check
      _
    $region38: #{disc_block.3} parent=5 // pred_check_branch
      %191 = sbr.rel (%p188) target = $region40
    $region39: #{disc_block.3} parent=5 // pred_region
      %s192 = ssub.s32 %s11, 1
      %p193 = scmp.lt.s32.totalorder %s16, 1
      %s194 = scalar_select %p193, %s16, 1
      %s195 = smul.addr %s194, 32
      %s196 = smul.addr %s195, 4
      %s197 = scalar_lea.vmem %s0, %s196
      %p198 = pneg %p37
      %p199 = pneg %p34
      %p200 = pneg %p58
      %p201 = pneg %p55
      %p202 = pneg %p79
      %p203 = pneg %p76
      %p204 = pneg %p100
      %p205 = pneg %p97
      %p206 = pneg %p121
      %p207 = pneg %p118
      %p208 = pneg %p147
      %p209 = pneg %p144
      %p210 = scmp.lt.s32.totalorder %s16, 1
      %s211 = scalar_select %p210, %s16, 1
      %s212 = smul.addr %s211, 16
      %s213 = smul.addr %s212, 4
      %s214 = scalar_lea.vmem %s5, %s213
      %p215 = scmp.lt.s32.totalorder %s16, 1
      %s216 = scalar_select %p215, %s16, 1
      %s217 = smul.addr %s216, 32
      %s218 = smul.addr %s217, 4
      %s219 = scalar_lea.vmem %s0, %s218
      %p220 = scmp.lt.s32.totalorder %s16, 1
      %s221 = scalar_select %p220, %s16, 1
      %s222 = smul.addr %s221, 16
      %s223 = smul.addr %s222, 4
      %s224 = scalar_lea.vmem %s5, %s223
      %vm225 = vcmask 36864
      %226 = vst.msk [vmem:[#allocation2] sm:$0x1f] %vm225, 0.0
      %227 = vst.msk [vmem:[#allocation2 + $0x8] sm:$0x1f] %vm225, 0.0
      %228 = vst.msk [vmem:[#allocation2 + $0x10] sm:$0x1f] %vm225, 0.0
      %229 = vst.msk [vmem:[#allocation2 + $0x18] sm:$0x1f] %vm225, 0.0
      %230 = vst.msk [vmem:[#allocation2 + $0x20] sm:$0x1f] %vm225, 0.0
      %231 = vst.msk [vmem:[#allocation2 + $0x28] sm:$0x1f] %vm225, 0.0
      %232 = vst.msk [vmem:[#allocation2 + $0x30] sm:$0x1f] %vm225, 0.0
      %233 = vst.msk [vmem:[#allocation2 + $0x38] sm:$0x1f] %vm225, 0.0
      %234 = vst.msk [vmem:[#allocation2 + $0x40] sm:$0x1f] %vm225, 0.0
      %235 = vst.msk [vmem:[#allocation2 + $0x48] sm:$0x1f] %vm225, 0.0
      %236 = vst.msk [vmem:[#allocation2 + $0x50] sm:$0x1f] %vm225, 0.0
      %237 = vst.msk [vmem:[#allocation2 + $0x58] sm:$0x1f] %vm225, 0.0
      %238 = vst.msk [vmem:[#allocation2 + $0x60] sm:$0x1f] %vm225, 0.0
      %239 = vst.msk [vmem:[#allocation2 + $0x68] sm:$0x1f] %vm225, 0.0
      %240 = vst.msk [vmem:[#allocation2 + $0x70] sm:$0x1f] %vm225, 0.0
      %241 = vst.msk [vmem:[#allocation2 + $0x78] sm:$0x1f] %vm225, 0.0
      %242 = vst.msk [vmem:[#allocation2 + $0x80] sm:$0x1f] %vm225, 0.0
      %243 = vst.msk [vmem:[#allocation2 + $0x88] sm:$0x1f] %vm225, 0.0
      %244 = vst.msk [vmem:[#allocation2 + $0x90] sm:$0x1f] %vm225, 0.0
      %245 = vst.msk [vmem:[#allocation2 + $0x98] sm:$0x1f] %vm225, 0.0
      %246 = vst.msk [vmem:[#allocation2 + $0xa0] sm:$0x1f] %vm225, 0.0
      %247 = vst.msk [vmem:[#allocation2 + $0xa8] sm:$0x1f] %vm225, 0.0
      %248 = vst.msk [vmem:[#allocation2 + $0xb0] sm:$0x1f] %vm225, 0.0
      %249 = vst.msk [vmem:[#allocation2 + $0xb8] sm:$0x1f] %vm225, 0.0
      %250 = vst.msk [vmem:[#allocation2 + $0xc0] sm:$0x1f] %vm225, 0.0
      %251 = vst.msk [vmem:[#allocation2 + $0xc8] sm:$0x1f] %vm225, 0.0
      %252 = vst.msk [vmem:[#allocation2 + $0xd0] sm:$0x1f] %vm225, 0.0
      %253 = vst.msk [vmem:[#allocation2 + $0xd8] sm:$0x1f] %vm225, 0.0
      %254 = vst.msk [vmem:[#allocation2 + $0xe0] sm:$0x1f] %vm225, 0.0
      %255 = vst.msk [vmem:[#allocation2 + $0xe8] sm:$0x1f] %vm225, 0.0
      %256 = vst.msk [vmem:[#allocation2 + $0xf0] sm:$0x1f] %vm225, 0.0
      %257 = vst.msk [vmem:[#allocation2 + $0xf8] sm:$0x1f] %vm225, 0.0
      %v258 = vld [vmem:[%s219] sm:$0x7]
      %v259 = vld [vmem:[%s219 + $0x4] sm:$0x7]
      %v260 = vld [vmem:[%s219 + $0x8] sm:$0x7]
      %v261 = vld [vmem:[%s219 + $0xc] sm:$0x7]
      %v262 = vld [vmem:[%s219 + $0x10] sm:$0x7]
      %v263 = vld [vmem:[%s219 + $0x14] sm:$0x7]
      %v264 = vld [vmem:[%s219 + $0x18] sm:$0x7]
      %v265 = vld [vmem:[%s219 + $0x1c] sm:$0x7]
      %v266 = vld [vmem:[%s219 + $0x20] sm:$0x7]
      %v267 = vld [vmem:[%s219 + $0x24] sm:$0x7]
      %v268 = vld [vmem:[%s219 + $0x28] sm:$0x7]
      %v269 = vld [vmem:[%s219 + $0x2c] sm:$0x7]
      %v270 = vld [vmem:[%s219 + $0x30] sm:$0x7]
      %v271 = vld [vmem:[%s219 + $0x34] sm:$0x7]
      %v272 = vld [vmem:[%s219 + $0x38] sm:$0x7]
      %v273 = vld [vmem:[%s219 + $0x3c] sm:$0x7]
      %v274 = vld [vmem:[%s219 + $0x40] sm:$0x7]
      %v275 = vld [vmem:[%s219 + $0x44] sm:$0x7]
      %v276 = vld [vmem:[%s219 + $0x48] sm:$0x7]
      %v277 = vld [vmem:[%s219 + $0x4c] sm:$0x7]
      %v278 = vld [vmem:[%s219 + $0x50] sm:$0x7]
      %v279 = vld [vmem:[%s219 + $0x54] sm:$0x7]
      %v280 = vld [vmem:[%s219 + $0x58] sm:$0x7]
      %v281 = vld [vmem:[%s219 + $0x5c] sm:$0x7]
      %v282 = vld [vmem:[%s219 + $0x60] sm:$0x7]
      %v283 = vld [vmem:[%s219 + $0x64] sm:$0x7]
      %v284 = vld [vmem:[%s219 + $0x68] sm:$0x7]
      %v285 = vld [vmem:[%s219 + $0x6c] sm:$0x7]
      %v286 = vld [vmem:[%s219 + $0x70] sm:$0x7]
      %v287 = vld [vmem:[%s219 + $0x74] sm:$0x7]
      %v288 = vld [vmem:[%s219 + $0x78] sm:$0x7]
      %v289 = vld [vmem:[%s219 + $0x7c] sm:$0x7]
      %v290 = vunpack.c.l.bf16 %v258
      %v291 = vunpack.c.l.bf16 %v259
      %v292 = vunpack.c.l.bf16 %v260
      %v293 = vunpack.c.l.bf16 %v261
      %v294 = vunpack.c.l.bf16 %v262
      %v295 = vunpack.c.l.bf16 %v263
      %v296 = vunpack.c.l.bf16 %v264
      %v297 = vunpack.c.l.bf16 %v265
      %v298 = vunpack.c.l.bf16 %v266
      %v299 = vunpack.c.l.bf16 %v267
      %v300 = vunpack.c.l.bf16 %v268
      %v301 = vunpack.c.l.bf16 %v269
      %v302 = vunpack.c.l.bf16 %v270
      %v303 = vunpack.c.l.bf16 %v271
      %v304 = vunpack.c.l.bf16 %v272
      %v305 = vunpack.c.l.bf16 %v273
      %v306 = vunpack.c.l.bf16 %v274
      %v307 = vunpack.c.l.bf16 %v275
      %v308 = vunpack.c.l.bf16 %v276
      %v309 = vunpack.c.l.bf16 %v277
      %v310 = vunpack.c.l.bf16 %v278
      %v311 = vunpack.c.l.bf16 %v279
      %v312 = vunpack.c.l.bf16 %v280
      %v313 = vunpack.c.l.bf16 %v281
      %v314 = vunpack.c.l.bf16 %v282
      %v315 = vunpack.c.l.bf16 %v283
      %v316 = vunpack.c.l.bf16 %v284
      %v317 = vunpack.c.l.bf16 %v285
      %v318 = vunpack.c.l.bf16 %v286
      %v319 = vunpack.c.l.bf16 %v287
      %v320 = vunpack.c.l.bf16 %v288
      %v321 = vunpack.c.l.bf16 %v289
      %v322 = vld [vmem:[%s1] sm:$0xff]
      %v323 = vrot.slane %v292, 4
      %vm324 = vcmask 1047556
      %v325 = vsel %vm324, %v323, %v290
      %v327 = vunpack.c.l.s4 1983009808
      %v328 = vunpack.c.0.s8 %v327
      %v329 = vperm.slane %v325, %v328
      %v330 = vrot.slane %v293, 4
      %v331 = vsel %vm324, %v330, %v291
      %v333 = vunpack.c.l.s4 1983009808
      %v334 = vunpack.c.0.s8 %v333
      %v335 = vperm.slane %v331, %v334
      %v336 = vrot.slane %v296, 4
      %v337 = vsel %vm324, %v336, %v294
      %v339 = vunpack.c.l.s4 1983009808
      %v340 = vunpack.c.0.s8 %v339
      %v341 = vperm.slane %v337, %v340
      %v342 = vrot.slane %v297, 4
      %v343 = vsel %vm324, %v342, %v295
      %v345 = vunpack.c.l.s4 1983009808
      %v346 = vunpack.c.0.s8 %v345
      %v347 = vperm.slane %v343, %v346
      %v348 = vrot.slane %v335, 4
      %v349 = vsel %vm324, %v348, %v329
      %v350 = vrot.slane %v329, 4
      %v351 = vsel %vm324, %v335, %v350
      %v353 = vunpack.c.l.s4 1934713408
      %v354 = vunpack.c.0.s8 %v353
      %v355 = vperm.slane %v349, %v354
      %v357 = vunpack.c.l.s4 1934713408
      %v358 = vunpack.c.0.s8 %v357
      %v359 = vperm.slane %v351, %v358
      %v360 = vrot.slane %v347, 4
      %v361 = vsel %vm324, %v360, %v341
      %v362 = vrot.slane %v341, 4
      %v363 = vsel %vm324, %v347, %v362
      %v365 = vunpack.c.l.s4 1934713408
      %v366 = vunpack.c.0.s8 %v365
      %v367 = vperm.slane %v361, %v366
      %v369 = vunpack.c.l.s4 1934713408
      %v370 = vunpack.c.0.s8 %v369
      %v371 = vperm.slane %v363, %v370
      %v372 = vrot.slane %v367, 4
      %v373 = vsel %vm324, %v372, %v355
      %v374 = vrot.slane %v355, 4
      %v375 = vsel %vm324, %v367, %v374
      %v376 = vrot.slane %v371, 4
      %v377 = vsel %vm324, %v376, %v359
      %v378 = vrot.slane %v359, 4
      %v379 = vsel %vm324, %v371, %v378
      %381 = vrot.lane.b32.xlu0 %v375, 4
      %v382 = vpop.permute.xlu0 %381
      %385 = vrot.lane.b32.xlu0 %v377, 8
      %v386 = vpop.permute.xlu0 %385
      %389 = vrot.lane.b32.xlu0 %v379, 12
      %v390 = vpop.permute.xlu0 %389
      %vm392 = vcmask 31744
      %v393 = vsel %vm392, %v373, %v382
      %vm394 = vcmask 64512
      %v395 = vsel %vm394, %v393, %v386
      %vm396 = vcmask 97280
      %v397 = vsel %vm396, %v395, %v390
      %s398 = scalar_lea.vmem %s1, 8
      %v399 = vld [vmem:[%s398] sm:$0xff]
      %v400 = vrot.slane %v300, 4
      %v401 = vsel %vm324, %v400, %v298
      %v403 = vunpack.c.l.s4 1983009808
      %v404 = vunpack.c.0.s8 %v403
      %v405 = vperm.slane %v401, %v404
      %v406 = vrot.slane %v301, 4
      %v407 = vsel %vm324, %v406, %v299
      %v409 = vunpack.c.l.s4 1983009808
      %v410 = vunpack.c.0.s8 %v409
      %v411 = vperm.slane %v407, %v410
      %v412 = vrot.slane %v304, 4
      %v413 = vsel %vm324, %v412, %v302
      %v415 = vunpack.c.l.s4 1983009808
      %v416 = vunpack.c.0.s8 %v415
      %v417 = vperm.slane %v413, %v416
      %v418 = vrot.slane %v305, 4
      %v419 = vsel %vm324, %v418, %v303
      %v421 = vunpack.c.l.s4 1983009808
      %v422 = vunpack.c.0.s8 %v421
      %v423 = vperm.slane %v419, %v422
      %v424 = vrot.slane %v411, 4
      %v425 = vsel %vm324, %v424, %v405
      %v426 = vrot.slane %v405, 4
      %v427 = vsel %vm324, %v411, %v426
      %v429 = vunpack.c.l.s4 1934713408
      %v430 = vunpack.c.0.s8 %v429
      %v431 = vperm.slane %v425, %v430
      %v433 = vunpack.c.l.s4 1934713408
      %v434 = vunpack.c.0.s8 %v433
      %v435 = vperm.slane %v427, %v434
      %v436 = vrot.slane %v423, 4
      %v437 = vsel %vm324, %v436, %v417
      %v438 = vrot.slane %v417, 4
      %v439 = vsel %vm324, %v423, %v438
      %v441 = vunpack.c.l.s4 1934713408
      %v442 = vunpack.c.0.s8 %v441
      %v443 = vperm.slane %v437, %v442
      %v445 = vunpack.c.l.s4 1934713408
      %v446 = vunpack.c.0.s8 %v445
      %v447 = vperm.slane %v439, %v446
      %v448 = vrot.slane %v443, 4
      %v449 = vsel %vm324, %v448, %v431
      %v450 = vrot.slane %v431, 4
      %v451 = vsel %vm324, %v443, %v450
      %v452 = vrot.slane %v447, 4
      %v453 = vsel %vm324, %v452, %v435
      %v454 = vrot.slane %v435, 4
      %v455 = vsel %vm324, %v447, %v454
      %457 = vrot.lane.b32.xlu0 %v451, 4
      %v458 = vpop.permute.xlu0 %457
      %461 = vrot.lane.b32.xlu0 %v453, 8
      %v462 = vpop.permute.xlu0 %461
      %465 = vrot.lane.b32.xlu0 %v455, 12
      %v466 = vpop.permute.xlu0 %465
      %v468 = vsel %vm392, %v449, %v458
      %v469 = vsel %vm394, %v468, %v462
      %v470 = vsel %vm396, %v469, %v466
      %v472 = vsel %vm394, %v399, 0
      %474 = vmatpush.msra.mxu0 0.0
      %475 = vmatpush.msra.mxu0 0.0
      %476 = vmatpush.msra.mxu0 0.0
      %477 = vmatpush.msra.mxu0 0.0
      %478 = vmatpush.msra.mxu0 0.0
      %479 = vmatpush.msra.mxu0 0.0
      %480 = vmatpush.msra.mxu0 0.0
      %481 = vmatpush.msra.mxu0 0.0
      %482 = vmatpush.msra.mxu0 0.0
      %483 = vmatpush.msra.mxu0 0.0
      %484 = vmatpush.msra.mxu0 0.0
      %485 = vmatpush.msra.mxu0 0.0
      %486 = vmatpush.msra.mxu0 0.0
      %487 = vmatpush.msra.mxu0 0.0
      %488 = vmatpush.msra.mxu0 0.0
      %489 = vmatpush.msra.mxu0 %v470
      %490 = vmatmul.f32.gmra.mxu0 %v472
      %v491 = vpop.f32.mrf.mxu0
      %v492 = vadd.f32 0.0, %v491
      %493 = vdwg.mxu0
      %v495 = vsel %vm394, %v322, 0
      %497 = vmatpush.msra.mxu0 0.0
      %498 = vmatpush.msra.mxu0 0.0
      %499 = vmatpush.msra.mxu0 0.0
      %500 = vmatpush.msra.mxu0 0.0
      %501 = vmatpush.msra.mxu0 0.0
      %502 = vmatpush.msra.mxu0 0.0
      %503 = vmatpush.msra.mxu0 0.0
      %504 = vmatpush.msra.mxu0 0.0
      %505 = vmatpush.msra.mxu0 0.0
      %506 = vmatpush.msra.mxu0 0.0
      %507 = vmatpush.msra.mxu0 0.0
      %508 = vmatpush.msra.mxu0 0.0
      %509 = vmatpush.msra.mxu0 0.0
      %510 = vmatpush.msra.mxu0 0.0
      %511 = vmatpush.msra.mxu0 0.0
      %512 = vmatpush.msra.mxu0 %v397
      %513 = vmatmul.f32.gmra.mxu0 %v495
      %v514 = vpop.f32.mrf.mxu0
      %v515 = vadd.f32 %v492, %v514
      %516 = vdwg.mxu0
      %s517 = scalar_lea.vmem %s1, 16
      %v518 = vld [vmem:[%s517] sm:$0xff]
      %527 = vrot.lane.b32.xlu0 %v290, 127
      %v528 = vpop.permute.xlu0 %527
      %529 = vrot.lane.b32.xlu0 %v291, 127
      %v530 = vpop.permute.xlu0 %529
      %531 = vrot.lane.b32.xlu0 %v292, 127
      %v532 = vpop.permute.xlu0 %531
      %533 = vrot.lane.b32.xlu0 %v293, 127
      %v534 = vpop.permute.xlu0 %533
      %535 = vrot.lane.b32.xlu0 %v294, 127
      %v536 = vpop.permute.xlu0 %535
      %537 = vrot.lane.b32.xlu0 %v295, 127
      %v538 = vpop.permute.xlu0 %537
      %539 = vrot.lane.b32.xlu0 %v296, 127
      %v540 = vpop.permute.xlu0 %539
      %541 = vrot.lane.b32.xlu0 %v297, 127
      %v542 = vpop.permute.xlu0 %541
      %v551 = vrot.slane %v532, 4
      %v552 = vsel %vm324, %v551, %v528
      %v554 = vunpack.c.l.s4 1983009808
      %v555 = vunpack.c.0.s8 %v554
      %v556 = vperm.slane %v552, %v555
      %v557 = vrot.slane %v534, 4
      %v558 = vsel %vm324, %v557, %v530
      %v560 = vunpack.c.l.s4 1983009808
      %v561 = vunpack.c.0.s8 %v560
      %v562 = vperm.slane %v558, %v561
      %v563 = vrot.slane %v540, 4
      %v564 = vsel %vm324, %v563, %v536
      %v566 = vunpack.c.l.s4 1983009808
      %v567 = vunpack.c.0.s8 %v566
      %v568 = vperm.slane %v564, %v567
      %v569 = vrot.slane %v542, 4
      %v570 = vsel %vm324, %v569, %v538
      %v572 = vunpack.c.l.s4 1983009808
      %v573 = vunpack.c.0.s8 %v572
      %v574 = vperm.slane %v570, %v573
      %v575 = vrot.slane %v562, 4
      %v576 = vsel %vm324, %v575, %v556
      %v577 = vrot.slane %v556, 4
      %v578 = vsel %vm324, %v562, %v577
      %v580 = vunpack.c.l.s4 1934713408
      %v581 = vunpack.c.0.s8 %v580
      %v582 = vperm.slane %v576, %v581
      %v584 = vunpack.c.l.s4 1934713408
      %v585 = vunpack.c.0.s8 %v584
      %v586 = vperm.slane %v578, %v585
      %v587 = vrot.slane %v574, 4
      %v588 = vsel %vm324, %v587, %v568
      %v589 = vrot.slane %v568, 4
      %v590 = vsel %vm324, %v574, %v589
      %v592 = vunpack.c.l.s4 1934713408
      %v593 = vunpack.c.0.s8 %v592
      %v594 = vperm.slane %v588, %v593
      %v596 = vunpack.c.l.s4 1934713408
      %v597 = vunpack.c.0.s8 %v596
      %v598 = vperm.slane %v590, %v597
      %v599 = vrot.slane %v594, 4
      %v600 = vsel %vm324, %v599, %v582
      %v601 = vrot.slane %v582, 4
      %v602 = vsel %vm324, %v594, %v601
      %v603 = vrot.slane %v598, 4
      %v604 = vsel %vm324, %v603, %v586
      %v605 = vrot.slane %v586, 4
      %v606 = vsel %vm324, %v598, %v605
      %608 = vrot.lane.b32.xlu0 %v602, 4
      %v609 = vpop.permute.xlu0 %608
      %612 = vrot.lane.b32.xlu0 %v604, 8
      %v613 = vpop.permute.xlu0 %612
      %616 = vrot.lane.b32.xlu0 %v606, 12
      %v617 = vpop.permute.xlu0 %616
      %v619 = vsel %vm392, %v600, %v609
      %v620 = vsel %vm394, %v619, %v613
      %v621 = vsel %vm396, %v620, %v617
      %v623 = vsel %vm394, %v518, 0
      %625 = vmatpush.msra.mxu0 0.0
      %626 = vmatpush.msra.mxu0 0.0
      %627 = vmatpush.msra.mxu0 0.0
      %628 = vmatpush.msra.mxu0 0.0
      %629 = vmatpush.msra.mxu0 0.0
      %630 = vmatpush.msra.mxu0 0.0
      %631 = vmatpush.msra.mxu0 0.0
      %632 = vmatpush.msra.mxu0 0.0
      %633 = vmatpush.msra.mxu0 0.0
      %634 = vmatpush.msra.mxu0 0.0
      %635 = vmatpush.msra.mxu0 0.0
      %636 = vmatpush.msra.mxu0 0.0
      %637 = vmatpush.msra.mxu0 0.0
      %638 = vmatpush.msra.mxu0 0.0
      %639 = vmatpush.msra.mxu0 0.0
      %640 = vmatpush.msra.mxu0 %v621
      %641 = vmatmul.f32.gmra.mxu0 %v623
      %v642 = vpop.f32.mrf.mxu0
      %v643 = vadd.f32 0.0, %v642
      %644 = vdwg.mxu0
      %v645 = vadd.f32 %v515, %v643
      %s646 = scalar_lea.vmem %s1, 24
      %v647 = vld [vmem:[%s646] sm:$0xff]
      %v648 = vrot.slane %v308, 4
      %v649 = vsel %vm324, %v648, %v306
      %v651 = vunpack.c.l.s4 1983009808
      %v652 = vunpack.c.0.s8 %v651
      %v653 = vperm.slane %v649, %v652
      %v654 = vrot.slane %v309, 4
      %v655 = vsel %vm324, %v654, %v307
      %v657 = vunpack.c.l.s4 1983009808
      %v658 = vunpack.c.0.s8 %v657
      %v659 = vperm.slane %v655, %v658
      %v660 = vrot.slane %v312, 4
      %v661 = vsel %vm324, %v660, %v310
      %v663 = vunpack.c.l.s4 1983009808
      %v664 = vunpack.c.0.s8 %v663
      %v665 = vperm.slane %v661, %v664
      %v666 = vrot.slane %v313, 4
      %v667 = vsel %vm324, %v666, %v311
      %v669 = vunpack.c.l.s4 1983009808
      %v670 = vunpack.c.0.s8 %v669
      %v671 = vperm.slane %v667, %v670
      %v672 = vrot.slane %v659, 4
      %v673 = vsel %vm324, %v672, %v653
      %v674 = vrot.slane %v653, 4
      %v675 = vsel %vm324, %v659, %v674
      %v677 = vunpack.c.l.s4 1934713408
      %v678 = vunpack.c.0.s8 %v677
      %v679 = vperm.slane %v673, %v678
      %v681 = vunpack.c.l.s4 1934713408
      %v682 = vunpack.c.0.s8 %v681
      %v683 = vperm.slane %v675, %v682
      %v684 = vrot.slane %v671, 4
      %v685 = vsel %vm324, %v684, %v665
      %v686 = vrot.slane %v665, 4
      %v687 = vsel %vm324, %v671, %v686
      %v689 = vunpack.c.l.s4 1934713408
      %v690 = vunpack.c.0.s8 %v689
      %v691 = vperm.slane %v685, %v690
      %v693 = vunpack.c.l.s4 1934713408
      %v694 = vunpack.c.0.s8 %v693
      %v695 = vperm.slane %v687, %v694
      %v696 = vrot.slane %v691, 4
      %v697 = vsel %vm324, %v696, %v679
      %v698 = vrot.slane %v679, 4
      %v699 = vsel %vm324, %v691, %v698
      %v700 = vrot.slane %v695, 4
      %v701 = vsel %vm324, %v700, %v683
      %v702 = vrot.slane %v683, 4
      %v703 = vsel %vm324, %v695, %v702
      %705 = vrot.lane.b32.xlu0 %v699, 4
      %v706 = vpop.permute.xlu0 %705
      %709 = vrot.lane.b32.xlu0 %v701, 8
      %v710 = vpop.permute.xlu0 %709
      %713 = vrot.lane.b32.xlu0 %v703, 12
      %v714 = vpop.permute.xlu0 %713
      %v716 = vsel %vm392, %v697, %v706
      %v717 = vsel %vm394, %v716, %v710
      %v718 = vsel %vm396, %v717, %v714
      %v720 = vsel %vm394, %v647, 0
      %722 = vmatpush.msra.mxu0 0.0
      %723 = vmatpush.msra.mxu0 0.0
      %724 = vmatpush.msra.mxu0 0.0
      %725 = vmatpush.msra.mxu0 0.0
      %726 = vmatpush.msra.mxu0 0.0
      %727 = vmatpush.msra.mxu0 0.0
      %728 = vmatpush.msra.mxu0 0.0
      %729 = vmatpush.msra.mxu0 0.0
      %730 = vmatpush.msra.mxu0 0.0
      %731 = vmatpush.msra.mxu0 0.0
      %732 = vmatpush.msra.mxu0 0.0
      %733 = vmatpush.msra.mxu0 0.0
      %734 = vmatpush.msra.mxu0 0.0
      %735 = vmatpush.msra.mxu0 0.0
      %736 = vmatpush.msra.mxu0 0.0
      %737 = vmatpush.msra.mxu0 %v718
      %738 = vmatmul.f32.gmra.mxu0 %v720
      %v739 = vpop.f32.mrf.mxu0
      %v740 = vadd.f32 0.0, %v739
      %741 = vdwg.mxu0
      %v742 = vadd.f32 %v645, %v740
      %s743 = scalar_lea.vmem %s1, 32
      %v744 = vld [vmem:[%s743] sm:$0xff]
      %v745 = vrot.slane %v316, 4
      %v746 = vsel %vm324, %v745, %v314
      %v748 = vunpack.c.l.s4 1983009808
      %v749 = vunpack.c.0.s8 %v748
      %v750 = vperm.slane %v746, %v749
      %v751 = vrot.slane %v317, 4
      %v752 = vsel %vm324, %v751, %v315
      %v754 = vunpack.c.l.s4 1983009808
      %v755 = vunpack.c.0.s8 %v754
      %v756 = vperm.slane %v752, %v755
      %v757 = vrot.slane %v320, 4
      %v758 = vsel %vm324, %v757, %v318
      %v760 = vunpack.c.l.s4 1983009808
      %v761 = vunpack.c.0.s8 %v760
      %v762 = vperm.slane %v758, %v761
      %v763 = vrot.slane %v321, 4
      %v764 = vsel %vm324, %v763, %v319
      %v766 = vunpack.c.l.s4 1983009808
      %v767 = vunpack.c.0.s8 %v766
      %v768 = vperm.slane %v764, %v767
      %v769 = vrot.slane %v756, 4
      %v770 = vsel %vm324, %v769, %v750
      %v771 = vrot.slane %v750, 4
      %v772 = vsel %vm324, %v756, %v771
      %v774 = vunpack.c.l.s4 1934713408
      %v775 = vunpack.c.0.s8 %v774
      %v776 = vperm.slane %v770, %v775
      %v778 = vunpack.c.l.s4 1934713408
      %v779 = vunpack.c.0.s8 %v778
      %v780 = vperm.slane %v772, %v779
      %v781 = vrot.slane %v768, 4
      %v782 = vsel %vm324, %v781, %v762
      %v783 = vrot.slane %v762, 4
      %v784 = vsel %vm324, %v768, %v783
      %v786 = vunpack.c.l.s4 1934713408
      %v787 = vunpack.c.0.s8 %v786
      %v788 = vperm.slane %v782, %v787
      %v790 = vunpack.c.l.s4 1934713408
      %v791 = vunpack.c.0.s8 %v790
      %v792 = vperm.slane %v784, %v791
      %v793 = vrot.slane %v788, 4
      %v794 = vsel %vm324, %v793, %v776
      %v795 = vrot.slane %v776, 4
      %v796 = vsel %vm324, %v788, %v795
      %v797 = vrot.slane %v792, 4
      %v798 = vsel %vm324, %v797, %v780
      %v799 = vrot.slane %v780, 4
      %v800 = vsel %vm324, %v792, %v799
      %802 = vrot.lane.b32.xlu0 %v796, 4
      %v803 = vpop.permute.xlu0 %802
      %806 = vrot.lane.b32.xlu0 %v798, 8
      %v807 = vpop.permute.xlu0 %806
      %810 = vrot.lane.b32.xlu0 %v800, 12
      %v811 = vpop.permute.xlu0 %810
      %v813 = vsel %vm392, %v794, %v803
      %v814 = vsel %vm394, %v813, %v807
      %v815 = vsel %vm396, %v814, %v811
      %v817 = vsel %vm394, %v744, 0
      %819 = vmatpush.msra.mxu0 0.0
      %820 = vmatpush.msra.mxu0 0.0
      %821 = vmatpush.msra.mxu0 0.0
      %822 = vmatpush.msra.mxu0 0.0
      %823 = vmatpush.msra.mxu0 0.0
      %824 = vmatpush.msra.mxu0 0.0
      %825 = vmatpush.msra.mxu0 0.0
      %826 = vmatpush.msra.mxu0 0.0
      %827 = vmatpush.msra.mxu0 0.0
      %828 = vmatpush.msra.mxu0 0.0
      %829 = vmatpush.msra.mxu0 0.0
      %830 = vmatpush.msra.mxu0 0.0
      %831 = vmatpush.msra.mxu0 0.0
      %832 = vmatpush.msra.mxu0 0.0
      %833 = vmatpush.msra.mxu0 0.0
      %834 = vmatpush.msra.mxu0 %v815
      %835 = vmatmul.f32.gmra.mxu0 %v817
      %v836 = vpop.f32.mrf.mxu0
      %v837 = vadd.f32 0.0, %v836
      %838 = vdwg.mxu0
      %v839 = vadd.f32 %v742, %v837
      %s840 = scalar_lea.vmem %s1, 40
      %v841 = vld [vmem:[%s840] sm:$0xff]
      %850 = vrot.lane.b32.xlu0 %v306, 127
      %v851 = vpop.permute.xlu0 %850
      %852 = vrot.lane.b32.xlu0 %v307, 127
      %v853 = vpop.permute.xlu0 %852
      %854 = vrot.lane.b32.xlu0 %v308, 127
      %v855 = vpop.permute.xlu0 %854
      %856 = vrot.lane.b32.xlu0 %v309, 127
      %v857 = vpop.permute.xlu0 %856
      %858 = vrot.lane.b32.xlu0 %v310, 127
      %v859 = vpop.permute.xlu0 %858
      %860 = vrot.lane.b32.xlu0 %v311, 127
      %v861 = vpop.permute.xlu0 %860
      %862 = vrot.lane.b32.xlu0 %v312, 127
      %v863 = vpop.permute.xlu0 %862
      %864 = vrot.lane.b32.xlu0 %v313, 127
      %v865 = vpop.permute.xlu0 %864
      %v874 = vrot.slane %v855, 4
      %v875 = vsel %vm324, %v874, %v851
      %v877 = vunpack.c.l.s4 1983009808
      %v878 = vunpack.c.0.s8 %v877
      %v879 = vperm.slane %v875, %v878
      %v880 = vrot.slane %v857, 4
      %v881 = vsel %vm324, %v880, %v853
      %v883 = vunpack.c.l.s4 1983009808
      %v884 = vunpack.c.0.s8 %v883
      %v885 = vperm.slane %v881, %v884
      %v886 = vrot.slane %v863, 4
      %v887 = vsel %vm324, %v886, %v859
      %v889 = vunpack.c.l.s4 1983009808
      %v890 = vunpack.c.0.s8 %v889
      %v891 = vperm.slane %v887, %v890
      %v892 = vrot.slane %v865, 4
      %v893 = vsel %vm324, %v892, %v861
      %v895 = vunpack.c.l.s4 1983009808
      %v896 = vunpack.c.0.s8 %v895
      %v897 = vperm.slane %v893, %v896
      %v898 = vrot.slane %v885, 4
      %v899 = vsel %vm324, %v898, %v879
      %v900 = vrot.slane %v879, 4
      %v901 = vsel %vm324, %v885, %v900
      %v903 = vunpack.c.l.s4 1934713408
      %v904 = vunpack.c.0.s8 %v903
      %v905 = vperm.slane %v899, %v904
      %v907 = vunpack.c.l.s4 1934713408
      %v908 = vunpack.c.0.s8 %v907
      %v909 = vperm.slane %v901, %v908
      %v910 = vrot.slane %v897, 4
      %v911 = vsel %vm324, %v910, %v891
      %v912 = vrot.slane %v891, 4
      %v913 = vsel %vm324, %v897, %v912
      %v915 = vunpack.c.l.s4 1934713408
      %v916 = vunpack.c.0.s8 %v915
      %v917 = vperm.slane %v911, %v916
      %v919 = vunpack.c.l.s4 1934713408
      %v920 = vunpack.c.0.s8 %v919
      %v921 = vperm.slane %v913, %v920
      %v922 = vrot.slane %v917, 4
      %v923 = vsel %vm324, %v922, %v905
      %v924 = vrot.slane %v905, 4
      %v925 = vsel %vm324, %v917, %v924
      %v926 = vrot.slane %v921, 4
      %v927 = vsel %vm324, %v926, %v909
      %v928 = vrot.slane %v909, 4
      %v929 = vsel %vm324, %v921, %v928
      %931 = vrot.lane.b32.xlu0 %v925, 4
      %v932 = vpop.permute.xlu0 %931
      %935 = vrot.lane.b32.xlu0 %v927, 8
      %v936 = vpop.permute.xlu0 %935
      %939 = vrot.lane.b32.xlu0 %v929, 12
      %v940 = vpop.permute.xlu0 %939
      %v942 = vsel %vm392, %v923, %v932
      %v943 = vsel %vm394, %v942, %v936
      %v944 = vsel %vm396, %v943, %v940
      %v946 = vsel %vm394, %v841, 0
      %948 = vmatpush.msra.mxu0 0.0
      %949 = vmatpush.msra.mxu0 0.0
      %950 = vmatpush.msra.mxu0 0.0
      %951 = vmatpush.msra.mxu0 0.0
      %952 = vmatpush.msra.mxu0 0.0
      %953 = vmatpush.msra.mxu0 0.0
      %954 = vmatpush.msra.mxu0 0.0
      %955 = vmatpush.msra.mxu0 0.0
      %956 = vmatpush.msra.mxu0 0.0
      %957 = vmatpush.msra.mxu0 0.0
      %958 = vmatpush.msra.mxu0 0.0
      %959 = vmatpush.msra.mxu0 0.0
      %960 = vmatpush.msra.mxu0 0.0
      %961 = vmatpush.msra.mxu0 0.0
      %962 = vmatpush.msra.mxu0 0.0
      %963 = vmatpush.msra.mxu0 %v944
      %964 = vmatmul.f32.gmra.mxu0 %v946
      %v965 = vpop.f32.mrf.mxu0
      %v966 = vadd.f32 0.0, %v965
      %967 = vdwg.mxu0
      %v968 = vadd.f32 %v839, %v966
      %s969 = scalar_lea.vmem %s1, 48
      %v970 = vld [vmem:[%s969] sm:$0xff]
      %v971 = vrot.slane %v290, 1
      %v972 = vrot.slane %v291, 1
      %v973 = vrot.slane %v292, 1
      %v974 = vrot.slane %v293, 1
      %v975 = vrot.slane %v294, 1
      %v976 = vrot.slane %v295, 1
      %v977 = vrot.slane %v296, 1
      %v978 = vrot.slane %v297, 1
      %v987 = vrot.slane %v973, 4
      %v988 = vsel %vm324, %v987, %v971
      %v990 = vunpack.c.l.s4 1983009808
      %v991 = vunpack.c.0.s8 %v990
      %v992 = vperm.slane %v988, %v991
      %v993 = vrot.slane %v974, 4
      %v994 = vsel %vm324, %v993, %v972
      %v996 = vunpack.c.l.s4 1983009808
      %v997 = vunpack.c.0.s8 %v996
      %v998 = vperm.slane %v994, %v997
      %v999 = vrot.slane %v977, 4
      %v1000 = vsel %vm324, %v999, %v975
      %v1002 = vunpack.c.l.s4 1983009808
      %v1003 = vunpack.c.0.s8 %v1002
      %v1004 = vperm.slane %v1000, %v1003
      %v1005 = vrot.slane %v978, 4
      %v1006 = vsel %vm324, %v1005, %v976
      %v1008 = vunpack.c.l.s4 1983009808
      %v1009 = vunpack.c.0.s8 %v1008
      %v1010 = vperm.slane %v1006, %v1009
      %v1011 = vrot.slane %v998, 4
      %v1012 = vsel %vm324, %v1011, %v992
      %v1013 = vrot.slane %v992, 4
      %v1014 = vsel %vm324, %v998, %v1013
      %v1016 = vunpack.c.l.s4 1934713408
      %v1017 = vunpack.c.0.s8 %v1016
      %v1018 = vperm.slane %v1012, %v1017
      %v1020 = vunpack.c.l.s4 1934713408
      %v1021 = vunpack.c.0.s8 %v1020
      %v1022 = vperm.slane %v1014, %v1021
      %v1023 = vrot.slane %v1010, 4
      %v1024 = vsel %vm324, %v1023, %v1004
      %v1025 = vrot.slane %v1004, 4
      %v1026 = vsel %vm324, %v1010, %v1025
      %v1028 = vunpack.c.l.s4 1934713408
      %v1029 = vunpack.c.0.s8 %v1028
      %v1030 = vperm.slane %v1024, %v1029
      %v1032 = vunpack.c.l.s4 1934713408
      %v1033 = vunpack.c.0.s8 %v1032
      %v1034 = vperm.slane %v1026, %v1033
      %v1035 = vrot.slane %v1030, 4
      %v1036 = vsel %vm324, %v1035, %v1018
      %v1037 = vrot.slane %v1018, 4
      %v1038 = vsel %vm324, %v1030, %v1037
      %v1039 = vrot.slane %v1034, 4
      %v1040 = vsel %vm324, %v1039, %v1022
      %v1041 = vrot.slane %v1022, 4
      %v1042 = vsel %vm324, %v1034, %v1041
      %1044 = vrot.lane.b32.xlu0 %v1038, 4
      %v1045 = vpop.permute.xlu0 %1044
      %1048 = vrot.lane.b32.xlu0 %v1040, 8
      %v1049 = vpop.permute.xlu0 %1048
      %1052 = vrot.lane.b32.xlu0 %v1042, 12
      %v1053 = vpop.permute.xlu0 %1052
      %v1055 = vsel %vm392, %v1036, %v1045
      %v1056 = vsel %vm394, %v1055, %v1049
      %v1057 = vsel %vm396, %v1056, %v1053
      %v1059 = vsel %vm394, %v970, 0
      %1061 = vmatpush.msra.mxu0 0.0
      %1062 = vmatpush.msra.mxu0 0.0
      %1063 = vmatpush.msra.mxu0 0.0
      %1064 = vmatpush.msra.mxu0 0.0
      %1065 = vmatpush.msra.mxu0 0.0
      %1066 = vmatpush.msra.mxu0 0.0
      %1067 = vmatpush.msra.mxu0 0.0
      %1068 = vmatpush.msra.mxu0 0.0
      %1069 = vmatpush.msra.mxu0 0.0
      %1070 = vmatpush.msra.mxu0 0.0
      %1071 = vmatpush.msra.mxu0 0.0
      %1072 = vmatpush.msra.mxu0 0.0
      %1073 = vmatpush.msra.mxu0 0.0
      %1074 = vmatpush.msra.mxu0 0.0
      %1075 = vmatpush.msra.mxu0 0.0
      %1076 = vmatpush.msra.mxu0 %v1057
      %1077 = vmatmul.f32.gmra.mxu0 %v1059
      %v1078 = vpop.f32.mrf.mxu0
      %v1079 = vadd.f32 0.0, %v1078
      %1080 = vdwg.mxu0
      %v1081 = vadd.f32 %v968, %v1079
      %s1082 = scalar_lea.vmem %s1, 56
      %v1083 = vld [vmem:[%s1082] sm:$0xff]
      %v1092 = vrot.slane %v298, 1
      %v1093 = vrot.slane %v299, 1
      %v1094 = vrot.slane %v300, 1
      %v1095 = vrot.slane %v301, 1
      %v1096 = vrot.slane %v302, 1
      %v1097 = vrot.slane %v303, 1
      %v1098 = vrot.slane %v304, 1
      %v1099 = vrot.slane %v305, 1
      %v1108 = vrot.slane %v1094, 4
      %v1109 = vsel %vm324, %v1108, %v1092
      %v1111 = vunpack.c.l.s4 1983009808
      %v1112 = vunpack.c.0.s8 %v1111
      %v1113 = vperm.slane %v1109, %v1112
      %v1114 = vrot.slane %v1095, 4
      %v1115 = vsel %vm324, %v1114, %v1093
      %v1117 = vunpack.c.l.s4 1983009808
      %v1118 = vunpack.c.0.s8 %v1117
      %v1119 = vperm.slane %v1115, %v1118
      %v1120 = vrot.slane %v1098, 4
      %v1121 = vsel %vm324, %v1120, %v1096
      %v1123 = vunpack.c.l.s4 1983009808
      %v1124 = vunpack.c.0.s8 %v1123
      %v1125 = vperm.slane %v1121, %v1124
      %v1126 = vrot.slane %v1099, 4
      %v1127 = vsel %vm324, %v1126, %v1097
      %v1129 = vunpack.c.l.s4 1983009808
      %v1130 = vunpack.c.0.s8 %v1129
      %v1131 = vperm.slane %v1127, %v1130
      %v1132 = vrot.slane %v1119, 4
      %v1133 = vsel %vm324, %v1132, %v1113
      %v1134 = vrot.slane %v1113, 4
      %v1135 = vsel %vm324, %v1119, %v1134
      %v1137 = vunpack.c.l.s4 1934713408
      %v1138 = vunpack.c.0.s8 %v1137
      %v1139 = vperm.slane %v1133, %v1138
      %v1141 = vunpack.c.l.s4 1934713408
      %v1142 = vunpack.c.0.s8 %v1141
      %v1143 = vperm.slane %v1135, %v1142
      %v1144 = vrot.slane %v1131, 4
      %v1145 = vsel %vm324, %v1144, %v1125
      %v1146 = vrot.slane %v1125, 4
      %v1147 = vsel %vm324, %v1131, %v1146
      %v1149 = vunpack.c.l.s4 1934713408
      %v1150 = vunpack.c.0.s8 %v1149
      %v1151 = vperm.slane %v1145, %v1150
      %v1153 = vunpack.c.l.s4 1934713408
      %v1154 = vunpack.c.0.s8 %v1153
      %v1155 = vperm.slane %v1147, %v1154
      %v1156 = vrot.slane %v1151, 4
      %v1157 = vsel %vm324, %v1156, %v1139
      %v1158 = vrot.slane %v1139, 4
      %v1159 = vsel %vm324, %v1151, %v1158
      %v1160 = vrot.slane %v1155, 4
      %v1161 = vsel %vm324, %v1160, %v1143
      %v1162 = vrot.slane %v1143, 4
      %v1163 = vsel %vm324, %v1155, %v1162
      %1165 = vrot.lane.b32.xlu0 %v1159, 4
      %v1166 = vpop.permute.xlu0 %1165
      %1169 = vrot.lane.b32.xlu0 %v1161, 8
      %v1170 = vpop.permute.xlu0 %1169
      %1173 = vrot.lane.b32.xlu0 %v1163, 12
      %v1174 = vpop.permute.xlu0 %1173
      %v1176 = vsel %vm392, %v1157, %v1166
      %v1177 = vsel %vm394, %v1176, %v1170
      %v1178 = vsel %vm396, %v1177, %v1174
      %v1180 = vsel %vm394, %v1083, 0
      %1182 = vmatpush.msra.mxu0 0.0
      %1183 = vmatpush.msra.mxu0 0.0
      %1184 = vmatpush.msra.mxu0 0.0
      %1185 = vmatpush.msra.mxu0 0.0
      %1186 = vmatpush.msra.mxu0 0.0
      %1187 = vmatpush.msra.mxu0 0.0
      %1188 = vmatpush.msra.mxu0 0.0
      %1189 = vmatpush.msra.mxu0 0.0
      %1190 = vmatpush.msra.mxu0 0.0
      %1191 = vmatpush.msra.mxu0 0.0
      %1192 = vmatpush.msra.mxu0 0.0
      %1193 = vmatpush.msra.mxu0 0.0
      %1194 = vmatpush.msra.mxu0 0.0
      %1195 = vmatpush.msra.mxu0 0.0
      %1196 = vmatpush.msra.mxu0 0.0
      %1197 = vmatpush.msra.mxu0 %v1178
      %1198 = vmatmul.f32.gmra.mxu0 %v1180
      %v1199 = vpop.f32.mrf.mxu0
      %v1200 = vadd.f32 0.0, %v1199
      %1201 = vdwg.mxu0
      %v1202 = vadd.f32 %v1081, %v1200
      %s1203 = scalar_lea.vmem %s1, 64
      %v1204 = vld [vmem:[%s1203] sm:$0xff]
      %1205 = vrot.lane.b32.xlu0 %v971, 127
      %v1206 = vpop.permute.xlu0 %1205
      %1207 = vrot.lane.b32.xlu0 %v972, 127
      %v1208 = vpop.permute.xlu0 %1207
      %1209 = vrot.lane.b32.xlu0 %v973, 127
      %v1210 = vpop.permute.xlu0 %1209
      %1211 = vrot.lane.b32.xlu0 %v974, 127
      %v1212 = vpop.permute.xlu0 %1211
      %1213 = vrot.lane.b32.xlu0 %v975, 127
      %v1214 = vpop.permute.xlu0 %1213
      %1215 = vrot.lane.b32.xlu0 %v976, 127
      %v1216 = vpop.permute.xlu0 %1215
      %1217 = vrot.lane.b32.xlu0 %v977, 127
      %v1218 = vpop.permute.xlu0 %1217
      %1219 = vrot.lane.b32.xlu0 %v978, 127
      %v1220 = vpop.permute.xlu0 %1219
      %v1229 = vrot.slane %v1210, 4
      %v1230 = vsel %vm324, %v1229, %v1206
      %v1232 = vunpack.c.l.s4 1983009808
      %v1233 = vunpack.c.0.s8 %v1232
      %v1234 = vperm.slane %v1230, %v1233
      %v1235 = vrot.slane %v1212, 4
      %v1236 = vsel %vm324, %v1235, %v1208
      %v1238 = vunpack.c.l.s4 1983009808
      %v1239 = vunpack.c.0.s8 %v1238
      %v1240 = vperm.slane %v1236, %v1239
      %v1241 = vrot.slane %v1218, 4
      %v1242 = vsel %vm324, %v1241, %v1214
      %v1244 = vunpack.c.l.s4 1983009808
      %v1245 = vunpack.c.0.s8 %v1244
      %v1246 = vperm.slane %v1242, %v1245
      %v1247 = vrot.slane %v1220, 4
      %v1248 = vsel %vm324, %v1247, %v1216
      %v1250 = vunpack.c.l.s4 1983009808
      %v1251 = vunpack.c.0.s8 %v1250
      %v1252 = vperm.slane %v1248, %v1251
      %v1253 = vrot.slane %v1240, 4
      %v1254 = vsel %vm324, %v1253, %v1234
      %v1255 = vrot.slane %v1234, 4
      %v1256 = vsel %vm324, %v1240, %v1255
      %v1258 = vunpack.c.l.s4 1934713408
      %v1259 = vunpack.c.0.s8 %v1258
      %v1260 = vperm.slane %v1254, %v1259
      %v1262 = vunpack.c.l.s4 1934713408
      %v1263 = vunpack.c.0.s8 %v1262
      %v1264 = vperm.slane %v1256, %v1263
      %v1265 = vrot.slane %v1252, 4
      %v1266 = vsel %vm324, %v1265, %v1246
      %v1267 = vrot.slane %v1246, 4
      %v1268 = vsel %vm324, %v1252, %v1267
      %v1270 = vunpack.c.l.s4 1934713408
      %v1271 = vunpack.c.0.s8 %v1270
      %v1272 = vperm.slane %v1266, %v1271
      %v1274 = vunpack.c.l.s4 1934713408
      %v1275 = vunpack.c.0.s8 %v1274
      %v1276 = vperm.slane %v1268, %v1275
      %v1277 = vrot.slane %v1272, 4
      %v1278 = vsel %vm324, %v1277, %v1260
      %v1279 = vrot.slane %v1260, 4
      %v1280 = vsel %vm324, %v1272, %v1279
      %v1281 = vrot.slane %v1276, 4
      %v1282 = vsel %vm324, %v1281, %v1264
      %v1283 = vrot.slane %v1264, 4
      %v1284 = vsel %vm324, %v1276, %v1283
      %1286 = vrot.lane.b32.xlu0 %v1280, 4
      %v1287 = vpop.permute.xlu0 %1286
      %1290 = vrot.lane.b32.xlu0 %v1282, 8
      %v1291 = vpop.permute.xlu0 %1290
      %1294 = vrot.lane.b32.xlu0 %v1284, 12
      %v1295 = vpop.permute.xlu0 %1294
      %v1297 = vsel %vm392, %v1278, %v1287
      %v1298 = vsel %vm394, %v1297, %v1291
      %v1299 = vsel %vm396, %v1298, %v1295
      %v1301 = vsel %vm394, %v1204, 0
      %1303 = vmatpush.msra.mxu0 0.0
      %1304 = vmatpush.msra.mxu0 0.0
      %1305 = vmatpush.msra.mxu0 0.0
      %1306 = vmatpush.msra.mxu0 0.0
      %1307 = vmatpush.msra.mxu0 0.0
      %1308 = vmatpush.msra.mxu0 0.0
      %1309 = vmatpush.msra.mxu0 0.0
      %1310 = vmatpush.msra.mxu0 0.0
      %1311 = vmatpush.msra.mxu0 0.0
      %1312 = vmatpush.msra.mxu0 0.0
      %1313 = vmatpush.msra.mxu0 0.0
      %1314 = vmatpush.msra.mxu0 0.0
      %1315 = vmatpush.msra.mxu0 0.0
      %1316 = vmatpush.msra.mxu0 0.0
      %1317 = vmatpush.msra.mxu0 0.0
      %1318 = vmatpush.msra.mxu0 %v1299
      %1319 = vmatmul.f32.gmra.mxu0 %v1301
      %v1320 = vpop.f32.mrf.mxu0
      %v1321 = vadd.f32 0.0, %v1320
      %1322 = vdwg.mxu0
      %v1323 = vadd.f32 %v1202, %v1321
      %v1324 = vld [vmem:[%s2] sm:$0xff]
      %1326 = vset.pattern.permute.xlu0 0
      %1327 = vperm.xlu0 %1326, %v1324
      %v1328 = vpop.permute.xlu0 %1327
      %v1330 = vadd.f32 %v1323, %v1328
      %v1331 = vmul.f32 %v1330, 0.2
      %v1332 = vmax.f32 %v1330, %v1331
      %1334 = vrot.lane.b32.xlu0 %v1332, 124
      %v1335 = vpop.permute.xlu0 %1334
      %1337 = vrot.lane.b32.xlu0 %v1332, 120
      %v1338 = vpop.permute.xlu0 %1337
      %1340 = vrot.lane.b32.xlu0 %v1332, 116
      %v1341 = vpop.permute.xlu0 %1340
      %v1343 = vrot.slane %v1338, 4
      %v1344 = vsel %vm324, %v1343, %v1332
      %v1345 = vrot.slane %v1332, 4
      %v1346 = vsel %vm324, %v1338, %v1345
      %v1348 = vunpack.c.l.s4 1983009808
      %v1349 = vunpack.c.0.s8 %v1348
      %v1350 = vperm.slane %v1344, %v1349
      %v1352 = vunpack.c.l.s4 1983009808
      %v1353 = vunpack.c.0.s8 %v1352
      %v1354 = vperm.slane %v1346, %v1353
      %v1355 = vrot.slane %v1341, 4
      %v1356 = vsel %vm324, %v1355, %v1335
      %v1357 = vrot.slane %v1335, 4
      %v1358 = vsel %vm324, %v1341, %v1357
      %v1360 = vunpack.c.l.s4 1983009808
      %v1361 = vunpack.c.0.s8 %v1360
      %v1362 = vperm.slane %v1356, %v1361
      %v1364 = vunpack.c.l.s4 1983009808
      %v1365 = vunpack.c.0.s8 %v1364
      %v1366 = vperm.slane %v1358, %v1365
      %v1367 = vrot.slane %v1362, 4
      %v1368 = vsel %vm324, %v1367, %v1350
      %v1369 = vrot.slane %v1350, 4
      %v1370 = vsel %vm324, %v1362, %v1369
      %v1372 = vunpack.c.l.s4 1934713408
      %v1373 = vunpack.c.0.s8 %v1372
      %v1374 = vperm.slane %v1368, %v1373
      %v1376 = vunpack.c.l.s4 1934713408
      %v1377 = vunpack.c.0.s8 %v1376
      %v1378 = vperm.slane %v1370, %v1377
      %v1379 = vrot.slane %v1366, 4
      %v1380 = vsel %vm324, %v1379, %v1354
      %v1381 = vrot.slane %v1354, 4
      %v1382 = vsel %vm324, %v1366, %v1381
      %v1384 = vunpack.c.l.s4 1934713408
      %v1385 = vunpack.c.0.s8 %v1384
      %v1386 = vperm.slane %v1380, %v1385
      %v1388 = vunpack.c.l.s4 1934713408
      %v1389 = vunpack.c.0.s8 %v1388
      %v1390 = vperm.slane %v1382, %v1389
      %v1391 = vrot.slane %v1374, 4
      %v1392 = vsel %vm324, 0.0, %v1391
      %v1393 = vrot.slane %v1378, 4
      %v1394 = vsel %vm324, 0.0, %v1393
      %v1395 = vrot.slane %v1386, 4
      %v1396 = vsel %vm324, 0.0, %v1395
      %v1397 = vrot.slane %v1390, 4
      %v1398 = vsel %vm324, 0.0, %v1397
      %1407 = vrot.lane.b32.xlu0 %v1374, 1
      %v1408 = vpop.permute.xlu0 %1407
      %1409 = vrot.lane.b32.xlu0 %v1392, 1
      %v1410 = vpop.permute.xlu0 %1409
      %1411 = vrot.lane.b32.xlu0 %v1378, 1
      %v1412 = vpop.permute.xlu0 %1411
      %1413 = vrot.lane.b32.xlu0 %v1394, 1
      %v1414 = vpop.permute.xlu0 %1413
      %1415 = vrot.lane.b32.xlu0 %v1386, 1
      %v1416 = vpop.permute.xlu0 %1415
      %1417 = vrot.lane.b32.xlu0 %v1396, 1
      %v1418 = vpop.permute.xlu0 %1417
      %1419 = vrot.lane.b32.xlu0 %v1390, 1
      %v1420 = vpop.permute.xlu0 %1419
      %1421 = vrot.lane.b32.xlu0 %v1398, 1
      %v1422 = vpop.permute.xlu0 %1421
      %vm1431 = vcmask 35848
      %1432 = vst.msk [vmem:[#allocation2 + $0x1] sm:$0xf] %vm1431, %v1408
      %1433 = vst.msk [vmem:[#allocation2 + $0x9] sm:$0xf] %vm1431, %v1410
      %1434 = vst.msk [vmem:[#allocation2 + $0x11] sm:$0xf] %vm1431, %v1412
      %1435 = vst.msk [vmem:[#allocation2 + $0x19] sm:$0xf] %vm1431, %v1414
      %1436 = vst.msk [vmem:[#allocation2 + $0x21] sm:$0xf] %vm1431, %v1416
      %1437 = vst.msk [vmem:[#allocation2 + $0x29] sm:$0xf] %vm1431, %v1418
      %1438 = vst.msk [vmem:[#allocation2 + $0x31] sm:$0xf] %vm1431, %v1420
      %1439 = vst.msk [vmem:[#allocation2 + $0x39] sm:$0xf] %vm1431, %v1422
      %v1440 = vld [vmem:[%s1] sm:$0xff]
      %v1441 = vld [vmem:[%s398] sm:$0xff]
      %v1443 = vsel %vm394, %v1441, 0
      %1445 = vmatpush.msra.mxu0 0.0
      %1446 = vmatpush.msra.mxu0 0.0
      %1447 = vmatpush.msra.mxu0 0.0
      %1448 = vmatpush.msra.mxu0 0.0
      %1449 = vmatpush.msra.mxu0 0.0
      %1450 = vmatpush.msra.mxu0 0.0
      %1451 = vmatpush.msra.mxu0 0.0
      %1452 = vmatpush.msra.mxu0 0.0
      %1453 = vmatpush.msra.mxu0 0.0
      %1454 = vmatpush.msra.mxu0 0.0
      %1455 = vmatpush.msra.mxu0 0.0
      %1456 = vmatpush.msra.mxu0 0.0
      %1457 = vmatpush.msra.mxu0 0.0
      %1458 = vmatpush.msra.mxu0 0.0
      %1459 = vmatpush.msra.mxu0 0.0
      %1460 = vmatpush.msra.mxu0 %v621
      %1461 = vmatmul.f32.gmra.mxu0 %v1443
      %v1462 = vpop.f32.mrf.mxu0
      %v1463 = vadd.f32 0.0, %v1462
      %1464 = vdwg.mxu0
      %v1466 = vsel %vm394, %v1440, 0
      %1468 = vmatpush.msra.mxu0 0.0
      %1469 = vmatpush.msra.mxu0 0.0
      %1470 = vmatpush.msra.mxu0 0.0
      %1471 = vmatpush.msra.mxu0 0.0
      %1472 = vmatpush.msra.mxu0 0.0
      %1473 = vmatpush.msra.mxu0 0.0
      %1474 = vmatpush.msra.mxu0 0.0
      %1475 = vmatpush.msra.mxu0 0.0
      %1476 = vmatpush.msra.mxu0 0.0
      %1477 = vmatpush.msra.mxu0 0.0
      %1478 = vmatpush.msra.mxu0 0.0
      %1479 = vmatpush.msra.mxu0 0.0
      %1480 = vmatpush.msra.mxu0 0.0
      %1481 = vmatpush.msra.mxu0 0.0
      %1482 = vmatpush.msra.mxu0 0.0
      %1483 = vmatpush.msra.mxu0 %v470
      %1484 = vmatmul.f32.gmra.mxu0 %v1466
      %v1485 = vpop.f32.mrf.mxu0
      %v1486 = vadd.f32 %v1463, %v1485
      %1487 = vdwg.mxu0
      %v1488 = vld [vmem:[%s517] sm:$0xff]
      %1489 = vrot.lane.b32.xlu0 %v298, 127
      %v1490 = vpop.permute.xlu0 %1489
      %1491 = vrot.lane.b32.xlu0 %v299, 127
      %v1492 = vpop.permute.xlu0 %1491
      %1493 = vrot.lane.b32.xlu0 %v300, 127
      %v1494 = vpop.permute.xlu0 %1493
      %1495 = vrot.lane.b32.xlu0 %v301, 127
      %v1496 = vpop.permute.xlu0 %1495
      %1497 = vrot.lane.b32.xlu0 %v302, 127
      %v1498 = vpop.permute.xlu0 %1497
      %1499 = vrot.lane.b32.xlu0 %v303, 127
      %v1500 = vpop.permute.xlu0 %1499
      %1501 = vrot.lane.b32.xlu0 %v304, 127
      %v1502 = vpop.permute.xlu0 %1501
      %1503 = vrot.lane.b32.xlu0 %v305, 127
      %v1504 = vpop.permute.xlu0 %1503
      %v1513 = vrot.slane %v1494, 4
      %v1514 = vsel %vm324, %v1513, %v1490
      %v1516 = vunpack.c.l.s4 1983009808
      %v1517 = vunpack.c.0.s8 %v1516
      %v1518 = vperm.slane %v1514, %v1517
      %v1519 = vrot.slane %v1496, 4
      %v1520 = vsel %vm324, %v1519, %v1492
      %v1522 = vunpack.c.l.s4 1983009808
      %v1523 = vunpack.c.0.s8 %v1522
      %v1524 = vperm.slane %v1520, %v1523
      %v1525 = vrot.slane %v1502, 4
      %v1526 = vsel %vm324, %v1525, %v1498
      %v1528 = vunpack.c.l.s4 1983009808
      %v1529 = vunpack.c.0.s8 %v1528
      %v1530 = vperm.slane %v1526, %v1529
      %v1531 = vrot.slane %v1504, 4
      %v1532 = vsel %vm324, %v1531, %v1500
      %v1534 = vunpack.c.l.s4 1983009808
      %v1535 = vunpack.c.0.s8 %v1534
      %v1536 = vperm.slane %v1532, %v1535
      %v1537 = vrot.slane %v1524, 4
      %v1538 = vsel %vm324, %v1537, %v1518
      %v1539 = vrot.slane %v1518, 4
      %v1540 = vsel %vm324, %v1524, %v1539
      %v1542 = vunpack.c.l.s4 1934713408
      %v1543 = vunpack.c.0.s8 %v1542
      %v1544 = vperm.slane %v1538, %v1543
      %v1546 = vunpack.c.l.s4 1934713408
      %v1547 = vunpack.c.0.s8 %v1546
      %v1548 = vperm.slane %v1540, %v1547
      %v1549 = vrot.slane %v1536, 4
      %v1550 = vsel %vm324, %v1549, %v1530
      %v1551 = vrot.slane %v1530, 4
      %v1552 = vsel %vm324, %v1536, %v1551
      %v1554 = vunpack.c.l.s4 1934713408
      %v1555 = vunpack.c.0.s8 %v1554
      %v1556 = vperm.slane %v1550, %v1555
      %v1558 = vunpack.c.l.s4 1934713408
      %v1559 = vunpack.c.0.s8 %v1558
      %v1560 = vperm.slane %v1552, %v1559
      %v1561 = vrot.slane %v1556, 4
      %v1562 = vsel %vm324, %v1561, %v1544
      %v1563 = vrot.slane %v1544, 4
      %v1564 = vsel %vm324, %v1556, %v1563
      %v1565 = vrot.slane %v1560, 4
      %v1566 = vsel %vm324, %v1565, %v1548
      %v1567 = vrot.slane %v1548, 4
      %v1568 = vsel %vm324, %v1560, %v1567
      %1570 = vrot.lane.b32.xlu0 %v1564, 4
      %v1571 = vpop.permute.xlu0 %1570
      %1574 = vrot.lane.b32.xlu0 %v1566, 8
      %v1575 = vpop.permute.xlu0 %1574
      %1578 = vrot.lane.b32.xlu0 %v1568, 12
      %v1579 = vpop.permute.xlu0 %1578
      %v1581 = vsel %vm392, %v1562, %v1571
      %v1582 = vsel %vm394, %v1581, %v1575
      %v1583 = vsel %vm396, %v1582, %v1579
      %v1585 = vsel %vm394, %v1488, 0
      %1587 = vmatpush.msra.mxu0 0.0
      %1588 = vmatpush.msra.mxu0 0.0
      %1589 = vmatpush.msra.mxu0 0.0
      %1590 = vmatpush.msra.mxu0 0.0
      %1591 = vmatpush.msra.mxu0 0.0
      %1592 = vmatpush.msra.mxu0 0.0
      %1593 = vmatpush.msra.mxu0 0.0
      %1594 = vmatpush.msra.mxu0 0.0
      %1595 = vmatpush.msra.mxu0 0.0
      %1596 = vmatpush.msra.mxu0 0.0
      %1597 = vmatpush.msra.mxu0 0.0
      %1598 = vmatpush.msra.mxu0 0.0
      %1599 = vmatpush.msra.mxu0 0.0
      %1600 = vmatpush.msra.mxu0 0.0
      %1601 = vmatpush.msra.mxu0 0.0
      %1602 = vmatpush.msra.mxu0 %v1583
      %1603 = vmatmul.f32.gmra.mxu0 %v1585
      %v1604 = vpop.f32.mrf.mxu0
      %v1605 = vadd.f32 0.0, %v1604
      %1606 = vdwg.mxu0
      %v1607 = vadd.f32 %v1486, %v1605
      %v1608 = vld [vmem:[%s646] sm:$0xff]
      %v1610 = vsel %vm394, %v1608, 0
      %1612 = vmatpush.msra.mxu0 0.0
      %1613 = vmatpush.msra.mxu0 0.0
      %1614 = vmatpush.msra.mxu0 0.0
      %1615 = vmatpush.msra.mxu0 0.0
      %1616 = vmatpush.msra.mxu0 0.0
      %1617 = vmatpush.msra.mxu0 0.0
      %1618 = vmatpush.msra.mxu0 0.0
      %1619 = vmatpush.msra.mxu0 0.0
      %1620 = vmatpush.msra.mxu0 0.0
      %1621 = vmatpush.msra.mxu0 0.0
      %1622 = vmatpush.msra.mxu0 0.0
      %1623 = vmatpush.msra.mxu0 0.0
      %1624 = vmatpush.msra.mxu0 0.0
      %1625 = vmatpush.msra.mxu0 0.0
      %1626 = vmatpush.msra.mxu0 0.0
      %1627 = vmatpush.msra.mxu0 %v815
      %1628 = vmatmul.f32.gmra.mxu0 %v1610
      %v1629 = vpop.f32.mrf.mxu0
      %v1630 = vadd.f32 0.0, %v1629
      %1631 = vdwg.mxu0
      %v1632 = vadd.f32 %v1607, %v1630
      %v1633 = vld [vmem:[%s743] sm:$0xff]
      %v1635 = vsel %vm394, %v1633, 0
      %1637 = vmatpush.msra.mxu0 0.0
      %1638 = vmatpush.msra.mxu0 0.0
      %1639 = vmatpush.msra.mxu0 0.0
      %1640 = vmatpush.msra.mxu0 0.0
      %1641 = vmatpush.msra.mxu0 0.0
      %1642 = vmatpush.msra.mxu0 0.0
      %1643 = vmatpush.msra.mxu0 0.0
      %1644 = vmatpush.msra.mxu0 0.0
      %1645 = vmatpush.msra.mxu0 0.0
      %1646 = vmatpush.msra.mxu0 0.0
      %1647 = vmatpush.msra.mxu0 0.0
      %1648 = vmatpush.msra.mxu0 0.0
      %1649 = vmatpush.msra.mxu0 0.0
      %1650 = vmatpush.msra.mxu0 0.0
      %1651 = vmatpush.msra.mxu0 0.0
      %1652 = vmatpush.msra.mxu0 %v944
      %1653 = vmatmul.f32.gmra.mxu0 %v1635
      %v1654 = vpop.f32.mrf.mxu0
      %v1655 = vadd.f32 0.0, %v1654
      %1656 = vdwg.mxu0
      %v1657 = vadd.f32 %v1632, %v1655
      %v1658 = vld [vmem:[%s840] sm:$0xff]
      %1667 = vrot.lane.b32.xlu0 %v314, 127
      %v1668 = vpop.permute.xlu0 %1667
      %1669 = vrot.lane.b32.xlu0 %v315, 127
      %v1670 = vpop.permute.xlu0 %1669
      %1671 = vrot.lane.b32.xlu0 %v316, 127
      %v1672 = vpop.permute.xlu0 %1671
      %1673 = vrot.lane.b32.xlu0 %v317, 127
      %v1674 = vpop.permute.xlu0 %1673
      %1675 = vrot.lane.b32.xlu0 %v318, 127
      %v1676 = vpop.permute.xlu0 %1675
      %1677 = vrot.lane.b32.xlu0 %v319, 127
      %v1678 = vpop.permute.xlu0 %1677
      %1679 = vrot.lane.b32.xlu0 %v320, 127
      %v1680 = vpop.permute.xlu0 %1679
      %1681 = vrot.lane.b32.xlu0 %v321, 127
      %v1682 = vpop.permute.xlu0 %1681
      %v1691 = vrot.slane %v1672, 4
      %v1692 = vsel %vm324, %v1691, %v1668
      %v1694 = vunpack.c.l.s4 1983009808
      %v1695 = vunpack.c.0.s8 %v1694
      %v1696 = vperm.slane %v1692, %v1695
      %v1697 = vrot.slane %v1674, 4
      %v1698 = vsel %vm324, %v1697, %v1670
      %v1700 = vunpack.c.l.s4 1983009808
      %v1701 = vunpack.c.0.s8 %v1700
      %v1702 = vperm.slane %v1698, %v1701
      %v1703 = vrot.slane %v1680, 4
      %v1704 = vsel %vm324, %v1703, %v1676
      %v1706 = vunpack.c.l.s4 1983009808
      %v1707 = vunpack.c.0.s8 %v1706
      %v1708 = vperm.slane %v1704, %v1707
      %v1709 = vrot.slane %v1682, 4
      %v1710 = vsel %vm324, %v1709, %v1678
      %v1712 = vunpack.c.l.s4 1983009808
      %v1713 = vunpack.c.0.s8 %v1712
      %v1714 = vperm.slane %v1710, %v1713
      %v1715 = vrot.slane %v1702, 4
      %v1716 = vsel %vm324, %v1715, %v1696
      %v1717 = vrot.slane %v1696, 4
      %v1718 = vsel %vm324, %v1702, %v1717
      %v1720 = vunpack.c.l.s4 1934713408
      %v1721 = vunpack.c.0.s8 %v1720
      %v1722 = vperm.slane %v1716, %v1721
      %v1724 = vunpack.c.l.s4 1934713408
      %v1725 = vunpack.c.0.s8 %v1724
      %v1726 = vperm.slane %v1718, %v1725
      %v1727 = vrot.slane %v1714, 4
      %v1728 = vsel %vm324, %v1727, %v1708
      %v1729 = vrot.slane %v1708, 4
      %v1730 = vsel %vm324, %v1714, %v1729
      %v1732 = vunpack.c.l.s4 1934713408
      %v1733 = vunpack.c.0.s8 %v1732
      %v1734 = vperm.slane %v1728, %v1733
      %v1736 = vunpack.c.l.s4 1934713408
      %v1737 = vunpack.c.0.s8 %v1736
      %v1738 = vperm.slane %v1730, %v1737
      %v1739 = vrot.slane %v1734, 4
      %v1740 = vsel %vm324, %v1739, %v1722
      %v1741 = vrot.slane %v1722, 4
      %v1742 = vsel %vm324, %v1734, %v1741
      %v1743 = vrot.slane %v1738, 4
      %v1744 = vsel %vm324, %v1743, %v1726
      %v1745 = vrot.slane %v1726, 4
      %v1746 = vsel %vm324, %v1738, %v1745
      %1748 = vrot.lane.b32.xlu0 %v1742, 4
      %v1749 = vpop.permute.xlu0 %1748
      %1752 = vrot.lane.b32.xlu0 %v1744, 8
      %v1753 = vpop.permute.xlu0 %1752
      %1756 = vrot.lane.b32.xlu0 %v1746, 12
      %v1757 = vpop.permute.xlu0 %1756
      %v1759 = vsel %vm392, %v1740, %v1749
      %v1760 = vsel %vm394, %v1759, %v1753
      %v1761 = vsel %vm396, %v1760, %v1757
      %v1763 = vsel %vm394, %v1658, 0
      %1765 = vmatpush.msra.mxu0 0.0
      %1766 = vmatpush.msra.mxu0 0.0
      %1767 = vmatpush.msra.mxu0 0.0
      %1768 = vmatpush.msra.mxu0 0.0
      %1769 = vmatpush.msra.mxu0 0.0
      %1770 = vmatpush.msra.mxu0 0.0
      %1771 = vmatpush.msra.mxu0 0.0
      %1772 = vmatpush.msra.mxu0 0.0
      %1773 = vmatpush.msra.mxu0 0.0
      %1774 = vmatpush.msra.mxu0 0.0
      %1775 = vmatpush.msra.mxu0 0.0
      %1776 = vmatpush.msra.mxu0 0.0
      %1777 = vmatpush.msra.mxu0 0.0
      %1778 = vmatpush.msra.mxu0 0.0
      %1779 = vmatpush.msra.mxu0 0.0
      %1780 = vmatpush.msra.mxu0 %v1761
      %1781 = vmatmul.f32.gmra.mxu0 %v1763
      %v1782 = vpop.f32.mrf.mxu0
      %v1783 = vadd.f32 0.0, %v1782
      %1784 = vdwg.mxu0
      %v1785 = vadd.f32 %v1657, %v1783
      %v1786 = vld [vmem:[%s969] sm:$0xff]
      %v1788 = vsel %vm394, %v1786, 0
      %1790 = vmatpush.msra.mxu0 0.0
      %1791 = vmatpush.msra.mxu0 0.0
      %1792 = vmatpush.msra.mxu0 0.0
      %1793 = vmatpush.msra.mxu0 0.0
      %1794 = vmatpush.msra.mxu0 0.0
      %1795 = vmatpush.msra.mxu0 0.0
      %1796 = vmatpush.msra.mxu0 0.0
      %1797 = vmatpush.msra.mxu0 0.0
      %1798 = vmatpush.msra.mxu0 0.0
      %1799 = vmatpush.msra.mxu0 0.0
      %1800 = vmatpush.msra.mxu0 0.0
      %1801 = vmatpush.msra.mxu0 0.0
      %1802 = vmatpush.msra.mxu0 0.0
      %1803 = vmatpush.msra.mxu0 0.0
      %1804 = vmatpush.msra.mxu0 0.0
      %1805 = vmatpush.msra.mxu0 %v1178
      %1806 = vmatmul.f32.gmra.mxu0 %v1788
      %v1807 = vpop.f32.mrf.mxu0
      %v1808 = vadd.f32 0.0, %v1807
      %1809 = vdwg.mxu0
      %v1810 = vadd.f32 %v1785, %v1808
      %v1811 = vld [vmem:[%s1082] sm:$0xff]
      %v1813 = vsel %vm394, %v1811, 0
      %1815 = vmatpush.msra.mxu0 0.0
      %1816 = vmatpush.msra.mxu0 0.0
      %1817 = vmatpush.msra.mxu0 0.0
      %1818 = vmatpush.msra.mxu0 0.0
      %1819 = vmatpush.msra.mxu0 0.0
      %1820 = vmatpush.msra.mxu0 0.0
      %1821 = vmatpush.msra.mxu0 0.0
      %1822 = vmatpush.msra.mxu0 0.0
      %1823 = vmatpush.msra.mxu0 0.0
      %1824 = vmatpush.msra.mxu0 0.0
      %1825 = vmatpush.msra.mxu0 0.0
      %1826 = vmatpush.msra.mxu0 0.0
      %1827 = vmatpush.msra.mxu0 0.0
      %1828 = vmatpush.msra.mxu0 0.0
      %1829 = vmatpush.msra.mxu0 0.0
      %1830 = vmatpush.msra.mxu0 %v1299
      %1831 = vmatmul.f32.gmra.mxu0 %v1813
      %v1832 = vpop.f32.mrf.mxu0
      %v1833 = vadd.f32 0.0, %v1832
      %1834 = vdwg.mxu0
      %v1835 = vadd.f32 %v1810, %v1833
      %v1836 = vld [vmem:[%s1203] sm:$0xff]
      %1837 = vrot.lane.b32.xlu0 %v1092, 127
      %v1838 = vpop.permute.xlu0 %1837
      %1839 = vrot.lane.b32.xlu0 %v1093, 127
      %v1840 = vpop.permute.xlu0 %1839
      %1841 = vrot.lane.b32.xlu0 %v1094, 127
      %v1842 = vpop.permute.xlu0 %1841
      %1843 = vrot.lane.b32.xlu0 %v1095, 127
      %v1844 = vpop.permute.xlu0 %1843
      %1845 = vrot.lane.b32.xlu0 %v1096, 127
      %v1846 = vpop.permute.xlu0 %1845
      %1847 = vrot.lane.b32.xlu0 %v1097, 127
      %v1848 = vpop.permute.xlu0 %1847
      %1849 = vrot.lane.b32.xlu0 %v1098, 127
      %v1850 = vpop.permute.xlu0 %1849
      %1851 = vrot.lane.b32.xlu0 %v1099, 127
      %v1852 = vpop.permute.xlu0 %1851
      %v1861 = vrot.slane %v1842, 4
      %v1862 = vsel %vm324, %v1861, %v1838
      %v1864 = vunpack.c.l.s4 1983009808
      %v1865 = vunpack.c.0.s8 %v1864
      %v1866 = vperm.slane %v1862, %v1865
      %v1867 = vrot.slane %v1844, 4
      %v1868 = vsel %vm324, %v1867, %v1840
      %v1870 = vunpack.c.l.s4 1983009808
      %v1871 = vunpack.c.0.s8 %v1870
      %v1872 = vperm.slane %v1868, %v1871
      %v1873 = vrot.slane %v1850, 4
      %v1874 = vsel %vm324, %v1873, %v1846
      %v1876 = vunpack.c.l.s4 1983009808
      %v1877 = vunpack.c.0.s8 %v1876
      %v1878 = vperm.slane %v1874, %v1877
      %v1879 = vrot.slane %v1852, 4
      %v1880 = vsel %vm324, %v1879, %v1848
      %v1882 = vunpack.c.l.s4 1983009808
      %v1883 = vunpack.c.0.s8 %v1882
      %v1884 = vperm.slane %v1880, %v1883
      %v1885 = vrot.slane %v1872, 4
      %v1886 = vsel %vm324, %v1885, %v1866
      %v1887 = vrot.slane %v1866, 4
      %v1888 = vsel %vm324, %v1872, %v1887
      %v1890 = vunpack.c.l.s4 1934713408
      %v1891 = vunpack.c.0.s8 %v1890
      %v1892 = vperm.slane %v1886, %v1891
      %v1894 = vunpack.c.l.s4 1934713408
      %v1895 = vunpack.c.0.s8 %v1894
      %v1896 = vperm.slane %v1888, %v1895
      %v1897 = vrot.slane %v1884, 4
      %v1898 = vsel %vm324, %v1897, %v1878
      %v1899 = vrot.slane %v1878, 4
      %v1900 = vsel %vm324, %v1884, %v1899
      %v1902 = vunpack.c.l.s4 1934713408
      %v1903 = vunpack.c.0.s8 %v1902
      %v1904 = vperm.slane %v1898, %v1903
      %v1906 = vunpack.c.l.s4 1934713408
      %v1907 = vunpack.c.0.s8 %v1906
      %v1908 = vperm.slane %v1900, %v1907
      %v1909 = vrot.slane %v1904, 4
      %v1910 = vsel %vm324, %v1909, %v1892
      %v1911 = vrot.slane %v1892, 4
      %v1912 = vsel %vm324, %v1904, %v1911
      %v1913 = vrot.slane %v1908, 4
      %v1914 = vsel %vm324, %v1913, %v1896
      %v1915 = vrot.slane %v1896, 4
      %v1916 = vsel %vm324, %v1908, %v1915
      %1918 = vrot.lane.b32.xlu0 %v1912, 4
      %v1919 = vpop.permute.xlu0 %1918
      %1922 = vrot.lane.b32.xlu0 %v1914, 8
      %v1923 = vpop.permute.xlu0 %1922
      %1926 = vrot.lane.b32.xlu0 %v1916, 12
      %v1927 = vpop.permute.xlu0 %1926
      %v1929 = vsel %vm392, %v1910, %v1919
      %v1930 = vsel %vm394, %v1929, %v1923
      %v1931 = vsel %vm396, %v1930, %v1927
      %v1933 = vsel %vm394, %v1836, 0
      %1935 = vmatpush.msra.mxu0 0.0
      %1936 = vmatpush.msra.mxu0 0.0
      %1937 = vmatpush.msra.mxu0 0.0
      %1938 = vmatpush.msra.mxu0 0.0
      %1939 = vmatpush.msra.mxu0 0.0
      %1940 = vmatpush.msra.mxu0 0.0
      %1941 = vmatpush.msra.mxu0 0.0
      %1942 = vmatpush.msra.mxu0 0.0
      %1943 = vmatpush.msra.mxu0 0.0
      %1944 = vmatpush.msra.mxu0 0.0
      %1945 = vmatpush.msra.mxu0 0.0
      %1946 = vmatpush.msra.mxu0 0.0
      %1947 = vmatpush.msra.mxu0 0.0
      %1948 = vmatpush.msra.mxu0 0.0
      %1949 = vmatpush.msra.mxu0 0.0
      %1950 = vmatpush.msra.mxu0 %v1931
      %1951 = vmatmul.f32.gmra.mxu0 %v1933
      %v1952 = vpop.f32.mrf.mxu0
      %v1953 = vadd.f32 0.0, %v1952
      %1954 = vdwg.mxu0
      %v1955 = vadd.f32 %v1835, %v1953
      %v1956 = vld [vmem:[%s2] sm:$0xff]
      %1958 = vset.pattern.permute.xlu0 0
      %1959 = vperm.xlu0 %1958, %v1956
      %v1960 = vpop.permute.xlu0 %1959
      %v1962 = vadd.f32 %v1955, %v1960
      %v1963 = vmul.f32 %v1962, 0.2
      %v1964 = vmax.f32 %v1962, %v1963
      %1966 = vrot.lane.b32.xlu0 %v1964, 124
      %v1967 = vpop.permute.xlu0 %1966
      %1969 = vrot.lane.b32.xlu0 %v1964, 120
      %v1970 = vpop.permute.xlu0 %1969
      %1972 = vrot.lane.b32.xlu0 %v1964, 116
      %v1973 = vpop.permute.xlu0 %1972
      %v1975 = vrot.slane %v1970, 4
      %v1976 = vsel %vm324, %v1975, %v1964
      %v1977 = vrot.slane %v1964, 4
      %v1978 = vsel %vm324, %v1970, %v1977
      %v1980 = vunpack.c.l.s4 1983009808
      %v1981 = vunpack.c.0.s8 %v1980
      %v1982 = vperm.slane %v1976, %v1981
      %v1984 = vunpack.c.l.s4 1983009808
      %v1985 = vunpack.c.0.s8 %v1984
      %v1986 = vperm.slane %v1978, %v1985
      %v1987 = vrot.slane %v1973, 4
      %v1988 = vsel %vm324, %v1987, %v1967
      %v1989 = vrot.slane %v1967, 4
      %v1990 = vsel %vm324, %v1973, %v1989
      %v1992 = vunpack.c.l.s4 1983009808
      %v1993 = vunpack.c.0.s8 %v1992
      %v1994 = vperm.slane %v1988, %v1993
      %v1996 = vunpack.c.l.s4 1983009808
      %v1997 = vunpack.c.0.s8 %v1996
      %v1998 = vperm.slane %v1990, %v1997
      %v1999 = vrot.slane %v1994, 4
      %v2000 = vsel %vm324, %v1999, %v1982
      %v2001 = vrot.slane %v1982, 4
      %v2002 = vsel %vm324, %v1994, %v2001
      %v2004 = vunpack.c.l.s4 1934713408
      %v2005 = vunpack.c.0.s8 %v2004
      %v2006 = vperm.slane %v2000, %v2005
      %v2008 = vunpack.c.l.s4 1934713408
      %v2009 = vunpack.c.0.s8 %v2008
      %v2010 = vperm.slane %v2002, %v2009
      %v2011 = vrot.slane %v1998, 4
      %v2012 = vsel %vm324, %v2011, %v1986
      %v2013 = vrot.slane %v1986, 4
      %v2014 = vsel %vm324, %v1998, %v2013
      %v2016 = vunpack.c.l.s4 1934713408
      %v2017 = vunpack.c.0.s8 %v2016
      %v2018 = vperm.slane %v2012, %v2017
      %v2020 = vunpack.c.l.s4 1934713408
      %v2021 = vunpack.c.0.s8 %v2020
      %v2022 = vperm.slane %v2014, %v2021
      %v2023 = vrot.slane %v2006, 4
      %v2024 = vsel %vm324, 0.0, %v2023
      %v2025 = vrot.slane %v2010, 4
      %v2026 = vsel %vm324, 0.0, %v2025
      %v2027 = vrot.slane %v2018, 4
      %v2028 = vsel %vm324, 0.0, %v2027
      %v2029 = vrot.slane %v2022, 4
      %v2030 = vsel %vm324, 0.0, %v2029
      %2039 = vrot.lane.b32.xlu0 %v2006, 1
      %v2040 = vpop.permute.xlu0 %2039
      %2041 = vrot.lane.b32.xlu0 %v2024, 1
      %v2042 = vpop.permute.xlu0 %2041
      %2043 = vrot.lane.b32.xlu0 %v2010, 1
      %v2044 = vpop.permute.xlu0 %2043
      %2045 = vrot.lane.b32.xlu0 %v2026, 1
      %v2046 = vpop.permute.xlu0 %2045
      %2047 = vrot.lane.b32.xlu0 %v2018, 1
      %v2048 = vpop.permute.xlu0 %2047
      %2049 = vrot.lane.b32.xlu0 %v2028, 1
      %v2050 = vpop.permute.xlu0 %2049
      %2051 = vrot.lane.b32.xlu0 %v2022, 1
      %v2052 = vpop.permute.xlu0 %2051
      %2053 = vrot.lane.b32.xlu0 %v2030, 1
      %v2054 = vpop.permute.xlu0 %2053
      %s2063 = scalar_lea.vmem [#allocation2], 64
      %2064 = vst.msk [vmem:[%s2063 + $0x1] sm:$0xf] %vm1431, %v2040
      %2065 = vst.msk [vmem:[%s2063 + $0x9] sm:$0xf] %vm1431, %v2042
      %2066 = vst.msk [vmem:[%s2063 + $0x11] sm:$0xf] %vm1431, %v2044
      %2067 = vst.msk [vmem:[%s2063 + $0x19] sm:$0xf] %vm1431, %v2046
      %2068 = vst.msk [vmem:[%s2063 + $0x21] sm:$0xf] %vm1431, %v2048
      %2069 = vst.msk [vmem:[%s2063 + $0x29] sm:$0xf] %vm1431, %v2050
      %2070 = vst.msk [vmem:[%s2063 + $0x31] sm:$0xf] %vm1431, %v2052
      %2071 = vst.msk [vmem:[%s2063 + $0x39] sm:$0xf] %vm1431, %v2054
      %v2072 = vld [vmem:[%s1] sm:$0xff]
      %v2073 = vld [vmem:[%s398] sm:$0xff]
      %v2075 = vsel %vm394, %v2073, 0
      %2077 = vmatpush.msra.mxu0 0.0
      %2078 = vmatpush.msra.mxu0 0.0
      %2079 = vmatpush.msra.mxu0 0.0
      %2080 = vmatpush.msra.mxu0 0.0
      %2081 = vmatpush.msra.mxu0 0.0
      %2082 = vmatpush.msra.mxu0 0.0
      %2083 = vmatpush.msra.mxu0 0.0
      %2084 = vmatpush.msra.mxu0 0.0
      %2085 = vmatpush.msra.mxu0 0.0
      %2086 = vmatpush.msra.mxu0 0.0
      %2087 = vmatpush.msra.mxu0 0.0
      %2088 = vmatpush.msra.mxu0 0.0
      %2089 = vmatpush.msra.mxu0 0.0
      %2090 = vmatpush.msra.mxu0 0.0
      %2091 = vmatpush.msra.mxu0 0.0
      %2092 = vmatpush.msra.mxu0 %v815
      %2093 = vmatmul.f32.gmra.mxu0 %v2075
      %v2094 = vpop.f32.mrf.mxu0
      %v2095 = vadd.f32 0.0, %v2094
      %2096 = vdwg.mxu0
      %v2098 = vsel %vm394, %v2072, 0
      %2100 = vmatpush.msra.mxu0 0.0
      %2101 = vmatpush.msra.mxu0 0.0
      %2102 = vmatpush.msra.mxu0 0.0
      %2103 = vmatpush.msra.mxu0 0.0
      %2104 = vmatpush.msra.mxu0 0.0
      %2105 = vmatpush.msra.mxu0 0.0
      %2106 = vmatpush.msra.mxu0 0.0
      %2107 = vmatpush.msra.mxu0 0.0
      %2108 = vmatpush.msra.mxu0 0.0
      %2109 = vmatpush.msra.mxu0 0.0
      %2110 = vmatpush.msra.mxu0 0.0
      %2111 = vmatpush.msra.mxu0 0.0
      %2112 = vmatpush.msra.mxu0 0.0
      %2113 = vmatpush.msra.mxu0 0.0
      %2114 = vmatpush.msra.mxu0 0.0
      %2115 = vmatpush.msra.mxu0 %v718
      %2116 = vmatmul.f32.gmra.mxu0 %v2098
      %v2117 = vpop.f32.mrf.mxu0
      %v2118 = vadd.f32 %v2095, %v2117
      %2119 = vdwg.mxu0
      %v2120 = vld [vmem:[%s517] sm:$0xff]
      %v2122 = vsel %vm394, %v2120, 0
      %2124 = vmatpush.msra.mxu0 0.0
      %2125 = vmatpush.msra.mxu0 0.0
      %2126 = vmatpush.msra.mxu0 0.0
      %2127 = vmatpush.msra.mxu0 0.0
      %2128 = vmatpush.msra.mxu0 0.0
      %2129 = vmatpush.msra.mxu0 0.0
      %2130 = vmatpush.msra.mxu0 0.0
      %2131 = vmatpush.msra.mxu0 0.0
      %2132 = vmatpush.msra.mxu0 0.0
      %2133 = vmatpush.msra.mxu0 0.0
      %2134 = vmatpush.msra.mxu0 0.0
      %2135 = vmatpush.msra.mxu0 0.0
      %2136 = vmatpush.msra.mxu0 0.0
      %2137 = vmatpush.msra.mxu0 0.0
      %2138 = vmatpush.msra.mxu0 0.0
      %2139 = vmatpush.msra.mxu0 %v944
      %2140 = vmatmul.f32.gmra.mxu0 %v2122
      %v2141 = vpop.f32.mrf.mxu0
      %v2142 = vadd.f32 0.0, %v2141
      %2143 = vdwg.mxu0
      %v2144 = vadd.f32 %v2118, %v2142
      %v2145 = vld [vmem:[%s646] sm:$0xff]
      %v2147 = vsel %vm394, %v2145, 0
      %2149 = vmatpush.msra.mxu0 0.0
      %2150 = vmatpush.msra.mxu0 0.0
      %2151 = vmatpush.msra.mxu0 0.0
      %2152 = vmatpush.msra.mxu0 0.0
      %2153 = vmatpush.msra.mxu0 0.0
      %2154 = vmatpush.msra.mxu0 0.0
      %2155 = vmatpush.msra.mxu0 0.0
      %2156 = vmatpush.msra.mxu0 0.0
      %2157 = vmatpush.msra.mxu0 0.0
      %2158 = vmatpush.msra.mxu0 0.0
      %2159 = vmatpush.msra.mxu0 0.0
      %2160 = vmatpush.msra.mxu0 0.0
      %2161 = vmatpush.msra.mxu0 0.0
      %2162 = vmatpush.msra.mxu0 0.0
      %2163 = vmatpush.msra.mxu0 0.0
      %2164 = vmatpush.msra.mxu0 %v1057
      %2165 = vmatmul.f32.gmra.mxu0 %v2147
      %v2166 = vpop.f32.mrf.mxu0
      %v2167 = vadd.f32 0.0, %v2166
      %2168 = vdwg.mxu0
      %v2169 = vadd.f32 %v2144, %v2167
      %v2170 = vld [vmem:[%s743] sm:$0xff]
      %v2172 = vsel %vm394, %v2170, 0
      %2174 = vmatpush.msra.mxu0 0.0
      %2175 = vmatpush.msra.mxu0 0.0
      %2176 = vmatpush.msra.mxu0 0.0
      %2177 = vmatpush.msra.mxu0 0.0
      %2178 = vmatpush.msra.mxu0 0.0
      %2179 = vmatpush.msra.mxu0 0.0
      %2180 = vmatpush.msra.mxu0 0.0
      %2181 = vmatpush.msra.mxu0 0.0
      %2182 = vmatpush.msra.mxu0 0.0
      %2183 = vmatpush.msra.mxu0 0.0
      %2184 = vmatpush.msra.mxu0 0.0
      %2185 = vmatpush.msra.mxu0 0.0
      %2186 = vmatpush.msra.mxu0 0.0
      %2187 = vmatpush.msra.mxu0 0.0
      %2188 = vmatpush.msra.mxu0 0.0
      %2189 = vmatpush.msra.mxu0 %v1178
      %2190 = vmatmul.f32.gmra.mxu0 %v2172
      %v2191 = vpop.f32.mrf.mxu0
      %v2192 = vadd.f32 0.0, %v2191
      %2193 = vdwg.mxu0
      %v2194 = vadd.f32 %v2169, %v2192
      %v2195 = vld [vmem:[%s840] sm:$0xff]
      %v2197 = vsel %vm394, %v2195, 0
      %2199 = vmatpush.msra.mxu0 0.0
      %2200 = vmatpush.msra.mxu0 0.0
      %2201 = vmatpush.msra.mxu0 0.0
      %2202 = vmatpush.msra.mxu0 0.0
      %2203 = vmatpush.msra.mxu0 0.0
      %2204 = vmatpush.msra.mxu0 0.0
      %2205 = vmatpush.msra.mxu0 0.0
      %2206 = vmatpush.msra.mxu0 0.0
      %2207 = vmatpush.msra.mxu0 0.0
      %2208 = vmatpush.msra.mxu0 0.0
      %2209 = vmatpush.msra.mxu0 0.0
      %2210 = vmatpush.msra.mxu0 0.0
      %2211 = vmatpush.msra.mxu0 0.0
      %2212 = vmatpush.msra.mxu0 0.0
      %2213 = vmatpush.msra.mxu0 0.0
      %2214 = vmatpush.msra.mxu0 %v1299
      %2215 = vmatmul.f32.gmra.mxu0 %v2197
      %v2216 = vpop.f32.mrf.mxu0
      %v2217 = vadd.f32 0.0, %v2216
      %2218 = vdwg.mxu0
      %v2219 = vadd.f32 %v2194, %v2217
      %v2220 = vld [vmem:[%s969] sm:$0xff]
      %v2221 = vrot.slane %v306, 1
      %v2222 = vrot.slane %v307, 1
      %v2223 = vrot.slane %v308, 1
      %v2224 = vrot.slane %v309, 1
      %v2225 = vrot.slane %v310, 1
      %v2226 = vrot.slane %v311, 1
      %v2227 = vrot.slane %v312, 1
      %v2228 = vrot.slane %v313, 1
      %v2237 = vrot.slane %v2223, 4
      %v2238 = vsel %vm324, %v2237, %v2221
      %v2240 = vunpack.c.l.s4 1983009808
      %v2241 = vunpack.c.0.s8 %v2240
      %v2242 = vperm.slane %v2238, %v2241
      %v2243 = vrot.slane %v2224, 4
      %v2244 = vsel %vm324, %v2243, %v2222
      %v2246 = vunpack.c.l.s4 1983009808
      %v2247 = vunpack.c.0.s8 %v2246
      %v2248 = vperm.slane %v2244, %v2247
      %v2249 = vrot.slane %v2227, 4
      %v2250 = vsel %vm324, %v2249, %v2225
      %v2252 = vunpack.c.l.s4 1983009808
      %v2253 = vunpack.c.0.s8 %v2252
      %v2254 = vperm.slane %v2250, %v2253
      %v2255 = vrot.slane %v2228, 4
      %v2256 = vsel %vm324, %v2255, %v2226
      %v2258 = vunpack.c.l.s4 1983009808
      %v2259 = vunpack.c.0.s8 %v2258
      %v2260 = vperm.slane %v2256, %v2259
      %v2261 = vrot.slane %v2248, 4
      %v2262 = vsel %vm324, %v2261, %v2242
      %v2263 = vrot.slane %v2242, 4
      %v2264 = vsel %vm324, %v2248, %v2263
      %v2266 = vunpack.c.l.s4 1934713408
      %v2267 = vunpack.c.0.s8 %v2266
      %v2268 = vperm.slane %v2262, %v2267
      %v2270 = vunpack.c.l.s4 1934713408
      %v2271 = vunpack.c.0.s8 %v2270
      %v2272 = vperm.slane %v2264, %v2271
      %v2273 = vrot.slane %v2260, 4
      %v2274 = vsel %vm324, %v2273, %v2254
      %v2275 = vrot.slane %v2254, 4
      %v2276 = vsel %vm324, %v2260, %v2275
      %v2278 = vunpack.c.l.s4 1934713408
      %v2279 = vunpack.c.0.s8 %v2278
      %v2280 = vperm.slane %v2274, %v2279
      %v2282 = vunpack.c.l.s4 1934713408
      %v2283 = vunpack.c.0.s8 %v2282
      %v2284 = vperm.slane %v2276, %v2283
      %v2285 = vrot.slane %v2280, 4
      %v2286 = vsel %vm324, %v2285, %v2268
      %v2287 = vrot.slane %v2268, 4
      %v2288 = vsel %vm324, %v2280, %v2287
      %v2289 = vrot.slane %v2284, 4
      %v2290 = vsel %vm324, %v2289, %v2272
      %v2291 = vrot.slane %v2272, 4
      %v2292 = vsel %vm324, %v2284, %v2291
      %2294 = vrot.lane.b32.xlu0 %v2288, 4
      %v2295 = vpop.permute.xlu0 %2294
      %2298 = vrot.lane.b32.xlu0 %v2290, 8
      %v2299 = vpop.permute.xlu0 %2298
      %2302 = vrot.lane.b32.xlu0 %v2292, 12
      %v2303 = vpop.permute.xlu0 %2302
      %v2305 = vsel %vm392, %v2286, %v2295
      %v2306 = vsel %vm394, %v2305, %v2299
      %v2307 = vsel %vm396, %v2306, %v2303
      %v2309 = vsel %vm394, %v2220, 0
      %2311 = vmatpush.msra.mxu0 0.0
      %2312 = vmatpush.msra.mxu0 0.0
      %2313 = vmatpush.msra.mxu0 0.0
      %2314 = vmatpush.msra.mxu0 0.0
      %2315 = vmatpush.msra.mxu0 0.0
      %2316 = vmatpush.msra.mxu0 0.0
      %2317 = vmatpush.msra.mxu0 0.0
      %2318 = vmatpush.msra.mxu0 0.0
      %2319 = vmatpush.msra.mxu0 0.0
      %2320 = vmatpush.msra.mxu0 0.0
      %2321 = vmatpush.msra.mxu0 0.0
      %2322 = vmatpush.msra.mxu0 0.0
      %2323 = vmatpush.msra.mxu0 0.0
      %2324 = vmatpush.msra.mxu0 0.0
      %2325 = vmatpush.msra.mxu0 0.0
      %2326 = vmatpush.msra.mxu0 %v2307
      %2327 = vmatmul.f32.gmra.mxu0 %v2309
      %v2328 = vpop.f32.mrf.mxu0
      %v2329 = vadd.f32 0.0, %v2328
      %2330 = vdwg.mxu0
      %v2331 = vadd.f32 %v2219, %v2329
      %v2332 = vld [vmem:[%s1082] sm:$0xff]
      %v2333 = vrot.slane %v314, 1
      %v2334 = vrot.slane %v315, 1
      %v2335 = vrot.slane %v316, 1
      %v2336 = vrot.slane %v317, 1
      %v2337 = vrot.slane %v318, 1
      %v2338 = vrot.slane %v319, 1
      %v2339 = vrot.slane %v320, 1
      %v2340 = vrot.slane %v321, 1
      %v2349 = vrot.slane %v2335, 4
      %v2350 = vsel %vm324, %v2349, %v2333
      %v2352 = vunpack.c.l.s4 1983009808
      %v2353 = vunpack.c.0.s8 %v2352
      %v2354 = vperm.slane %v2350, %v2353
      %v2355 = vrot.slane %v2336, 4
      %v2356 = vsel %vm324, %v2355, %v2334
      %v2358 = vunpack.c.l.s4 1983009808
      %v2359 = vunpack.c.0.s8 %v2358
      %v2360 = vperm.slane %v2356, %v2359
      %v2361 = vrot.slane %v2339, 4
      %v2362 = vsel %vm324, %v2361, %v2337
      %v2364 = vunpack.c.l.s4 1983009808
      %v2365 = vunpack.c.0.s8 %v2364
      %v2366 = vperm.slane %v2362, %v2365
      %v2367 = vrot.slane %v2340, 4
      %v2368 = vsel %vm324, %v2367, %v2338
      %v2370 = vunpack.c.l.s4 1983009808
      %v2371 = vunpack.c.0.s8 %v2370
      %v2372 = vperm.slane %v2368, %v2371
      %v2373 = vrot.slane %v2360, 4
      %v2374 = vsel %vm324, %v2373, %v2354
      %v2375 = vrot.slane %v2354, 4
      %v2376 = vsel %vm324, %v2360, %v2375
      %v2378 = vunpack.c.l.s4 1934713408
      %v2379 = vunpack.c.0.s8 %v2378
      %v2380 = vperm.slane %v2374, %v2379
      %v2382 = vunpack.c.l.s4 1934713408
      %v2383 = vunpack.c.0.s8 %v2382
      %v2384 = vperm.slane %v2376, %v2383
      %v2385 = vrot.slane %v2372, 4
      %v2386 = vsel %vm324, %v2385, %v2366
      %v2387 = vrot.slane %v2366, 4
      %v2388 = vsel %vm324, %v2372, %v2387
      %v2390 = vunpack.c.l.s4 1934713408
      %v2391 = vunpack.c.0.s8 %v2390
      %v2392 = vperm.slane %v2386, %v2391
      %v2394 = vunpack.c.l.s4 1934713408
      %v2395 = vunpack.c.0.s8 %v2394
      %v2396 = vperm.slane %v2388, %v2395
      %v2397 = vrot.slane %v2392, 4
      %v2398 = vsel %vm324, %v2397, %v2380
      %v2399 = vrot.slane %v2380, 4
      %v2400 = vsel %vm324, %v2392, %v2399
      %v2401 = vrot.slane %v2396, 4
      %v2402 = vsel %vm324, %v2401, %v2384
      %v2403 = vrot.slane %v2384, 4
      %v2404 = vsel %vm324, %v2396, %v2403
      %2406 = vrot.lane.b32.xlu0 %v2400, 4
      %v2407 = vpop.permute.xlu0 %2406
      %2410 = vrot.lane.b32.xlu0 %v2402, 8
      %v2411 = vpop.permute.xlu0 %2410
      %2414 = vrot.lane.b32.xlu0 %v2404, 12
      %v2415 = vpop.permute.xlu0 %2414
      %v2417 = vsel %vm392, %v2398, %v2407
      %v2418 = vsel %vm394, %v2417, %v2411
      %v2419 = vsel %vm396, %v2418, %v2415
      %v2421 = vsel %vm394, %v2332, 0
      %2423 = vmatpush.msra.mxu0 0.0
      %2424 = vmatpush.msra.mxu0 0.0
      %2425 = vmatpush.msra.mxu0 0.0
      %2426 = vmatpush.msra.mxu0 0.0
      %2427 = vmatpush.msra.mxu0 0.0
      %2428 = vmatpush.msra.mxu0 0.0
      %2429 = vmatpush.msra.mxu0 0.0
      %2430 = vmatpush.msra.mxu0 0.0
      %2431 = vmatpush.msra.mxu0 0.0
      %2432 = vmatpush.msra.mxu0 0.0
      %2433 = vmatpush.msra.mxu0 0.0
      %2434 = vmatpush.msra.mxu0 0.0
      %2435 = vmatpush.msra.mxu0 0.0
      %2436 = vmatpush.msra.mxu0 0.0
      %2437 = vmatpush.msra.mxu0 0.0
      %2438 = vmatpush.msra.mxu0 %v2419
      %2439 = vmatmul.f32.gmra.mxu0 %v2421
      %v2440 = vpop.f32.mrf.mxu0
      %v2441 = vadd.f32 0.0, %v2440
      %2442 = vdwg.mxu0
      %v2443 = vadd.f32 %v2331, %v2441
      %v2444 = vld [vmem:[%s1203] sm:$0xff]
      %2445 = vrot.lane.b32.xlu0 %v2221, 127
      %v2446 = vpop.permute.xlu0 %2445
      %2447 = vrot.lane.b32.xlu0 %v2222, 127
      %v2448 = vpop.permute.xlu0 %2447
      %2449 = vrot.lane.b32.xlu0 %v2223, 127
      %v2450 = vpop.permute.xlu0 %2449
      %2451 = vrot.lane.b32.xlu0 %v2224, 127
      %v2452 = vpop.permute.xlu0 %2451
      %2453 = vrot.lane.b32.xlu0 %v2225, 127
      %v2454 = vpop.permute.xlu0 %2453
      %2455 = vrot.lane.b32.xlu0 %v2226, 127
      %v2456 = vpop.permute.xlu0 %2455
      %2457 = vrot.lane.b32.xlu0 %v2227, 127
      %v2458 = vpop.permute.xlu0 %2457
      %2459 = vrot.lane.b32.xlu0 %v2228, 127
      %v2460 = vpop.permute.xlu0 %2459
      %v2469 = vrot.slane %v2450, 4
      %v2470 = vsel %vm324, %v2469, %v2446
      %v2472 = vunpack.c.l.s4 1983009808
      %v2473 = vunpack.c.0.s8 %v2472
      %v2474 = vperm.slane %v2470, %v2473
      %v2475 = vrot.slane %v2452, 4
      %v2476 = vsel %vm324, %v2475, %v2448
      %v2478 = vunpack.c.l.s4 1983009808
      %v2479 = vunpack.c.0.s8 %v2478
      %v2480 = vperm.slane %v2476, %v2479
      %v2481 = vrot.slane %v2458, 4
      %v2482 = vsel %vm324, %v2481, %v2454
      %v2484 = vunpack.c.l.s4 1983009808
      %v2485 = vunpack.c.0.s8 %v2484
      %v2486 = vperm.slane %v2482, %v2485
      %v2487 = vrot.slane %v2460, 4
      %v2488 = vsel %vm324, %v2487, %v2456
      %v2490 = vunpack.c.l.s4 1983009808
      %v2491 = vunpack.c.0.s8 %v2490
      %v2492 = vperm.slane %v2488, %v2491
      %v2493 = vrot.slane %v2480, 4
      %v2494 = vsel %vm324, %v2493, %v2474
      %v2495 = vrot.slane %v2474, 4
      %v2496 = vsel %vm324, %v2480, %v2495
      %v2498 = vunpack.c.l.s4 1934713408
      %v2499 = vunpack.c.0.s8 %v2498
      %v2500 = vperm.slane %v2494, %v2499
      %v2502 = vunpack.c.l.s4 1934713408
      %v2503 = vunpack.c.0.s8 %v2502
      %v2504 = vperm.slane %v2496, %v2503
      %v2505 = vrot.slane %v2492, 4
      %v2506 = vsel %vm324, %v2505, %v2486
      %v2507 = vrot.slane %v2486, 4
      %v2508 = vsel %vm324, %v2492, %v2507
      %v2510 = vunpack.c.l.s4 1934713408
      %v2511 = vunpack.c.0.s8 %v2510
      %v2512 = vperm.slane %v2506, %v2511
      %v2514 = vunpack.c.l.s4 1934713408
      %v2515 = vunpack.c.0.s8 %v2514
      %v2516 = vperm.slane %v2508, %v2515
      %v2517 = vrot.slane %v2512, 4
      %v2518 = vsel %vm324, %v2517, %v2500
      %v2519 = vrot.slane %v2500, 4
      %v2520 = vsel %vm324, %v2512, %v2519
      %v2521 = vrot.slane %v2516, 4
      %v2522 = vsel %vm324, %v2521, %v2504
      %v2523 = vrot.slane %v2504, 4
      %v2524 = vsel %vm324, %v2516, %v2523
      %2526 = vrot.lane.b32.xlu0 %v2520, 4
      %v2527 = vpop.permute.xlu0 %2526
      %2530 = vrot.lane.b32.xlu0 %v2522, 8
      %v2531 = vpop.permute.xlu0 %2530
      %2534 = vrot.lane.b32.xlu0 %v2524, 12
      %v2535 = vpop.permute.xlu0 %2534
      %v2537 = vsel %vm392, %v2518, %v2527
      %v2538 = vsel %vm394, %v2537, %v2531
      %v2539 = vsel %vm396, %v2538, %v2535
      %v2541 = vsel %vm394, %v2444, 0
      %2543 = vmatpush.msra.mxu0 0.0
      %2544 = vmatpush.msra.mxu0 0.0
      %2545 = vmatpush.msra.mxu0 0.0
      %2546 = vmatpush.msra.mxu0 0.0
      %2547 = vmatpush.msra.mxu0 0.0
      %2548 = vmatpush.msra.mxu0 0.0
      %2549 = vmatpush.msra.mxu0 0.0
      %2550 = vmatpush.msra.mxu0 0.0
      %2551 = vmatpush.msra.mxu0 0.0
      %2552 = vmatpush.msra.mxu0 0.0
      %2553 = vmatpush.msra.mxu0 0.0
      %2554 = vmatpush.msra.mxu0 0.0
      %2555 = vmatpush.msra.mxu0 0.0
      %2556 = vmatpush.msra.mxu0 0.0
      %2557 = vmatpush.msra.mxu0 0.0
      %2558 = vmatpush.msra.mxu0 %v2539
      %2559 = vmatmul.f32.gmra.mxu0 %v2541
      %v2560 = vpop.f32.mrf.mxu0
      %v2561 = vadd.f32 0.0, %v2560
      %2562 = vdwg.mxu0
      %v2563 = vadd.f32 %v2443, %v2561
      %v2564 = vld [vmem:[%s2] sm:$0xff]
      %2566 = vset.pattern.permute.xlu0 0
      %2567 = vperm.xlu0 %2566, %v2564
      %v2568 = vpop.permute.xlu0 %2567
      %v2570 = vadd.f32 %v2563, %v2568
      %v2571 = vmul.f32 %v2570, 0.2
      %v2572 = vmax.f32 %v2570, %v2571
      %2574 = vrot.lane.b32.xlu0 %v2572, 124
      %v2575 = vpop.permute.xlu0 %2574
      %2577 = vrot.lane.b32.xlu0 %v2572, 120
      %v2578 = vpop.permute.xlu0 %2577
      %2580 = vrot.lane.b32.xlu0 %v2572, 116
      %v2581 = vpop.permute.xlu0 %2580
      %v2583 = vrot.slane %v2578, 4
      %v2584 = vsel %vm324, %v2583, %v2572
      %v2585 = vrot.slane %v2572, 4
      %v2586 = vsel %vm324, %v2578, %v2585
      %v2588 = vunpack.c.l.s4 1983009808
      %v2589 = vunpack.c.0.s8 %v2588
      %v2590 = vperm.slane %v2584, %v2589
      %v2592 = vunpack.c.l.s4 1983009808
      %v2593 = vunpack.c.0.s8 %v2592
      %v2594 = vperm.slane %v2586, %v2593
      %v2595 = vrot.slane %v2581, 4
      %v2596 = vsel %vm324, %v2595, %v2575
      %v2597 = vrot.slane %v2575, 4
      %v2598 = vsel %vm324, %v2581, %v2597
      %v2600 = vunpack.c.l.s4 1983009808
      %v2601 = vunpack.c.0.s8 %v2600
      %v2602 = vperm.slane %v2596, %v2601
      %v2604 = vunpack.c.l.s4 1983009808
      %v2605 = vunpack.c.0.s8 %v2604
      %v2606 = vperm.slane %v2598, %v2605
      %v2607 = vrot.slane %v2602, 4
      %v2608 = vsel %vm324, %v2607, %v2590
      %v2609 = vrot.slane %v2590, 4
      %v2610 = vsel %vm324, %v2602, %v2609
      %v2612 = vunpack.c.l.s4 1934713408
      %v2613 = vunpack.c.0.s8 %v2612
      %v2614 = vperm.slane %v2608, %v2613
      %v2616 = vunpack.c.l.s4 1934713408
      %v2617 = vunpack.c.0.s8 %v2616
      %v2618 = vperm.slane %v2610, %v2617
      %v2619 = vrot.slane %v2606, 4
      %v2620 = vsel %vm324, %v2619, %v2594
      %v2621 = vrot.slane %v2594, 4
      %v2622 = vsel %vm324, %v2606, %v2621
      %v2624 = vunpack.c.l.s4 1934713408
      %v2625 = vunpack.c.0.s8 %v2624
      %v2626 = vperm.slane %v2620, %v2625
      %v2628 = vunpack.c.l.s4 1934713408
      %v2629 = vunpack.c.0.s8 %v2628
      %v2630 = vperm.slane %v2622, %v2629
      %v2631 = vrot.slane %v2614, 4
      %v2632 = vsel %vm324, 0.0, %v2631
      %v2633 = vrot.slane %v2618, 4
      %v2634 = vsel %vm324, 0.0, %v2633
      %v2635 = vrot.slane %v2626, 4
      %v2636 = vsel %vm324, 0.0, %v2635
      %v2637 = vrot.slane %v2630, 4
      %v2638 = vsel %vm324, 0.0, %v2637
      %2647 = vrot.lane.b32.xlu0 %v2614, 1
      %v2648 = vpop.permute.xlu0 %2647
      %2649 = vrot.lane.b32.xlu0 %v2632, 1
      %v2650 = vpop.permute.xlu0 %2649
      %2651 = vrot.lane.b32.xlu0 %v2618, 1
      %v2652 = vpop.permute.xlu0 %2651
      %2653 = vrot.lane.b32.xlu0 %v2634, 1
      %v2654 = vpop.permute.xlu0 %2653
      %2655 = vrot.lane.b32.xlu0 %v2626, 1
      %v2656 = vpop.permute.xlu0 %2655
      %2657 = vrot.lane.b32.xlu0 %v2636, 1
      %v2658 = vpop.permute.xlu0 %2657
      %2659 = vrot.lane.b32.xlu0 %v2630, 1
      %v2660 = vpop.permute.xlu0 %2659
      %2661 = vrot.lane.b32.xlu0 %v2638, 1
      %v2662 = vpop.permute.xlu0 %2661
      %s2671 = scalar_lea.vmem [#allocation2], 128
      %2672 = vst.msk [vmem:[%s2671 + $0x1] sm:$0xf] %vm1431, %v2648
      %2673 = vst.msk [vmem:[%s2671 + $0x9] sm:$0xf] %vm1431, %v2650
      %2674 = vst.msk [vmem:[%s2671 + $0x11] sm:$0xf] %vm1431, %v2652
      %2675 = vst.msk [vmem:[%s2671 + $0x19] sm:$0xf] %vm1431, %v2654
      %2676 = vst.msk [vmem:[%s2671 + $0x21] sm:$0xf] %vm1431, %v2656
      %2677 = vst.msk [vmem:[%s2671 + $0x29] sm:$0xf] %vm1431, %v2658
      %2678 = vst.msk [vmem:[%s2671 + $0x31] sm:$0xf] %vm1431, %v2660
      %2679 = vst.msk [vmem:[%s2671 + $0x39] sm:$0xf] %vm1431, %v2662
      %v2680 = vld [vmem:[%s1] sm:$0xff]
      %v2681 = vld [vmem:[%s398] sm:$0xff]
      %v2683 = vsel %vm394, %v2681, 0
      %2685 = vmatpush.msra.mxu0 0.0
      %2686 = vmatpush.msra.mxu0 0.0
      %2687 = vmatpush.msra.mxu0 0.0
      %2688 = vmatpush.msra.mxu0 0.0
      %2689 = vmatpush.msra.mxu0 0.0
      %2690 = vmatpush.msra.mxu0 0.0
      %2691 = vmatpush.msra.mxu0 0.0
      %2692 = vmatpush.msra.mxu0 0.0
      %2693 = vmatpush.msra.mxu0 0.0
      %2694 = vmatpush.msra.mxu0 0.0
      %2695 = vmatpush.msra.mxu0 0.0
      %2696 = vmatpush.msra.mxu0 0.0
      %2697 = vmatpush.msra.mxu0 0.0
      %2698 = vmatpush.msra.mxu0 0.0
      %2699 = vmatpush.msra.mxu0 0.0
      %2700 = vmatpush.msra.mxu0 %v944
      %2701 = vmatmul.f32.gmra.mxu0 %v2683
      %v2702 = vpop.f32.mrf.mxu0
      %v2703 = vadd.f32 0.0, %v2702
      %2704 = vdwg.mxu0
      %v2706 = vsel %vm394, %v2680, 0
      %2708 = vmatpush.msra.mxu0 0.0
      %2709 = vmatpush.msra.mxu0 0.0
      %2710 = vmatpush.msra.mxu0 0.0
      %2711 = vmatpush.msra.mxu0 0.0
      %2712 = vmatpush.msra.mxu0 0.0
      %2713 = vmatpush.msra.mxu0 0.0
      %2714 = vmatpush.msra.mxu0 0.0
      %2715 = vmatpush.msra.mxu0 0.0
      %2716 = vmatpush.msra.mxu0 0.0
      %2717 = vmatpush.msra.mxu0 0.0
      %2718 = vmatpush.msra.mxu0 0.0
      %2719 = vmatpush.msra.mxu0 0.0
      %2720 = vmatpush.msra.mxu0 0.0
      %2721 = vmatpush.msra.mxu0 0.0
      %2722 = vmatpush.msra.mxu0 0.0
      %2723 = vmatpush.msra.mxu0 %v815
      %2724 = vmatmul.f32.gmra.mxu0 %v2706
      %v2725 = vpop.f32.mrf.mxu0
      %v2726 = vadd.f32 %v2703, %v2725
      %2727 = vdwg.mxu0
      %v2728 = vld [vmem:[%s517] sm:$0xff]
      %v2730 = vsel %vm394, %v2728, 0
      %2732 = vmatpush.msra.mxu0 0.0
      %2733 = vmatpush.msra.mxu0 0.0
      %2734 = vmatpush.msra.mxu0 0.0
      %2735 = vmatpush.msra.mxu0 0.0
      %2736 = vmatpush.msra.mxu0 0.0
      %2737 = vmatpush.msra.mxu0 0.0
      %2738 = vmatpush.msra.mxu0 0.0
      %2739 = vmatpush.msra.mxu0 0.0
      %2740 = vmatpush.msra.mxu0 0.0
      %2741 = vmatpush.msra.mxu0 0.0
      %2742 = vmatpush.msra.mxu0 0.0
      %2743 = vmatpush.msra.mxu0 0.0
      %2744 = vmatpush.msra.mxu0 0.0
      %2745 = vmatpush.msra.mxu0 0.0
      %2746 = vmatpush.msra.mxu0 0.0
      %2747 = vmatpush.msra.mxu0 %v1761
      %2748 = vmatmul.f32.gmra.mxu0 %v2730
      %v2749 = vpop.f32.mrf.mxu0
      %v2750 = vadd.f32 0.0, %v2749
      %2751 = vdwg.mxu0
      %v2752 = vadd.f32 %v2726, %v2750
      %v2753 = vld [vmem:[%s646] sm:$0xff]
      %v2755 = vsel %vm394, %v2753, 0
      %2757 = vmatpush.msra.mxu0 0.0
      %2758 = vmatpush.msra.mxu0 0.0
      %2759 = vmatpush.msra.mxu0 0.0
      %2760 = vmatpush.msra.mxu0 0.0
      %2761 = vmatpush.msra.mxu0 0.0
      %2762 = vmatpush.msra.mxu0 0.0
      %2763 = vmatpush.msra.mxu0 0.0
      %2764 = vmatpush.msra.mxu0 0.0
      %2765 = vmatpush.msra.mxu0 0.0
      %2766 = vmatpush.msra.mxu0 0.0
      %2767 = vmatpush.msra.mxu0 0.0
      %2768 = vmatpush.msra.mxu0 0.0
      %2769 = vmatpush.msra.mxu0 0.0
      %2770 = vmatpush.msra.mxu0 0.0
      %2771 = vmatpush.msra.mxu0 0.0
      %2772 = vmatpush.msra.mxu0 %v1178
      %2773 = vmatmul.f32.gmra.mxu0 %v2755
      %v2774 = vpop.f32.mrf.mxu0
      %v2775 = vadd.f32 0.0, %v2774
      %2776 = vdwg.mxu0
      %v2777 = vadd.f32 %v2752, %v2775
      %v2778 = vld [vmem:[%s743] sm:$0xff]
      %v2780 = vsel %vm394, %v2778, 0
      %2782 = vmatpush.msra.mxu0 0.0
      %2783 = vmatpush.msra.mxu0 0.0
      %2784 = vmatpush.msra.mxu0 0.0
      %2785 = vmatpush.msra.mxu0 0.0
      %2786 = vmatpush.msra.mxu0 0.0
      %2787 = vmatpush.msra.mxu0 0.0
      %2788 = vmatpush.msra.mxu0 0.0
      %2789 = vmatpush.msra.mxu0 0.0
      %2790 = vmatpush.msra.mxu0 0.0
      %2791 = vmatpush.msra.mxu0 0.0
      %2792 = vmatpush.msra.mxu0 0.0
      %2793 = vmatpush.msra.mxu0 0.0
      %2794 = vmatpush.msra.mxu0 0.0
      %2795 = vmatpush.msra.mxu0 0.0
      %2796 = vmatpush.msra.mxu0 0.0
      %2797 = vmatpush.msra.mxu0 %v1299
      %2798 = vmatmul.f32.gmra.mxu0 %v2780
      %v2799 = vpop.f32.mrf.mxu0
      %v2800 = vadd.f32 0.0, %v2799
      %2801 = vdwg.mxu0
      %v2802 = vadd.f32 %v2777, %v2800
      %v2803 = vld [vmem:[%s840] sm:$0xff]
      %v2805 = vsel %vm394, %v2803, 0
      %2807 = vmatpush.msra.mxu0 0.0
      %2808 = vmatpush.msra.mxu0 0.0
      %2809 = vmatpush.msra.mxu0 0.0
      %2810 = vmatpush.msra.mxu0 0.0
      %2811 = vmatpush.msra.mxu0 0.0
      %2812 = vmatpush.msra.mxu0 0.0
      %2813 = vmatpush.msra.mxu0 0.0
      %2814 = vmatpush.msra.mxu0 0.0
      %2815 = vmatpush.msra.mxu0 0.0
      %2816 = vmatpush.msra.mxu0 0.0
      %2817 = vmatpush.msra.mxu0 0.0
      %2818 = vmatpush.msra.mxu0 0.0
      %2819 = vmatpush.msra.mxu0 0.0
      %2820 = vmatpush.msra.mxu0 0.0
      %2821 = vmatpush.msra.mxu0 0.0
      %2822 = vmatpush.msra.mxu0 %v1931
      %2823 = vmatmul.f32.gmra.mxu0 %v2805
      %v2824 = vpop.f32.mrf.mxu0
      %v2825 = vadd.f32 0.0, %v2824
      %2826 = vdwg.mxu0
      %v2827 = vadd.f32 %v2802, %v2825
      %v2828 = vld [vmem:[%s969] sm:$0xff]
      %v2830 = vsel %vm394, %v2828, 0
      %2832 = vmatpush.msra.mxu0 0.0
      %2833 = vmatpush.msra.mxu0 0.0
      %2834 = vmatpush.msra.mxu0 0.0
      %2835 = vmatpush.msra.mxu0 0.0
      %2836 = vmatpush.msra.mxu0 0.0
      %2837 = vmatpush.msra.mxu0 0.0
      %2838 = vmatpush.msra.mxu0 0.0
      %2839 = vmatpush.msra.mxu0 0.0
      %2840 = vmatpush.msra.mxu0 0.0
      %2841 = vmatpush.msra.mxu0 0.0
      %2842 = vmatpush.msra.mxu0 0.0
      %2843 = vmatpush.msra.mxu0 0.0
      %2844 = vmatpush.msra.mxu0 0.0
      %2845 = vmatpush.msra.mxu0 0.0
      %2846 = vmatpush.msra.mxu0 0.0
      %2847 = vmatpush.msra.mxu0 %v2419
      %2848 = vmatmul.f32.gmra.mxu0 %v2830
      %v2849 = vpop.f32.mrf.mxu0
      %v2850 = vadd.f32 0.0, %v2849
      %2851 = vdwg.mxu0
      %v2852 = vadd.f32 %v2827, %v2850
      %v2853 = vld [vmem:[%s1082] sm:$0xff]
      %v2855 = vsel %vm394, %v2853, 0
      %2857 = vmatpush.msra.mxu0 0.0
      %2858 = vmatpush.msra.mxu0 0.0
      %2859 = vmatpush.msra.mxu0 0.0
      %2860 = vmatpush.msra.mxu0 0.0
      %2861 = vmatpush.msra.mxu0 0.0
      %2862 = vmatpush.msra.mxu0 0.0
      %2863 = vmatpush.msra.mxu0 0.0
      %2864 = vmatpush.msra.mxu0 0.0
      %2865 = vmatpush.msra.mxu0 0.0
      %2866 = vmatpush.msra.mxu0 0.0
      %2867 = vmatpush.msra.mxu0 0.0
      %2868 = vmatpush.msra.mxu0 0.0
      %2869 = vmatpush.msra.mxu0 0.0
      %2870 = vmatpush.msra.mxu0 0.0
      %2871 = vmatpush.msra.mxu0 0.0
      %2872 = vmatpush.msra.mxu0 %v2539
      %2873 = vmatmul.f32.gmra.mxu0 %v2855
      %v2874 = vpop.f32.mrf.mxu0
      %v2875 = vadd.f32 0.0, %v2874
      %2876 = vdwg.mxu0
      %v2877 = vadd.f32 %v2852, %v2875
      %v2878 = vld [vmem:[%s1203] sm:$0xff]
      %2879 = vrot.lane.b32.xlu0 %v2333, 127
      %v2880 = vpop.permute.xlu0 %2879
      %2881 = vrot.lane.b32.xlu0 %v2334, 127
      %v2882 = vpop.permute.xlu0 %2881
      %2883 = vrot.lane.b32.xlu0 %v2335, 127
      %v2884 = vpop.permute.xlu0 %2883
      %2885 = vrot.lane.b32.xlu0 %v2336, 127
      %v2886 = vpop.permute.xlu0 %2885
      %2887 = vrot.lane.b32.xlu0 %v2337, 127
      %v2888 = vpop.permute.xlu0 %2887
      %2889 = vrot.lane.b32.xlu0 %v2338, 127
      %v2890 = vpop.permute.xlu0 %2889
      %2891 = vrot.lane.b32.xlu0 %v2339, 127
      %v2892 = vpop.permute.xlu0 %2891
      %2893 = vrot.lane.b32.xlu0 %v2340, 127
      %v2894 = vpop.permute.xlu0 %2893
      %v2903 = vrot.slane %v2884, 4
      %v2904 = vsel %vm324, %v2903, %v2880
      %v2906 = vunpack.c.l.s4 1983009808
      %v2907 = vunpack.c.0.s8 %v2906
      %v2908 = vperm.slane %v2904, %v2907
      %v2909 = vrot.slane %v2886, 4
      %v2910 = vsel %vm324, %v2909, %v2882
      %v2912 = vunpack.c.l.s4 1983009808
      %v2913 = vunpack.c.0.s8 %v2912
      %v2914 = vperm.slane %v2910, %v2913
      %v2915 = vrot.slane %v2892, 4
      %v2916 = vsel %vm324, %v2915, %v2888
      %v2918 = vunpack.c.l.s4 1983009808
      %v2919 = vunpack.c.0.s8 %v2918
      %v2920 = vperm.slane %v2916, %v2919
      %v2921 = vrot.slane %v2894, 4
      %v2922 = vsel %vm324, %v2921, %v2890
      %v2924 = vunpack.c.l.s4 1983009808
      %v2925 = vunpack.c.0.s8 %v2924
      %v2926 = vperm.slane %v2922, %v2925
      %v2927 = vrot.slane %v2914, 4
      %v2928 = vsel %vm324, %v2927, %v2908
      %v2929 = vrot.slane %v2908, 4
      %v2930 = vsel %vm324, %v2914, %v2929
      %v2932 = vunpack.c.l.s4 1934713408
      %v2933 = vunpack.c.0.s8 %v2932
      %v2934 = vperm.slane %v2928, %v2933
      %v2936 = vunpack.c.l.s4 1934713408
      %v2937 = vunpack.c.0.s8 %v2936
      %v2938 = vperm.slane %v2930, %v2937
      %v2939 = vrot.slane %v2926, 4
      %v2940 = vsel %vm324, %v2939, %v2920
      %v2941 = vrot.slane %v2920, 4
      %v2942 = vsel %vm324, %v2926, %v2941
      %v2944 = vunpack.c.l.s4 1934713408
      %v2945 = vunpack.c.0.s8 %v2944
      %v2946 = vperm.slane %v2940, %v2945
      %v2948 = vunpack.c.l.s4 1934713408
      %v2949 = vunpack.c.0.s8 %v2948
      %v2950 = vperm.slane %v2942, %v2949
      %v2951 = vrot.slane %v2946, 4
      %v2952 = vsel %vm324, %v2951, %v2934
      %v2953 = vrot.slane %v2934, 4
      %v2954 = vsel %vm324, %v2946, %v2953
      %v2955 = vrot.slane %v2950, 4
      %v2956 = vsel %vm324, %v2955, %v2938
      %v2957 = vrot.slane %v2938, 4
      %v2958 = vsel %vm324, %v2950, %v2957
      %2960 = vrot.lane.b32.xlu0 %v2954, 4
      %v2961 = vpop.permute.xlu0 %2960
      %2964 = vrot.lane.b32.xlu0 %v2956, 8
      %v2965 = vpop.permute.xlu0 %2964
      %2968 = vrot.lane.b32.xlu0 %v2958, 12
      %v2969 = vpop.permute.xlu0 %2968
      %v2971 = vsel %vm392, %v2952, %v2961
      %v2972 = vsel %vm394, %v2971, %v2965
      %v2973 = vsel %vm396, %v2972, %v2969
      %v2975 = vsel %vm394, %v2878, 0
      %2977 = vmatpush.msra.mxu0 0.0
      %2978 = vmatpush.msra.mxu0 0.0
      %2979 = vmatpush.msra.mxu0 0.0
      %2980 = vmatpush.msra.mxu0 0.0
      %2981 = vmatpush.msra.mxu0 0.0
      %2982 = vmatpush.msra.mxu0 0.0
      %2983 = vmatpush.msra.mxu0 0.0
      %2984 = vmatpush.msra.mxu0 0.0
      %2985 = vmatpush.msra.mxu0 0.0
      %2986 = vmatpush.msra.mxu0 0.0
      %2987 = vmatpush.msra.mxu0 0.0
      %2988 = vmatpush.msra.mxu0 0.0
      %2989 = vmatpush.msra.mxu0 0.0
      %2990 = vmatpush.msra.mxu0 0.0
      %2991 = vmatpush.msra.mxu0 0.0
      %2992 = vmatpush.msra.mxu0 %v2973
      %2993 = vmatmul.f32.gmra.mxu0 %v2975
      %v2994 = vpop.f32.mrf.mxu0
      %v2995 = vadd.f32 0.0, %v2994
      %2996 = vdwg.mxu0
      %v2997 = vadd.f32 %v2877, %v2995
      %v2998 = vld [vmem:[%s2] sm:$0xff]
      %3000 = vset.pattern.permute.xlu0 0
      %3001 = vperm.xlu0 %3000, %v2998
      %v3002 = vpop.permute.xlu0 %3001
      %v3004 = vadd.f32 %v2997, %v3002
      %v3005 = vmul.f32 %v3004, 0.2
      %v3006 = vmax.f32 %v3004, %v3005
      %3008 = vrot.lane.b32.xlu0 %v3006, 124
      %v3009 = vpop.permute.xlu0 %3008
      %3011 = vrot.lane.b32.xlu0 %v3006, 120
      %v3012 = vpop.permute.xlu0 %3011
      %3014 = vrot.lane.b32.xlu0 %v3006, 116
      %v3015 = vpop.permute.xlu0 %3014
      %v3017 = vrot.slane %v3012, 4
      %v3018 = vsel %vm324, %v3017, %v3006
      %v3019 = vrot.slane %v3006, 4
      %v3020 = vsel %vm324, %v3012, %v3019
      %v3022 = vunpack.c.l.s4 1983009808
      %v3023 = vunpack.c.0.s8 %v3022
      %v3024 = vperm.slane %v3018, %v3023
      %v3026 = vunpack.c.l.s4 1983009808
      %v3027 = vunpack.c.0.s8 %v3026
      %v3028 = vperm.slane %v3020, %v3027
      %v3029 = vrot.slane %v3015, 4
      %v3030 = vsel %vm324, %v3029, %v3009
      %v3031 = vrot.slane %v3009, 4
      %v3032 = vsel %vm324, %v3015, %v3031
      %v3034 = vunpack.c.l.s4 1983009808
      %v3035 = vunpack.c.0.s8 %v3034
      %v3036 = vperm.slane %v3030, %v3035
      %v3038 = vunpack.c.l.s4 1983009808
      %v3039 = vunpack.c.0.s8 %v3038
      %v3040 = vperm.slane %v3032, %v3039
      %v3041 = vrot.slane %v3036, 4
      %v3042 = vsel %vm324, %v3041, %v3024
      %v3043 = vrot.slane %v3024, 4
      %v3044 = vsel %vm324, %v3036, %v3043
      %v3046 = vunpack.c.l.s4 1934713408
      %v3047 = vunpack.c.0.s8 %v3046
      %v3048 = vperm.slane %v3042, %v3047
      %v3050 = vunpack.c.l.s4 1934713408
      %v3051 = vunpack.c.0.s8 %v3050
      %v3052 = vperm.slane %v3044, %v3051
      %v3053 = vrot.slane %v3040, 4
      %v3054 = vsel %vm324, %v3053, %v3028
      %v3055 = vrot.slane %v3028, 4
      %v3056 = vsel %vm324, %v3040, %v3055
      %v3058 = vunpack.c.l.s4 1934713408
      %v3059 = vunpack.c.0.s8 %v3058
      %v3060 = vperm.slane %v3054, %v3059
      %v3062 = vunpack.c.l.s4 1934713408
      %v3063 = vunpack.c.0.s8 %v3062
      %v3064 = vperm.slane %v3056, %v3063
      %v3065 = vrot.slane %v3048, 4
      %v3066 = vsel %vm324, 0.0, %v3065
      %v3067 = vrot.slane %v3052, 4
      %v3068 = vsel %vm324, 0.0, %v3067
      %v3069 = vrot.slane %v3060, 4
      %v3070 = vsel %vm324, 0.0, %v3069
      %v3071 = vrot.slane %v3064, 4
      %v3072 = vsel %vm324, 0.0, %v3071
      %3081 = vrot.lane.b32.xlu0 %v3048, 1
      %v3082 = vpop.permute.xlu0 %3081
      %3083 = vrot.lane.b32.xlu0 %v3066, 1
      %v3084 = vpop.permute.xlu0 %3083
      %3085 = vrot.lane.b32.xlu0 %v3052, 1
      %v3086 = vpop.permute.xlu0 %3085
      %3087 = vrot.lane.b32.xlu0 %v3068, 1
      %v3088 = vpop.permute.xlu0 %3087
      %3089 = vrot.lane.b32.xlu0 %v3060, 1
      %v3090 = vpop.permute.xlu0 %3089
      %3091 = vrot.lane.b32.xlu0 %v3070, 1
      %v3092 = vpop.permute.xlu0 %3091
      %3093 = vrot.lane.b32.xlu0 %v3064, 1
      %v3094 = vpop.permute.xlu0 %3093
      %3095 = vrot.lane.b32.xlu0 %v3072, 1
      %v3096 = vpop.permute.xlu0 %3095
      %s3105 = scalar_lea.vmem [#allocation2], 192
      %3106 = vst.msk [vmem:[%s3105 + $0x1] sm:$0xf] %vm1431, %v3082
      %3107 = vst.msk [vmem:[%s3105 + $0x9] sm:$0xf] %vm1431, %v3084
      %3108 = vst.msk [vmem:[%s3105 + $0x11] sm:$0xf] %vm1431, %v3086
      %3109 = vst.msk [vmem:[%s3105 + $0x19] sm:$0xf] %vm1431, %v3088
      %3110 = vst.msk [vmem:[%s3105 + $0x21] sm:$0xf] %vm1431, %v3090
      %3111 = vst.msk [vmem:[%s3105 + $0x29] sm:$0xf] %vm1431, %v3092
      %3112 = vst.msk [vmem:[%s3105 + $0x31] sm:$0xf] %vm1431, %v3094
      %3113 = vst.msk [vmem:[%s3105 + $0x39] sm:$0xf] %vm1431, %v3096
      %v3114 = vld [vmem:[%s3105] sm:$0xf]
      %v3115 = vld [vmem:[%s3105 + $0x8] sm:$0xf]
      %v3116 = vld [vmem:[%s3105 + $0x10] sm:$0xf]
      %v3117 = vld [vmem:[%s3105 + $0x18] sm:$0xf]
      %v3118 = vld [vmem:[%s3105 + $0x20] sm:$0xf]
      %v3119 = vld [vmem:[%s3105 + $0x28] sm:$0xf]
      %v3120 = vld [vmem:[%s3105 + $0x30] sm:$0xf]
      %v3121 = vld [vmem:[%s3105 + $0x38] sm:$0xf]
      %v3122 = vld [vmem:[%s3] sm:$0xff]
      %v3123 = vld [vmem:[%s3 + $0x8] sm:$0xff]
      %v3124 = vrot.slane %v3116, 4
      %v3125 = vsel %vm324, %v3124, %v3114
      %v3127 = vunpack.c.l.s4 1983009808
      %v3128 = vunpack.c.0.s8 %v3127
      %v3129 = vperm.slane %v3125, %v3128
      %v3130 = vrot.slane %v3117, 4
      %v3131 = vsel %vm324, %v3130, %v3115
      %v3133 = vunpack.c.l.s4 1983009808
      %v3134 = vunpack.c.0.s8 %v3133
      %v3135 = vperm.slane %v3131, %v3134
      %v3136 = vrot.slane %v3120, 4
      %v3137 = vsel %vm324, %v3136, %v3118
      %v3139 = vunpack.c.l.s4 1983009808
      %v3140 = vunpack.c.0.s8 %v3139
      %v3141 = vperm.slane %v3137, %v3140
      %v3142 = vrot.slane %v3121, 4
      %v3143 = vsel %vm324, %v3142, %v3119
      %v3145 = vunpack.c.l.s4 1983009808
      %v3146 = vunpack.c.0.s8 %v3145
      %v3147 = vperm.slane %v3143, %v3146
      %v3148 = vrot.slane %v3135, 4
      %v3149 = vsel %vm324, %v3148, %v3129
      %v3150 = vrot.slane %v3129, 4
      %v3151 = vsel %vm324, %v3135, %v3150
      %v3153 = vunpack.c.l.s4 1934713408
      %v3154 = vunpack.c.0.s8 %v3153
      %v3155 = vperm.slane %v3149, %v3154
      %v3157 = vunpack.c.l.s4 1934713408
      %v3158 = vunpack.c.0.s8 %v3157
      %v3159 = vperm.slane %v3151, %v3158
      %v3160 = vrot.slane %v3147, 4
      %v3161 = vsel %vm324, %v3160, %v3141
      %v3162 = vrot.slane %v3141, 4
      %v3163 = vsel %vm324, %v3147, %v3162
      %v3165 = vunpack.c.l.s4 1934713408
      %v3166 = vunpack.c.0.s8 %v3165
      %v3167 = vperm.slane %v3161, %v3166
      %v3169 = vunpack.c.l.s4 1934713408
      %v3170 = vunpack.c.0.s8 %v3169
      %v3171 = vperm.slane %v3163, %v3170
      %v3172 = vrot.slane %v3167, 4
      %v3173 = vsel %vm324, %v3172, %v3155
      %v3174 = vrot.slane %v3155, 4
      %v3175 = vsel %vm324, %v3167, %v3174
      %v3176 = vrot.slane %v3171, 4
      %v3177 = vsel %vm324, %v3176, %v3159
      %v3178 = vrot.slane %v3159, 4
      %v3179 = vsel %vm324, %v3171, %v3178
      %3181 = vrot.lane.b32.xlu0 %v3175, 4
      %v3182 = vpop.permute.xlu0 %3181
      %3185 = vrot.lane.b32.xlu0 %v3177, 8
      %v3186 = vpop.permute.xlu0 %3185
      %3189 = vrot.lane.b32.xlu0 %v3179, 12
      %v3190 = vpop.permute.xlu0 %3189
      %v3192 = vsel %vm392, %v3173, %v3182
      %v3193 = vsel %vm394, %v3192, %v3186
      %v3194 = vsel %vm396, %v3193, %v3190
      %v3195 = vld [vmem:[%s2671] sm:$0xf]
      %v3196 = vld [vmem:[%s2671 + $0x8] sm:$0xf]
      %v3197 = vld [vmem:[%s2671 + $0x10] sm:$0xf]
      %v3198 = vld [vmem:[%s2671 + $0x18] sm:$0xf]
      %v3199 = vld [vmem:[%s2671 + $0x20] sm:$0xf]
      %v3200 = vld [vmem:[%s2671 + $0x28] sm:$0xf]
      %v3201 = vld [vmem:[%s2671 + $0x30] sm:$0xf]
      %v3202 = vld [vmem:[%s2671 + $0x38] sm:$0xf]
      %s3203 = scalar_lea.vmem %s3, 16
      %v3204 = vld [vmem:[%s3203] sm:$0xff]
      %v3205 = vld [vmem:[%s3203 + $0x8] sm:$0xff]
      %3214 = vrot.lane.b32.xlu0 %v3195, 127
      %v3215 = vpop.permute.xlu0 %3214
      %3216 = vrot.lane.b32.xlu0 %v3196, 127
      %v3217 = vpop.permute.xlu0 %3216
      %3218 = vrot.lane.b32.xlu0 %v3197, 127
      %v3219 = vpop.permute.xlu0 %3218
      %3220 = vrot.lane.b32.xlu0 %v3198, 127
      %v3221 = vpop.permute.xlu0 %3220
      %3222 = vrot.lane.b32.xlu0 %v3199, 127
      %v3223 = vpop.permute.xlu0 %3222
      %3224 = vrot.lane.b32.xlu0 %v3200, 127
      %v3225 = vpop.permute.xlu0 %3224
      %3226 = vrot.lane.b32.xlu0 %v3201, 127
      %v3227 = vpop.permute.xlu0 %3226
      %3228 = vrot.lane.b32.xlu0 %v3202, 127
      %v3229 = vpop.permute.xlu0 %3228
      %v3238 = vrot.slane %v3219, 4
      %v3239 = vsel %vm324, %v3238, %v3215
      %v3241 = vunpack.c.l.s4 1983009808
      %v3242 = vunpack.c.0.s8 %v3241
      %v3243 = vperm.slane %v3239, %v3242
      %v3244 = vrot.slane %v3221, 4
      %v3245 = vsel %vm324, %v3244, %v3217
      %v3247 = vunpack.c.l.s4 1983009808
      %v3248 = vunpack.c.0.s8 %v3247
      %v3249 = vperm.slane %v3245, %v3248
      %v3250 = vrot.slane %v3227, 4
      %v3251 = vsel %vm324, %v3250, %v3223
      %v3253 = vunpack.c.l.s4 1983009808
      %v3254 = vunpack.c.0.s8 %v3253
      %v3255 = vperm.slane %v3251, %v3254
      %v3256 = vrot.slane %v3229, 4
      %v3257 = vsel %vm324, %v3256, %v3225
      %v3259 = vunpack.c.l.s4 1983009808
      %v3260 = vunpack.c.0.s8 %v3259
      %v3261 = vperm.slane %v3257, %v3260
      %v3262 = vrot.slane %v3249, 4
      %v3263 = vsel %vm324, %v3262, %v3243
      %v3264 = vrot.slane %v3243, 4
      %v3265 = vsel %vm324, %v3249, %v3264
      %v3267 = vunpack.c.l.s4 1934713408
      %v3268 = vunpack.c.0.s8 %v3267
      %v3269 = vperm.slane %v3263, %v3268
      %v3271 = vunpack.c.l.s4 1934713408
      %v3272 = vunpack.c.0.s8 %v3271
      %v3273 = vperm.slane %v3265, %v3272
      %v3274 = vrot.slane %v3261, 4
      %v3275 = vsel %vm324, %v3274, %v3255
      %v3276 = vrot.slane %v3255, 4
      %v3277 = vsel %vm324, %v3261, %v3276
      %v3279 = vunpack.c.l.s4 1934713408
      %v3280 = vunpack.c.0.s8 %v3279
      %v3281 = vperm.slane %v3275, %v3280
      %v3283 = vunpack.c.l.s4 1934713408
      %v3284 = vunpack.c.0.s8 %v3283
      %v3285 = vperm.slane %v3277, %v3284
      %v3286 = vrot.slane %v3281, 4
      %v3287 = vsel %vm324, %v3286, %v3269
      %v3288 = vrot.slane %v3269, 4
      %v3289 = vsel %vm324, %v3281, %v3288
      %v3290 = vrot.slane %v3285, 4
      %v3291 = vsel %vm324, %v3290, %v3273
      %v3292 = vrot.slane %v3273, 4
      %v3293 = vsel %vm324, %v3285, %v3292
      %3295 = vrot.lane.b32.xlu0 %v3289, 4
      %v3296 = vpop.permute.xlu0 %3295
      %3299 = vrot.lane.b32.xlu0 %v3291, 8
      %v3300 = vpop.permute.xlu0 %3299
      %3303 = vrot.lane.b32.xlu0 %v3293, 12
      %v3304 = vpop.permute.xlu0 %3303
      %v3306 = vsel %vm392, %v3287, %v3296
      %v3307 = vsel %vm394, %v3306, %v3300
      %v3308 = vsel %vm396, %v3307, %v3304
      %v3310 = vsel %vm394, %v3204, 0
      %v3313 = vsel %vm394, %v3205, 0
      %3315 = vmatpush.msra.mxu0 0.0
      %3316 = vmatpush.msra.mxu0 0.0
      %3317 = vmatpush.msra.mxu0 0.0
      %3318 = vmatpush.msra.mxu0 0.0
      %3319 = vmatpush.msra.mxu0 0.0
      %3320 = vmatpush.msra.mxu0 0.0
      %3321 = vmatpush.msra.mxu0 0.0
      %3322 = vmatpush.msra.mxu0 0.0
      %3323 = vmatpush.msra.mxu0 0.0
      %3324 = vmatpush.msra.mxu0 0.0
      %3325 = vmatpush.msra.mxu0 0.0
      %3326 = vmatpush.msra.mxu0 0.0
      %3327 = vmatpush.msra.mxu0 0.0
      %3328 = vmatpush.msra.mxu0 0.0
      %3329 = vmatpush.msra.mxu0 0.0
      %3330 = vmatpush.msra.mxu0 %v3308
      %3331 = vmatmul.f32.gmra.mxu0 %v3310
      %v3332 = vpop.f32.mrf.mxu0
      %v3333 = vadd.f32 0.0, %v3332
      %3334 = vmatmul.f32.gmra.mxu0 %v3313
      %v3335 = vpop.f32.mrf.mxu0
      %v3336 = vadd.f32 0.0, %v3335
      %3337 = vdwg.mxu0
      %v3339 = vsel %vm394, %v3122, 0
      %v3342 = vsel %vm394, %v3123, 0
      %3344 = vmatpush.msra.mxu0 0.0
      %3345 = vmatpush.msra.mxu0 0.0
      %3346 = vmatpush.msra.mxu0 0.0
      %3347 = vmatpush.msra.mxu0 0.0
      %3348 = vmatpush.msra.mxu0 0.0
      %3349 = vmatpush.msra.mxu0 0.0
      %3350 = vmatpush.msra.mxu0 0.0
      %3351 = vmatpush.msra.mxu0 0.0
      %3352 = vmatpush.msra.mxu0 0.0
      %3353 = vmatpush.msra.mxu0 0.0
      %3354 = vmatpush.msra.mxu0 0.0
      %3355 = vmatpush.msra.mxu0 0.0
      %3356 = vmatpush.msra.mxu0 0.0
      %3357 = vmatpush.msra.mxu0 0.0
      %3358 = vmatpush.msra.mxu0 0.0
      %3359 = vmatpush.msra.mxu0 %v3194
      %3360 = vmatmul.f32.gmra.mxu0 %v3339
      %v3361 = vpop.f32.mrf.mxu0
      %v3362 = vadd.f32 %v3333, %v3361
      %3363 = vmatmul.f32.gmra.mxu0 %v3342
      %v3364 = vpop.f32.mrf.mxu0
      %v3365 = vadd.f32 %v3336, %v3364
      %3366 = vdwg.mxu0
      %v3367 = vld [vmem:[%s3105] sm:$0xf]
      %v3368 = vld [vmem:[%s3105 + $0x8] sm:$0xf]
      %v3369 = vld [vmem:[%s3105 + $0x10] sm:$0xf]
      %v3370 = vld [vmem:[%s3105 + $0x18] sm:$0xf]
      %v3371 = vld [vmem:[%s3105 + $0x20] sm:$0xf]
      %v3372 = vld [vmem:[%s3105 + $0x28] sm:$0xf]
      %v3373 = vld [vmem:[%s3105 + $0x30] sm:$0xf]
      %v3374 = vld [vmem:[%s3105 + $0x38] sm:$0xf]
      %s3375 = scalar_lea.vmem %s3, 32
      %v3376 = vld [vmem:[%s3375] sm:$0xff]
      %v3377 = vld [vmem:[%s3375 + $0x8] sm:$0xff]
      %3386 = vrot.lane.b32.xlu0 %v3367, 127
      %v3387 = vpop.permute.xlu0 %3386
      %3388 = vrot.lane.b32.xlu0 %v3368, 127
      %v3389 = vpop.permute.xlu0 %3388
      %3390 = vrot.lane.b32.xlu0 %v3369, 127
      %v3391 = vpop.permute.xlu0 %3390
      %3392 = vrot.lane.b32.xlu0 %v3370, 127
      %v3393 = vpop.permute.xlu0 %3392
      %3394 = vrot.lane.b32.xlu0 %v3371, 127
      %v3395 = vpop.permute.xlu0 %3394
      %3396 = vrot.lane.b32.xlu0 %v3372, 127
      %v3397 = vpop.permute.xlu0 %3396
      %3398 = vrot.lane.b32.xlu0 %v3373, 127
      %v3399 = vpop.permute.xlu0 %3398
      %3400 = vrot.lane.b32.xlu0 %v3374, 127
      %v3401 = vpop.permute.xlu0 %3400
      %v3410 = vrot.slane %v3391, 4
      %v3411 = vsel %vm324, %v3410, %v3387
      %v3413 = vunpack.c.l.s4 1983009808
      %v3414 = vunpack.c.0.s8 %v3413
      %v3415 = vperm.slane %v3411, %v3414
      %v3416 = vrot.slane %v3393, 4
      %v3417 = vsel %vm324, %v3416, %v3389
      %v3419 = vunpack.c.l.s4 1983009808
      %v3420 = vunpack.c.0.s8 %v3419
      %v3421 = vperm.slane %v3417, %v3420
      %v3422 = vrot.slane %v3399, 4
      %v3423 = vsel %vm324, %v3422, %v3395
      %v3425 = vunpack.c.l.s4 1983009808
      %v3426 = vunpack.c.0.s8 %v3425
      %v3427 = vperm.slane %v3423, %v3426
      %v3428 = vrot.slane %v3401, 4
      %v3429 = vsel %vm324, %v3428, %v3397
      %v3431 = vunpack.c.l.s4 1983009808
      %v3432 = vunpack.c.0.s8 %v3431
      %v3433 = vperm.slane %v3429, %v3432
      %v3434 = vrot.slane %v3421, 4
      %v3435 = vsel %vm324, %v3434, %v3415
      %v3436 = vrot.slane %v3415, 4
      %v3437 = vsel %vm324, %v3421, %v3436
      %v3439 = vunpack.c.l.s4 1934713408
      %v3440 = vunpack.c.0.s8 %v3439
      %v3441 = vperm.slane %v3435, %v3440
      %v3443 = vunpack.c.l.s4 1934713408
      %v3444 = vunpack.c.0.s8 %v3443
      %v3445 = vperm.slane %v3437, %v3444
      %v3446 = vrot.slane %v3433, 4
      %v3447 = vsel %vm324, %v3446, %v3427
      %v3448 = vrot.slane %v3427, 4
      %v3449 = vsel %vm324, %v3433, %v3448
      %v3451 = vunpack.c.l.s4 1934713408
      %v3452 = vunpack.c.0.s8 %v3451
      %v3453 = vperm.slane %v3447, %v3452
      %v3455 = vunpack.c.l.s4 1934713408
      %v3456 = vunpack.c.0.s8 %v3455
      %v3457 = vperm.slane %v3449, %v3456
      %v3458 = vrot.slane %v3453, 4
      %v3459 = vsel %vm324, %v3458, %v3441
      %v3460 = vrot.slane %v3441, 4
      %v3461 = vsel %vm324, %v3453, %v3460
      %v3462 = vrot.slane %v3457, 4
      %v3463 = vsel %vm324, %v3462, %v3445
      %v3464 = vrot.slane %v3445, 4
      %v3465 = vsel %vm324, %v3457, %v3464
      %3467 = vrot.lane.b32.xlu0 %v3461, 4
      %v3468 = vpop.permute.xlu0 %3467
      %3471 = vrot.lane.b32.xlu0 %v3463, 8
      %v3472 = vpop.permute.xlu0 %3471
      %3475 = vrot.lane.b32.xlu0 %v3465, 12
      %v3476 = vpop.permute.xlu0 %3475
      %v3478 = vsel %vm392, %v3459, %v3468
      %v3479 = vsel %vm394, %v3478, %v3472
      %v3480 = vsel %vm396, %v3479, %v3476
      %v3482 = vsel %vm394, %v3376, 0
      %v3485 = vsel %vm394, %v3377, 0
      %3487 = vmatpush.msra.mxu0 0.0
      %3488 = vmatpush.msra.mxu0 0.0
      %3489 = vmatpush.msra.mxu0 0.0
      %3490 = vmatpush.msra.mxu0 0.0
      %3491 = vmatpush.msra.mxu0 0.0
      %3492 = vmatpush.msra.mxu0 0.0
      %3493 = vmatpush.msra.mxu0 0.0
      %3494 = vmatpush.msra.mxu0 0.0
      %3495 = vmatpush.msra.mxu0 0.0
      %3496 = vmatpush.msra.mxu0 0.0
      %3497 = vmatpush.msra.mxu0 0.0
      %3498 = vmatpush.msra.mxu0 0.0
      %3499 = vmatpush.msra.mxu0 0.0
      %3500 = vmatpush.msra.mxu0 0.0
      %3501 = vmatpush.msra.mxu0 0.0
      %3502 = vmatpush.msra.mxu0 %v3480
      %3503 = vmatmul.f32.gmra.mxu0 %v3482
      %v3504 = vpop.f32.mrf.mxu0
      %v3505 = vadd.f32 0.0, %v3504
      %3506 = vmatmul.f32.gmra.mxu0 %v3485
      %v3507 = vpop.f32.mrf.mxu0
      %v3508 = vadd.f32 0.0, %v3507
      %3509 = vdwg.mxu0
      %v3510 = vadd.f32 %v3362, %v3505
      %v3511 = vadd.f32 %v3365, %v3508
      %v3512 = vld [vmem:[%s2063 + $0x1] sm:$0xf]
      %v3513 = vld [vmem:[%s2063 + $0x9] sm:$0xf]
      %v3514 = vld [vmem:[%s2063 + $0x11] sm:$0xf]
      %v3515 = vld [vmem:[%s2063 + $0x19] sm:$0xf]
      %v3516 = vld [vmem:[%s2063 + $0x21] sm:$0xf]
      %v3517 = vld [vmem:[%s2063 + $0x29] sm:$0xf]
      %v3518 = vld [vmem:[%s2063 + $0x31] sm:$0xf]
      %v3519 = vld [vmem:[%s2063 + $0x39] sm:$0xf]
      %s3520 = scalar_lea.vmem %s3, 48
      %v3521 = vld [vmem:[%s3520] sm:$0xff]
      %v3522 = vld [vmem:[%s3520 + $0x8] sm:$0xff]
      %v3523 = vrot.slane %v3514, 4
      %v3524 = vsel %vm324, %v3523, %v3512
      %v3526 = vunpack.c.l.s4 1983009808
      %v3527 = vunpack.c.0.s8 %v3526
      %v3528 = vperm.slane %v3524, %v3527
      %v3529 = vrot.slane %v3515, 4
      %v3530 = vsel %vm324, %v3529, %v3513
      %v3532 = vunpack.c.l.s4 1983009808
      %v3533 = vunpack.c.0.s8 %v3532
      %v3534 = vperm.slane %v3530, %v3533
      %v3535 = vrot.slane %v3518, 4
      %v3536 = vsel %vm324, %v3535, %v3516
      %v3538 = vunpack.c.l.s4 1983009808
      %v3539 = vunpack.c.0.s8 %v3538
      %v3540 = vperm.slane %v3536, %v3539
      %v3541 = vrot.slane %v3519, 4
      %v3542 = vsel %vm324, %v3541, %v3517
      %v3544 = vunpack.c.l.s4 1983009808
      %v3545 = vunpack.c.0.s8 %v3544
      %v3546 = vperm.slane %v3542, %v3545
      %v3547 = vrot.slane %v3534, 4
      %v3548 = vsel %vm324, %v3547, %v3528
      %v3549 = vrot.slane %v3528, 4
      %v3550 = vsel %vm324, %v3534, %v3549
      %v3552 = vunpack.c.l.s4 1934713408
      %v3553 = vunpack.c.0.s8 %v3552
      %v3554 = vperm.slane %v3548, %v3553
      %v3556 = vunpack.c.l.s4 1934713408
      %v3557 = vunpack.c.0.s8 %v3556
      %v3558 = vperm.slane %v3550, %v3557
      %v3559 = vrot.slane %v3546, 4
      %v3560 = vsel %vm324, %v3559, %v3540
      %v3561 = vrot.slane %v3540, 4
      %v3562 = vsel %vm324, %v3546, %v3561
      %v3564 = vunpack.c.l.s4 1934713408
      %v3565 = vunpack.c.0.s8 %v3564
      %v3566 = vperm.slane %v3560, %v3565
      %v3568 = vunpack.c.l.s4 1934713408
      %v3569 = vunpack.c.0.s8 %v3568
      %v3570 = vperm.slane %v3562, %v3569
      %v3571 = vrot.slane %v3566, 4
      %v3572 = vsel %vm324, %v3571, %v3554
      %v3573 = vrot.slane %v3554, 4
      %v3574 = vsel %vm324, %v3566, %v3573
      %v3575 = vrot.slane %v3570, 4
      %v3576 = vsel %vm324, %v3575, %v3558
      %v3577 = vrot.slane %v3558, 4
      %v3578 = vsel %vm324, %v3570, %v3577
      %3580 = vrot.lane.b32.xlu0 %v3574, 4
      %v3581 = vpop.permute.xlu0 %3580
      %3584 = vrot.lane.b32.xlu0 %v3576, 8
      %v3585 = vpop.permute.xlu0 %3584
      %3588 = vrot.lane.b32.xlu0 %v3578, 12
      %v3589 = vpop.permute.xlu0 %3588
      %v3591 = vsel %vm392, %v3572, %v3581
      %v3592 = vsel %vm394, %v3591, %v3585
      %v3593 = vsel %vm396, %v3592, %v3589
      %v3595 = vsel %vm394, %v3521, 0
      %v3598 = vsel %vm394, %v3522, 0
      %3600 = vmatpush.msra.mxu0 0.0
      %3601 = vmatpush.msra.mxu0 0.0
      %3602 = vmatpush.msra.mxu0 0.0
      %3603 = vmatpush.msra.mxu0 0.0
      %3604 = vmatpush.msra.mxu0 0.0
      %3605 = vmatpush.msra.mxu0 0.0
      %3606 = vmatpush.msra.mxu0 0.0
      %3607 = vmatpush.msra.mxu0 0.0
      %3608 = vmatpush.msra.mxu0 0.0
      %3609 = vmatpush.msra.mxu0 0.0
      %3610 = vmatpush.msra.mxu0 0.0
      %3611 = vmatpush.msra.mxu0 0.0
      %3612 = vmatpush.msra.mxu0 0.0
      %3613 = vmatpush.msra.mxu0 0.0
      %3614 = vmatpush.msra.mxu0 0.0
      %3615 = vmatpush.msra.mxu0 %v3593
      %3616 = vmatmul.f32.gmra.mxu0 %v3595
      %v3617 = vpop.f32.mrf.mxu0
      %v3618 = vadd.f32 0.0, %v3617
      %3619 = vmatmul.f32.gmra.mxu0 %v3598
      %v3620 = vpop.f32.mrf.mxu0
      %v3621 = vadd.f32 0.0, %v3620
      %3622 = vdwg.mxu0
      %v3623 = vadd.f32 %v3510, %v3618
      %v3624 = vadd.f32 %v3511, %v3621
      %v3625 = vld [vmem:[#allocation2 + $0x1] sm:$0xf]
      %v3626 = vld [vmem:[#allocation2 + $0x9] sm:$0xf]
      %v3627 = vld [vmem:[#allocation2 + $0x11] sm:$0xf]
      %v3628 = vld [vmem:[#allocation2 + $0x19] sm:$0xf]
      %v3629 = vld [vmem:[#allocation2 + $0x21] sm:$0xf]
      %v3630 = vld [vmem:[#allocation2 + $0x29] sm:$0xf]
      %v3631 = vld [vmem:[#allocation2 + $0x31] sm:$0xf]
      %v3632 = vld [vmem:[#allocation2 + $0x39] sm:$0xf]
      %s3633 = scalar_lea.vmem %s3, 64
      %v3634 = vld [vmem:[%s3633] sm:$0xff]
      %v3635 = vld [vmem:[%s3633 + $0x8] sm:$0xff]
      %3644 = vrot.lane.b32.xlu0 %v3625, 127
      %v3645 = vpop.permute.xlu0 %3644
      %3646 = vrot.lane.b32.xlu0 %v3626, 127
      %v3647 = vpop.permute.xlu0 %3646
      %3648 = vrot.lane.b32.xlu0 %v3627, 127
      %v3649 = vpop.permute.xlu0 %3648
      %3650 = vrot.lane.b32.xlu0 %v3628, 127
      %v3651 = vpop.permute.xlu0 %3650
      %3652 = vrot.lane.b32.xlu0 %v3629, 127
      %v3653 = vpop.permute.xlu0 %3652
      %3654 = vrot.lane.b32.xlu0 %v3630, 127
      %v3655 = vpop.permute.xlu0 %3654
      %3656 = vrot.lane.b32.xlu0 %v3631, 127
      %v3657 = vpop.permute.xlu0 %3656
      %3658 = vrot.lane.b32.xlu0 %v3632, 127
      %v3659 = vpop.permute.xlu0 %3658
      %v3668 = vrot.slane %v3649, 4
      %v3669 = vsel %vm324, %v3668, %v3645
      %v3671 = vunpack.c.l.s4 1983009808
      %v3672 = vunpack.c.0.s8 %v3671
      %v3673 = vperm.slane %v3669, %v3672
      %v3674 = vrot.slane %v3651, 4
      %v3675 = vsel %vm324, %v3674, %v3647
      %v3677 = vunpack.c.l.s4 1983009808
      %v3678 = vunpack.c.0.s8 %v3677
      %v3679 = vperm.slane %v3675, %v3678
      %v3680 = vrot.slane %v3657, 4
      %v3681 = vsel %vm324, %v3680, %v3653
      %v3683 = vunpack.c.l.s4 1983009808
      %v3684 = vunpack.c.0.s8 %v3683
      %v3685 = vperm.slane %v3681, %v3684
      %v3686 = vrot.slane %v3659, 4
      %v3687 = vsel %vm324, %v3686, %v3655
      %v3689 = vunpack.c.l.s4 1983009808
      %v3690 = vunpack.c.0.s8 %v3689
      %v3691 = vperm.slane %v3687, %v3690
      %v3692 = vrot.slane %v3679, 4
      %v3693 = vsel %vm324, %v3692, %v3673
      %v3694 = vrot.slane %v3673, 4
      %v3695 = vsel %vm324, %v3679, %v3694
      %v3697 = vunpack.c.l.s4 1934713408
      %v3698 = vunpack.c.0.s8 %v3697
      %v3699 = vperm.slane %v3693, %v3698
      %v3701 = vunpack.c.l.s4 1934713408
      %v3702 = vunpack.c.0.s8 %v3701
      %v3703 = vperm.slane %v3695, %v3702
      %v3704 = vrot.slane %v3691, 4
      %v3705 = vsel %vm324, %v3704, %v3685
      %v3706 = vrot.slane %v3685, 4
      %v3707 = vsel %vm324, %v3691, %v3706
      %v3709 = vunpack.c.l.s4 1934713408
      %v3710 = vunpack.c.0.s8 %v3709
      %v3711 = vperm.slane %v3705, %v3710
      %v3713 = vunpack.c.l.s4 1934713408
      %v3714 = vunpack.c.0.s8 %v3713
      %v3715 = vperm.slane %v3707, %v3714
      %v3716 = vrot.slane %v3711, 4
      %v3717 = vsel %vm324, %v3716, %v3699
      %v3718 = vrot.slane %v3699, 4
      %v3719 = vsel %vm324, %v3711, %v3718
      %v3720 = vrot.slane %v3715, 4
      %v3721 = vsel %vm324, %v3720, %v3703
      %v3722 = vrot.slane %v3703, 4
      %v3723 = vsel %vm324, %v3715, %v3722
      %3725 = vrot.lane.b32.xlu0 %v3719, 4
      %v3726 = vpop.permute.xlu0 %3725
      %3729 = vrot.lane.b32.xlu0 %v3721, 8
      %v3730 = vpop.permute.xlu0 %3729
      %3733 = vrot.lane.b32.xlu0 %v3723, 12
      %v3734 = vpop.permute.xlu0 %3733
      %v3736 = vsel %vm392, %v3717, %v3726
      %v3737 = vsel %vm394, %v3736, %v3730
      %v3738 = vsel %vm396, %v3737, %v3734
      %v3740 = vsel %vm394, %v3634, 0
      %v3743 = vsel %vm394, %v3635, 0
      %3745 = vmatpush.msra.mxu0 0.0
      %3746 = vmatpush.msra.mxu0 0.0
      %3747 = vmatpush.msra.mxu0 0.0
      %3748 = vmatpush.msra.mxu0 0.0
      %3749 = vmatpush.msra.mxu0 0.0
      %3750 = vmatpush.msra.mxu0 0.0
      %3751 = vmatpush.msra.mxu0 0.0
      %3752 = vmatpush.msra.mxu0 0.0
      %3753 = vmatpush.msra.mxu0 0.0
      %3754 = vmatpush.msra.mxu0 0.0
      %3755 = vmatpush.msra.mxu0 0.0
      %3756 = vmatpush.msra.mxu0 0.0
      %3757 = vmatpush.msra.mxu0 0.0
      %3758 = vmatpush.msra.mxu0 0.0
      %3759 = vmatpush.msra.mxu0 0.0
      %3760 = vmatpush.msra.mxu0 %v3738
      %3761 = vmatmul.f32.gmra.mxu0 %v3740
      %v3762 = vpop.f32.mrf.mxu0
      %v3763 = vadd.f32 0.0, %v3762
      %3764 = vmatmul.f32.gmra.mxu0 %v3743
      %v3765 = vpop.f32.mrf.mxu0
      %v3766 = vadd.f32 0.0, %v3765
      %3767 = vdwg.mxu0
      %v3768 = vadd.f32 %v3623, %v3763
      %v3769 = vadd.f32 %v3624, %v3766
      %v3770 = vld [vmem:[%s2063 + $0x1] sm:$0xf]
      %v3771 = vld [vmem:[%s2063 + $0x9] sm:$0xf]
      %v3772 = vld [vmem:[%s2063 + $0x11] sm:$0xf]
      %v3773 = vld [vmem:[%s2063 + $0x19] sm:$0xf]
      %v3774 = vld [vmem:[%s2063 + $0x21] sm:$0xf]
      %v3775 = vld [vmem:[%s2063 + $0x29] sm:$0xf]
      %v3776 = vld [vmem:[%s2063 + $0x31] sm:$0xf]
      %v3777 = vld [vmem:[%s2063 + $0x39] sm:$0xf]
      %s3778 = scalar_lea.vmem %s3, 80
      %v3779 = vld [vmem:[%s3778] sm:$0xff]
      %v3780 = vld [vmem:[%s3778 + $0x8] sm:$0xff]
      %3789 = vrot.lane.b32.xlu0 %v3770, 127
      %v3790 = vpop.permute.xlu0 %3789
      %3791 = vrot.lane.b32.xlu0 %v3771, 127
      %v3792 = vpop.permute.xlu0 %3791
      %3793 = vrot.lane.b32.xlu0 %v3772, 127
      %v3794 = vpop.permute.xlu0 %3793
      %3795 = vrot.lane.b32.xlu0 %v3773, 127
      %v3796 = vpop.permute.xlu0 %3795
      %3797 = vrot.lane.b32.xlu0 %v3774, 127
      %v3798 = vpop.permute.xlu0 %3797
      %3799 = vrot.lane.b32.xlu0 %v3775, 127
      %v3800 = vpop.permute.xlu0 %3799
      %3801 = vrot.lane.b32.xlu0 %v3776, 127
      %v3802 = vpop.permute.xlu0 %3801
      %3803 = vrot.lane.b32.xlu0 %v3777, 127
      %v3804 = vpop.permute.xlu0 %3803
      %v3813 = vrot.slane %v3794, 4
      %v3814 = vsel %vm324, %v3813, %v3790
      %v3816 = vunpack.c.l.s4 1983009808
      %v3817 = vunpack.c.0.s8 %v3816
      %v3818 = vperm.slane %v3814, %v3817
      %v3819 = vrot.slane %v3796, 4
      %v3820 = vsel %vm324, %v3819, %v3792
      %v3822 = vunpack.c.l.s4 1983009808
      %v3823 = vunpack.c.0.s8 %v3822
      %v3824 = vperm.slane %v3820, %v3823
      %v3825 = vrot.slane %v3802, 4
      %v3826 = vsel %vm324, %v3825, %v3798
      %v3828 = vunpack.c.l.s4 1983009808
      %v3829 = vunpack.c.0.s8 %v3828
      %v3830 = vperm.slane %v3826, %v3829
      %v3831 = vrot.slane %v3804, 4
      %v3832 = vsel %vm324, %v3831, %v3800
      %v3834 = vunpack.c.l.s4 1983009808
      %v3835 = vunpack.c.0.s8 %v3834
      %v3836 = vperm.slane %v3832, %v3835
      %v3837 = vrot.slane %v3824, 4
      %v3838 = vsel %vm324, %v3837, %v3818
      %v3839 = vrot.slane %v3818, 4
      %v3840 = vsel %vm324, %v3824, %v3839
      %v3842 = vunpack.c.l.s4 1934713408
      %v3843 = vunpack.c.0.s8 %v3842
      %v3844 = vperm.slane %v3838, %v3843
      %v3846 = vunpack.c.l.s4 1934713408
      %v3847 = vunpack.c.0.s8 %v3846
      %v3848 = vperm.slane %v3840, %v3847
      %v3849 = vrot.slane %v3836, 4
      %v3850 = vsel %vm324, %v3849, %v3830
      %v3851 = vrot.slane %v3830, 4
      %v3852 = vsel %vm324, %v3836, %v3851
      %v3854 = vunpack.c.l.s4 1934713408
      %v3855 = vunpack.c.0.s8 %v3854
      %v3856 = vperm.slane %v3850, %v3855
      %v3858 = vunpack.c.l.s4 1934713408
      %v3859 = vunpack.c.0.s8 %v3858
      %v3860 = vperm.slane %v3852, %v3859
      %v3861 = vrot.slane %v3856, 4
      %v3862 = vsel %vm324, %v3861, %v3844
      %v3863 = vrot.slane %v3844, 4
      %v3864 = vsel %vm324, %v3856, %v3863
      %v3865 = vrot.slane %v3860, 4
      %v3866 = vsel %vm324, %v3865, %v3848
      %v3867 = vrot.slane %v3848, 4
      %v3868 = vsel %vm324, %v3860, %v3867
      %3870 = vrot.lane.b32.xlu0 %v3864, 4
      %v3871 = vpop.permute.xlu0 %3870
      %3874 = vrot.lane.b32.xlu0 %v3866, 8
      %v3875 = vpop.permute.xlu0 %3874
      %3878 = vrot.lane.b32.xlu0 %v3868, 12
      %v3879 = vpop.permute.xlu0 %3878
      %v3881 = vsel %vm392, %v3862, %v3871
      %v3882 = vsel %vm394, %v3881, %v3875
      %v3883 = vsel %vm396, %v3882, %v3879
      %v3885 = vsel %vm394, %v3779, 0
      %v3888 = vsel %vm394, %v3780, 0
      %3890 = vmatpush.msra.mxu0 0.0
      %3891 = vmatpush.msra.mxu0 0.0
      %3892 = vmatpush.msra.mxu0 0.0
      %3893 = vmatpush.msra.mxu0 0.0
      %3894 = vmatpush.msra.mxu0 0.0
      %3895 = vmatpush.msra.mxu0 0.0
      %3896 = vmatpush.msra.mxu0 0.0
      %3897 = vmatpush.msra.mxu0 0.0
      %3898 = vmatpush.msra.mxu0 0.0
      %3899 = vmatpush.msra.mxu0 0.0
      %3900 = vmatpush.msra.mxu0 0.0
      %3901 = vmatpush.msra.mxu0 0.0
      %3902 = vmatpush.msra.mxu0 0.0
      %3903 = vmatpush.msra.mxu0 0.0
      %3904 = vmatpush.msra.mxu0 0.0
      %3905 = vmatpush.msra.mxu0 %v3883
      %3906 = vmatmul.f32.gmra.mxu0 %v3885
      %v3907 = vpop.f32.mrf.mxu0
      %v3908 = vadd.f32 0.0, %v3907
      %3909 = vmatmul.f32.gmra.mxu0 %v3888
      %v3910 = vpop.f32.mrf.mxu0
      %v3911 = vadd.f32 0.0, %v3910
      %3912 = vdwg.mxu0
      %v3913 = vadd.f32 %v3768, %v3908
      %v3914 = vadd.f32 %v3769, %v3911
      %v3915 = vld [vmem:[%s3105 + $0x1] sm:$0xf]
      %v3916 = vld [vmem:[%s3105 + $0x9] sm:$0xf]
      %v3917 = vld [vmem:[%s3105 + $0x11] sm:$0xf]
      %v3918 = vld [vmem:[%s3105 + $0x19] sm:$0xf]
      %v3919 = vld [vmem:[%s3105 + $0x21] sm:$0xf]
      %v3920 = vld [vmem:[%s3105 + $0x29] sm:$0xf]
      %v3921 = vld [vmem:[%s3105 + $0x31] sm:$0xf]
      %v3922 = vld [vmem:[%s3105 + $0x39] sm:$0xf]
      %s3923 = scalar_lea.vmem %s3, 96
      %v3924 = vld [vmem:[%s3923] sm:$0xff]
      %v3925 = vld [vmem:[%s3923 + $0x8] sm:$0xff]
      %v3926 = vrot.slane %v3917, 4
      %v3927 = vsel %vm324, %v3926, %v3915
      %v3929 = vunpack.c.l.s4 1983009808
      %v3930 = vunpack.c.0.s8 %v3929
      %v3931 = vperm.slane %v3927, %v3930
      %v3932 = vrot.slane %v3918, 4
      %v3933 = vsel %vm324, %v3932, %v3916
      %v3935 = vunpack.c.l.s4 1983009808
      %v3936 = vunpack.c.0.s8 %v3935
      %v3937 = vperm.slane %v3933, %v3936
      %v3938 = vrot.slane %v3921, 4
      %v3939 = vsel %vm324, %v3938, %v3919
      %v3941 = vunpack.c.l.s4 1983009808
      %v3942 = vunpack.c.0.s8 %v3941
      %v3943 = vperm.slane %v3939, %v3942
      %v3944 = vrot.slane %v3922, 4
      %v3945 = vsel %vm324, %v3944, %v3920
      %v3947 = vunpack.c.l.s4 1983009808
      %v3948 = vunpack.c.0.s8 %v3947
      %v3949 = vperm.slane %v3945, %v3948
      %v3950 = vrot.slane %v3937, 4
      %v3951 = vsel %vm324, %v3950, %v3931
      %v3952 = vrot.slane %v3931, 4
      %v3953 = vsel %vm324, %v3937, %v3952
      %v3955 = vunpack.c.l.s4 1934713408
      %v3956 = vunpack.c.0.s8 %v3955
      %v3957 = vperm.slane %v3951, %v3956
      %v3959 = vunpack.c.l.s4 1934713408
      %v3960 = vunpack.c.0.s8 %v3959
      %v3961 = vperm.slane %v3953, %v3960
      %v3962 = vrot.slane %v3949, 4
      %v3963 = vsel %vm324, %v3962, %v3943
      %v3964 = vrot.slane %v3943, 4
      %v3965 = vsel %vm324, %v3949, %v3964
      %v3967 = vunpack.c.l.s4 1934713408
      %v3968 = vunpack.c.0.s8 %v3967
      %v3969 = vperm.slane %v3963, %v3968
      %v3971 = vunpack.c.l.s4 1934713408
      %v3972 = vunpack.c.0.s8 %v3971
      %v3973 = vperm.slane %v3965, %v3972
      %v3974 = vrot.slane %v3969, 4
      %v3975 = vsel %vm324, %v3974, %v3957
      %v3976 = vrot.slane %v3957, 4
      %v3977 = vsel %vm324, %v3969, %v3976
      %v3978 = vrot.slane %v3973, 4
      %v3979 = vsel %vm324, %v3978, %v3961
      %v3980 = vrot.slane %v3961, 4
      %v3981 = vsel %vm324, %v3973, %v3980
      %3983 = vrot.lane.b32.xlu0 %v3977, 4
      %v3984 = vpop.permute.xlu0 %3983
      %3987 = vrot.lane.b32.xlu0 %v3979, 8
      %v3988 = vpop.permute.xlu0 %3987
      %3991 = vrot.lane.b32.xlu0 %v3981, 12
      %v3992 = vpop.permute.xlu0 %3991
      %v3994 = vsel %vm392, %v3975, %v3984
      %v3995 = vsel %vm394, %v3994, %v3988
      %v3996 = vsel %vm396, %v3995, %v3992
      %v3998 = vsel %vm394, %v3924, 0
      %v4001 = vsel %vm394, %v3925, 0
      %4003 = vmatpush.msra.mxu0 0.0
      %4004 = vmatpush.msra.mxu0 0.0
      %4005 = vmatpush.msra.mxu0 0.0
      %4006 = vmatpush.msra.mxu0 0.0
      %4007 = vmatpush.msra.mxu0 0.0
      %4008 = vmatpush.msra.mxu0 0.0
      %4009 = vmatpush.msra.mxu0 0.0
      %4010 = vmatpush.msra.mxu0 0.0
      %4011 = vmatpush.msra.mxu0 0.0
      %4012 = vmatpush.msra.mxu0 0.0
      %4013 = vmatpush.msra.mxu0 0.0
      %4014 = vmatpush.msra.mxu0 0.0
      %4015 = vmatpush.msra.mxu0 0.0
      %4016 = vmatpush.msra.mxu0 0.0
      %4017 = vmatpush.msra.mxu0 0.0
      %4018 = vmatpush.msra.mxu0 %v3996
      %4019 = vmatmul.f32.gmra.mxu0 %v3998
      %v4020 = vpop.f32.mrf.mxu0
      %v4021 = vadd.f32 0.0, %v4020
      %4022 = vmatmul.f32.gmra.mxu0 %v4001
      %v4023 = vpop.f32.mrf.mxu0
      %v4024 = vadd.f32 0.0, %v4023
      %4025 = vdwg.mxu0
      %v4026 = vadd.f32 %v3913, %v4021
      %v4027 = vadd.f32 %v3914, %v4024
      %v4028 = vld [vmem:[%s2671 + $0x1] sm:$0xf]
      %v4029 = vld [vmem:[%s2671 + $0x9] sm:$0xf]
      %v4030 = vld [vmem:[%s2671 + $0x11] sm:$0xf]
      %v4031 = vld [vmem:[%s2671 + $0x19] sm:$0xf]
      %v4032 = vld [vmem:[%s2671 + $0x21] sm:$0xf]
      %v4033 = vld [vmem:[%s2671 + $0x29] sm:$0xf]
      %v4034 = vld [vmem:[%s2671 + $0x31] sm:$0xf]
      %v4035 = vld [vmem:[%s2671 + $0x39] sm:$0xf]
      %s4036 = scalar_lea.vmem %s3, 112
      %v4037 = vld [vmem:[%s4036] sm:$0xff]
      %v4038 = vld [vmem:[%s4036 + $0x8] sm:$0xff]
      %4047 = vrot.lane.b32.xlu0 %v4028, 127
      %v4048 = vpop.permute.xlu0 %4047
      %4049 = vrot.lane.b32.xlu0 %v4029, 127
      %v4050 = vpop.permute.xlu0 %4049
      %4051 = vrot.lane.b32.xlu0 %v4030, 127
      %v4052 = vpop.permute.xlu0 %4051
      %4053 = vrot.lane.b32.xlu0 %v4031, 127
      %v4054 = vpop.permute.xlu0 %4053
      %4055 = vrot.lane.b32.xlu0 %v4032, 127
      %v4056 = vpop.permute.xlu0 %4055
      %4057 = vrot.lane.b32.xlu0 %v4033, 127
      %v4058 = vpop.permute.xlu0 %4057
      %4059 = vrot.lane.b32.xlu0 %v4034, 127
      %v4060 = vpop.permute.xlu0 %4059
      %4061 = vrot.lane.b32.xlu0 %v4035, 127
      %v4062 = vpop.permute.xlu0 %4061
      %v4071 = vrot.slane %v4052, 4
      %v4072 = vsel %vm324, %v4071, %v4048
      %v4074 = vunpack.c.l.s4 1983009808
      %v4075 = vunpack.c.0.s8 %v4074
      %v4076 = vperm.slane %v4072, %v4075
      %v4077 = vrot.slane %v4054, 4
      %v4078 = vsel %vm324, %v4077, %v4050
      %v4080 = vunpack.c.l.s4 1983009808
      %v4081 = vunpack.c.0.s8 %v4080
      %v4082 = vperm.slane %v4078, %v4081
      %v4083 = vrot.slane %v4060, 4
      %v4084 = vsel %vm324, %v4083, %v4056
      %v4086 = vunpack.c.l.s4 1983009808
      %v4087 = vunpack.c.0.s8 %v4086
      %v4088 = vperm.slane %v4084, %v4087
      %v4089 = vrot.slane %v4062, 4
      %v4090 = vsel %vm324, %v4089, %v4058
      %v4092 = vunpack.c.l.s4 1983009808
      %v4093 = vunpack.c.0.s8 %v4092
      %v4094 = vperm.slane %v4090, %v4093
      %v4095 = vrot.slane %v4082, 4
      %v4096 = vsel %vm324, %v4095, %v4076
      %v4097 = vrot.slane %v4076, 4
      %v4098 = vsel %vm324, %v4082, %v4097
      %v4100 = vunpack.c.l.s4 1934713408
      %v4101 = vunpack.c.0.s8 %v4100
      %v4102 = vperm.slane %v4096, %v4101
      %v4104 = vunpack.c.l.s4 1934713408
      %v4105 = vunpack.c.0.s8 %v4104
      %v4106 = vperm.slane %v4098, %v4105
      %v4107 = vrot.slane %v4094, 4
      %v4108 = vsel %vm324, %v4107, %v4088
      %v4109 = vrot.slane %v4088, 4
      %v4110 = vsel %vm324, %v4094, %v4109
      %v4112 = vunpack.c.l.s4 1934713408
      %v4113 = vunpack.c.0.s8 %v4112
      %v4114 = vperm.slane %v4108, %v4113
      %v4116 = vunpack.c.l.s4 1934713408
      %v4117 = vunpack.c.0.s8 %v4116
      %v4118 = vperm.slane %v4110, %v4117
      %v4119 = vrot.slane %v4114, 4
      %v4120 = vsel %vm324, %v4119, %v4102
      %v4121 = vrot.slane %v4102, 4
      %v4122 = vsel %vm324, %v4114, %v4121
      %v4123 = vrot.slane %v4118, 4
      %v4124 = vsel %vm324, %v4123, %v4106
      %v4125 = vrot.slane %v4106, 4
      %v4126 = vsel %vm324, %v4118, %v4125
      %4128 = vrot.lane.b32.xlu0 %v4122, 4
      %v4129 = vpop.permute.xlu0 %4128
      %4132 = vrot.lane.b32.xlu0 %v4124, 8
      %v4133 = vpop.permute.xlu0 %4132
      %4136 = vrot.lane.b32.xlu0 %v4126, 12
      %v4137 = vpop.permute.xlu0 %4136
      %v4139 = vsel %vm392, %v4120, %v4129
      %v4140 = vsel %vm394, %v4139, %v4133
      %v4141 = vsel %vm396, %v4140, %v4137
      %v4143 = vsel %vm394, %v4037, 0
      %v4146 = vsel %vm394, %v4038, 0
      %4148 = vmatpush.msra.mxu0 0.0
      %4149 = vmatpush.msra.mxu0 0.0
      %4150 = vmatpush.msra.mxu0 0.0
      %4151 = vmatpush.msra.mxu0 0.0
      %4152 = vmatpush.msra.mxu0 0.0
      %4153 = vmatpush.msra.mxu0 0.0
      %4154 = vmatpush.msra.mxu0 0.0
      %4155 = vmatpush.msra.mxu0 0.0
      %4156 = vmatpush.msra.mxu0 0.0
      %4157 = vmatpush.msra.mxu0 0.0
      %4158 = vmatpush.msra.mxu0 0.0
      %4159 = vmatpush.msra.mxu0 0.0
      %4160 = vmatpush.msra.mxu0 0.0
      %4161 = vmatpush.msra.mxu0 0.0
      %4162 = vmatpush.msra.mxu0 0.0
      %4163 = vmatpush.msra.mxu0 %v4141
      %4164 = vmatmul.f32.gmra.mxu0 %v4143
      %v4165 = vpop.f32.mrf.mxu0
      %v4166 = vadd.f32 0.0, %v4165
      %4167 = vmatmul.f32.gmra.mxu0 %v4146
      %v4168 = vpop.f32.mrf.mxu0
      %v4169 = vadd.f32 0.0, %v4168
      %4170 = vdwg.mxu0
      %v4171 = vadd.f32 %v4026, %v4166
      %v4172 = vadd.f32 %v4027, %v4169
      %v4173 = vld [vmem:[%s3105 + $0x1] sm:$0xf]
      %v4174 = vld [vmem:[%s3105 + $0x9] sm:$0xf]
      %v4175 = vld [vmem:[%s3105 + $0x11] sm:$0xf]
      %v4176 = vld [vmem:[%s3105 + $0x19] sm:$0xf]
      %v4177 = vld [vmem:[%s3105 + $0x21] sm:$0xf]
      %v4178 = vld [vmem:[%s3105 + $0x29] sm:$0xf]
      %v4179 = vld [vmem:[%s3105 + $0x31] sm:$0xf]
      %v4180 = vld [vmem:[%s3105 + $0x39] sm:$0xf]
      %s4181 = scalar_lea.vmem %s3, 128
      %v4182 = vld [vmem:[%s4181] sm:$0xff]
      %v4183 = vld [vmem:[%s4181 + $0x8] sm:$0xff]
      %4192 = vrot.lane.b32.xlu0 %v4173, 127
      %v4193 = vpop.permute.xlu0 %4192
      %4194 = vrot.lane.b32.xlu0 %v4174, 127
      %v4195 = vpop.permute.xlu0 %4194
      %4196 = vrot.lane.b32.xlu0 %v4175, 127
      %v4197 = vpop.permute.xlu0 %4196
      %4198 = vrot.lane.b32.xlu0 %v4176, 127
      %v4199 = vpop.permute.xlu0 %4198
      %4200 = vrot.lane.b32.xlu0 %v4177, 127
      %v4201 = vpop.permute.xlu0 %4200
      %4202 = vrot.lane.b32.xlu0 %v4178, 127
      %v4203 = vpop.permute.xlu0 %4202
      %4204 = vrot.lane.b32.xlu0 %v4179, 127
      %v4205 = vpop.permute.xlu0 %4204
      %4206 = vrot.lane.b32.xlu0 %v4180, 127
      %v4207 = vpop.permute.xlu0 %4206
      %v4216 = vrot.slane %v4197, 4
      %v4217 = vsel %vm324, %v4216, %v4193
      %v4219 = vunpack.c.l.s4 1983009808
      %v4220 = vunpack.c.0.s8 %v4219
      %v4221 = vperm.slane %v4217, %v4220
      %v4222 = vrot.slane %v4199, 4
      %v4223 = vsel %vm324, %v4222, %v4195
      %v4225 = vunpack.c.l.s4 1983009808
      %v4226 = vunpack.c.0.s8 %v4225
      %v4227 = vperm.slane %v4223, %v4226
      %v4228 = vrot.slane %v4205, 4
      %v4229 = vsel %vm324, %v4228, %v4201
      %v4231 = vunpack.c.l.s4 1983009808
      %v4232 = vunpack.c.0.s8 %v4231
      %v4233 = vperm.slane %v4229, %v4232
      %v4234 = vrot.slane %v4207, 4
      %v4235 = vsel %vm324, %v4234, %v4203
      %v4237 = vunpack.c.l.s4 1983009808
      %v4238 = vunpack.c.0.s8 %v4237
      %v4239 = vperm.slane %v4235, %v4238
      %v4240 = vrot.slane %v4227, 4
      %v4241 = vsel %vm324, %v4240, %v4221
      %v4242 = vrot.slane %v4221, 4
      %v4243 = vsel %vm324, %v4227, %v4242
      %v4245 = vunpack.c.l.s4 1934713408
      %v4246 = vunpack.c.0.s8 %v4245
      %v4247 = vperm.slane %v4241, %v4246
      %v4249 = vunpack.c.l.s4 1934713408
      %v4250 = vunpack.c.0.s8 %v4249
      %v4251 = vperm.slane %v4243, %v4250
      %v4252 = vrot.slane %v4239, 4
      %v4253 = vsel %vm324, %v4252, %v4233
      %v4254 = vrot.slane %v4233, 4
      %v4255 = vsel %vm324, %v4239, %v4254
      %v4257 = vunpack.c.l.s4 1934713408
      %v4258 = vunpack.c.0.s8 %v4257
      %v4259 = vperm.slane %v4253, %v4258
      %v4261 = vunpack.c.l.s4 1934713408
      %v4262 = vunpack.c.0.s8 %v4261
      %v4263 = vperm.slane %v4255, %v4262
      %v4264 = vrot.slane %v4259, 4
      %v4265 = vsel %vm324, %v4264, %v4247
      %v4266 = vrot.slane %v4247, 4
      %v4267 = vsel %vm324, %v4259, %v4266
      %v4268 = vrot.slane %v4263, 4
      %v4269 = vsel %vm324, %v4268, %v4251
      %v4270 = vrot.slane %v4251, 4
      %v4271 = vsel %vm324, %v4263, %v4270
      %4273 = vrot.lane.b32.xlu0 %v4267, 4
      %v4274 = vpop.permute.xlu0 %4273
      %4277 = vrot.lane.b32.xlu0 %v4269, 8
      %v4278 = vpop.permute.xlu0 %4277
      %4281 = vrot.lane.b32.xlu0 %v4271, 12
      %v4282 = vpop.permute.xlu0 %4281
      %v4284 = vsel %vm392, %v4265, %v4274
      %v4285 = vsel %vm394, %v4284, %v4278
      %v4286 = vsel %vm396, %v4285, %v4282
      %v4288 = vsel %vm394, %v4182, 0
      %v4291 = vsel %vm394, %v4183, 0
      %4293 = vmatpush.msra.mxu0 0.0
      %4294 = vmatpush.msra.mxu0 0.0
      %4295 = vmatpush.msra.mxu0 0.0
      %4296 = vmatpush.msra.mxu0 0.0
      %4297 = vmatpush.msra.mxu0 0.0
      %4298 = vmatpush.msra.mxu0 0.0
      %4299 = vmatpush.msra.mxu0 0.0
      %4300 = vmatpush.msra.mxu0 0.0
      %4301 = vmatpush.msra.mxu0 0.0
      %4302 = vmatpush.msra.mxu0 0.0
      %4303 = vmatpush.msra.mxu0 0.0
      %4304 = vmatpush.msra.mxu0 0.0
      %4305 = vmatpush.msra.mxu0 0.0
      %4306 = vmatpush.msra.mxu0 0.0
      %4307 = vmatpush.msra.mxu0 0.0
      %4308 = vmatpush.msra.mxu0 %v4286
      %4309 = vmatmul.f32.gmra.mxu0 %v4288
      %v4310 = vpop.f32.mrf.mxu0
      %v4311 = vadd.f32 0.0, %v4310
      %4312 = vmatmul.f32.gmra.mxu0 %v4291
      %v4313 = vpop.f32.mrf.mxu0
      %v4314 = vadd.f32 0.0, %v4313
      %4315 = vdwg.mxu0
      %v4316 = vadd.f32 %v4171, %v4311
      %v4317 = vadd.f32 %v4172, %v4314
      %v4318 = vld [vmem:[%s4] sm:$0xff]
      %v4319 = vld [vmem:[%s4 + $0x8] sm:$0xff]
      %4321 = vset.pattern.permute.xlu0 0
      %4322 = vperm.xlu0 %4321, %v4318
      %v4323 = vpop.permute.xlu0 %4322
      %4326 = vset.pattern.permute.xlu0 0
      %4327 = vperm.xlu0 %4326, %v4319
      %v4328 = vpop.permute.xlu0 %4327
      %v4330 = vadd.f32 %v4316, %v4323
      %v4331 = vadd.f32 %v4317, %v4328
      %v4332 = vmul.f32 %v4330, 0.2
      %v4333 = vmul.f32 %v4331, 0.2
      %v4334 = vmax.f32 %v4330, %v4332
      %v4335 = vmax.f32 %v4331, %v4333
      %4338 = vrot.lane.b32.xlu0 %v4334, 124
      %v4339 = vpop.permute.xlu0 %4338
      %4340 = vrot.lane.b32.xlu0 %v4335, 124
      %v4341 = vpop.permute.xlu0 %4340
      %4344 = vrot.lane.b32.xlu0 %v4334, 120
      %v4345 = vpop.permute.xlu0 %4344
      %4346 = vrot.lane.b32.xlu0 %v4335, 120
      %v4347 = vpop.permute.xlu0 %4346
      %4350 = vrot.lane.b32.xlu0 %v4334, 116
      %v4351 = vpop.permute.xlu0 %4350
      %4352 = vrot.lane.b32.xlu0 %v4335, 116
      %v4353 = vpop.permute.xlu0 %4352
      %v4356 = vrot.slane %v4345, 4
      %v4357 = vsel %vm324, %v4356, %v4334
      %v4358 = vrot.slane %v4334, 4
      %v4359 = vsel %vm324, %v4345, %v4358
      %v4361 = vunpack.c.l.s4 1983009808
      %v4362 = vunpack.c.0.s8 %v4361
      %v4363 = vperm.slane %v4357, %v4362
      %v4365 = vunpack.c.l.s4 1983009808
      %v4366 = vunpack.c.0.s8 %v4365
      %v4367 = vperm.slane %v4359, %v4366
      %v4368 = vrot.slane %v4351, 4
      %v4369 = vsel %vm324, %v4368, %v4339
      %v4370 = vrot.slane %v4339, 4
      %v4371 = vsel %vm324, %v4351, %v4370
      %v4373 = vunpack.c.l.s4 1983009808
      %v4374 = vunpack.c.0.s8 %v4373
      %v4375 = vperm.slane %v4369, %v4374
      %v4377 = vunpack.c.l.s4 1983009808
      %v4378 = vunpack.c.0.s8 %v4377
      %v4379 = vperm.slane %v4371, %v4378
      %v4380 = vrot.slane %v4375, 4
      %v4381 = vsel %vm324, %v4380, %v4363
      %v4382 = vrot.slane %v4363, 4
      %v4383 = vsel %vm324, %v4375, %v4382
      %v4385 = vunpack.c.l.s4 1934713408
      %v4386 = vunpack.c.0.s8 %v4385
      %v4387 = vperm.slane %v4381, %v4386
      %v4389 = vunpack.c.l.s4 1934713408
      %v4390 = vunpack.c.0.s8 %v4389
      %v4391 = vperm.slane %v4383, %v4390
      %v4392 = vrot.slane %v4379, 4
      %v4393 = vsel %vm324, %v4392, %v4367
      %v4394 = vrot.slane %v4367, 4
      %v4395 = vsel %vm324, %v4379, %v4394
      %v4397 = vunpack.c.l.s4 1934713408
      %v4398 = vunpack.c.0.s8 %v4397
      %v4399 = vperm.slane %v4393, %v4398
      %v4401 = vunpack.c.l.s4 1934713408
      %v4402 = vunpack.c.0.s8 %v4401
      %v4403 = vperm.slane %v4395, %v4402
      %v4404 = vrot.slane %v4387, 4
      %v4405 = vsel %vm324, 0.0, %v4404
      %v4406 = vrot.slane %v4391, 4
      %v4407 = vsel %vm324, 0.0, %v4406
      %v4408 = vrot.slane %v4399, 4
      %v4409 = vsel %vm324, 0.0, %v4408
      %v4410 = vrot.slane %v4403, 4
      %v4411 = vsel %vm324, 0.0, %v4410
      %v4412 = vrot.slane %v4347, 4
      %v4413 = vsel %vm324, %v4412, %v4335
      %v4414 = vrot.slane %v4335, 4
      %v4415 = vsel %vm324, %v4347, %v4414
      %v4417 = vunpack.c.l.s4 1983009808
      %v4418 = vunpack.c.0.s8 %v4417
      %v4419 = vperm.slane %v4413, %v4418
      %v4421 = vunpack.c.l.s4 1983009808
      %v4422 = vunpack.c.0.s8 %v4421
      %v4423 = vperm.slane %v4415, %v4422
      %v4424 = vrot.slane %v4353, 4
      %v4425 = vsel %vm324, %v4424, %v4341
      %v4426 = vrot.slane %v4341, 4
      %v4427 = vsel %vm324, %v4353, %v4426
      %v4429 = vunpack.c.l.s4 1983009808
      %v4430 = vunpack.c.0.s8 %v4429
      %v4431 = vperm.slane %v4425, %v4430
      %v4433 = vunpack.c.l.s4 1983009808
      %v4434 = vunpack.c.0.s8 %v4433
      %v4435 = vperm.slane %v4427, %v4434
      %v4436 = vrot.slane %v4431, 4
      %v4437 = vsel %vm324, %v4436, %v4419
      %v4438 = vrot.slane %v4419, 4
      %v4439 = vsel %vm324, %v4431, %v4438
      %v4441 = vunpack.c.l.s4 1934713408
      %v4442 = vunpack.c.0.s8 %v4441
      %v4443 = vperm.slane %v4437, %v4442
      %v4445 = vunpack.c.l.s4 1934713408
      %v4446 = vunpack.c.0.s8 %v4445
      %v4447 = vperm.slane %v4439, %v4446
      %v4448 = vrot.slane %v4435, 4
      %v4449 = vsel %vm324, %v4448, %v4423
      %v4450 = vrot.slane %v4423, 4
      %v4451 = vsel %vm324, %v4435, %v4450
      %v4453 = vunpack.c.l.s4 1934713408
      %v4454 = vunpack.c.0.s8 %v4453
      %v4455 = vperm.slane %v4449, %v4454
      %v4457 = vunpack.c.l.s4 1934713408
      %v4458 = vunpack.c.0.s8 %v4457
      %v4459 = vperm.slane %v4451, %v4458
      %v4460 = vrot.slane %v4443, 4
      %v4461 = vsel %vm324, 0.0, %v4460
      %v4462 = vrot.slane %v4447, 4
      %v4463 = vsel %vm324, 0.0, %v4462
      %v4464 = vrot.slane %v4455, 4
      %v4465 = vsel %vm324, 0.0, %v4464
      %v4466 = vrot.slane %v4459, 4
      %v4467 = vsel %vm324, 0.0, %v4466
      %vm4468 = vcmask 27648
      %4469 = vst.msk [vmem:[%s224] sm:$0xf] %vm4468, %v4387
      %4470 = vst.msk [vmem:[%s224 + $0x4] sm:$0xf] %vm4468, %v4405
      %4471 = vst.msk [vmem:[%s224 + $0x8] sm:$0xf] %vm4468, %v4391
      %4472 = vst.msk [vmem:[%s224 + $0xc] sm:$0xf] %vm4468, %v4407
      %4473 = vst.msk [vmem:[%s224 + $0x10] sm:$0xf] %vm4468, %v4399
      %4474 = vst.msk [vmem:[%s224 + $0x14] sm:$0xf] %vm4468, %v4409
      %4475 = vst.msk [vmem:[%s224 + $0x18] sm:$0xf] %vm4468, %v4403
      %4476 = vst.msk [vmem:[%s224 + $0x1c] sm:$0xf] %vm4468, %v4411
      %4477 = vst.msk [vmem:[%s224 + $0x20] sm:$0xf] %vm4468, %v4443
      %4478 = vst.msk [vmem:[%s224 + $0x24] sm:$0xf] %vm4468, %v4461
      %4479 = vst.msk [vmem:[%s224 + $0x28] sm:$0xf] %vm4468, %v4447
      %4480 = vst.msk [vmem:[%s224 + $0x2c] sm:$0xf] %vm4468, %v4463
      %4481 = vst.msk [vmem:[%s224 + $0x30] sm:$0xf] %vm4468, %v4455
      %4482 = vst.msk [vmem:[%s224 + $0x34] sm:$0xf] %vm4468, %v4465
      %4483 = vst.msk [vmem:[%s224 + $0x38] sm:$0xf] %vm4468, %v4459
      %4484 = vst.msk [vmem:[%s224 + $0x3c] sm:$0xf] %vm4468, %v4467
      %p4485 = scmp.lt.s32.totalorder %s16, 1
      %s4486 = scalar_select %p4485, %s16, 1
      %s4487 = smul.addr %s4486, 16
      %s4488 = smul.addr %s4487, 4
      %s4489 = scalar_lea.vmem %s5, %s4488
      // Predicated region
      $region41: #{disc_block.3} parent=39 // pred_check
        %p4490 = pneg %p144
      $region42: #{disc_block.3} parent=39 // pred_check_branch
        %4492 = sbr.rel (%p4490) target = $region44
      $region43: #{disc_block.3} parent=39 // pred_region
        _
      $region44: #{disc_block.3} parent=39 // pred_fallthru
        _
    $region40: #{disc_block.3} parent=5 // pred_fallthru
      _
    %p4493 = scmp.le.s32.totalorder 2, %s11
    // Predicated region
    $region45: #{disc_block.3} parent=5 // pred_check
      %p4494 = pneg %p4493
    $region46: #{disc_block.3} parent=5 // pred_check_branch
      %4496 = sbr.rel (%p4494) target = $region48
    $region47: #{disc_block.3} parent=5 // pred_region
      %s4497 = ssub.s32 %s11, 2
      // Predicated region
      $region49: #{disc_block.3} parent=47 // pred_check
        %p4498 = pneg %p150
      $region50: #{disc_block.3} parent=47 // pred_check_branch
        %4500 = sbr.rel (%p4498) target = $region52
      $region51: #{disc_block.3} parent=47 // pred_region
        %p4501 = scmp.lt.s32.totalorder %s17, 1
        %s4502 = scalar_select %p4501, %s17, 1
        %s4503 = smul.addr %s4502, 16
        %s4504 = smul.addr %s4503, 4
        %s4505 = scalar_lea.vmem %s5, %s4504
      $region52: #{disc_block.3} parent=47 // pred_fallthru
        _
    $region48: #{disc_block.3} parent=5 // pred_fallthru
      _
  $region6: #{disc_block.3} parent=0 // loop_footer
    %s15 = sadd.s32 1, %s11
  $region7: #{disc_block.3} parent=0 // loop_footer_branch
    %10 = sbr.rel target = $region3
  $region8: #{disc_block.3} parent=0 // loop_exit
    _

</llo_original>
